<compile_context>
chip_gen: v7x
topology: tpu7x:2x2x1
jax: 0.10.0
libtpu: 0.0.40
codegen_flags: <defaults>
</compile_context>

<pallas_src>
import functools

import jax
import jax.numpy as jnp
from jax import lax
from jax.experimental import pallas as pl
from jax.experimental.pallas import tpu as pltpu

_MASK = -3e38    # "no edge" logit: exp(MASK - m) underflows to exactly 0
_M_INIT = -1e30  # initial running max (finite, so m_prev - m_new never hits inf-inf)


def _choose_tile(n, target, align):
    """Largest divisor of n that is <= target and a multiple of align, else n (full)."""
    if n <= target or n % align != 0:
        return n
    t = min(target, n)
    t -= t % align
    while t >= align:
        if n % t == 0:
            return t
        t -= align
    return n


# ---------------------------------------------------------------------------
# Phase 1: node-wise projections (tiled over node-row blocks).
# ---------------------------------------------------------------------------
def _proj_kernel(x_ref, w_node_ref, b_dst_ref, w_as_ref, w_ad_ref,
                 fsrc_ref, fdst_ref, asrc_t_ref, adst_ref, *, hf):
    x = x_ref[...]                                    # [Tn, D] f32
    xb = x.astype(jnp.bfloat16)
    # src_fc and dst_fc fused into a single bf16 MXU matmul with f32 accumulation.
    fused = jnp.dot(xb, w_node_ref[...], preferred_element_type=jnp.float32)   # [Tn, 2*HF]
    fsrc_ref[...] = fused[:, :hf].astype(jnp.bfloat16)       # stored bf16 (halves HBM traffic)
    fdst_ref[...] = fused[:, hf:] + b_dst_ref[...]           # residual term, kept f32
    # Attention-logit projections kept in f32 (tiny matmuls, logits need precision).
    # attn_src produced directly in row form [H, Tn] (avoids a transpose later).
    asrc_t_ref[...] = lax.dot_general(w_as_ref[...], x, (((1,), (1,)), ((), ())),
                                      preferred_element_type=jnp.float32)
    adst_ref[...] = jnp.dot(x, w_ad_ref[...], preferred_element_type=jnp.float32)


def _project(x, params, *, n_heads, out_feats, tile_n):
    N, D = x.shape
    HF = n_heads * out_feats
    # Concatenate the two node-feature projections once (weight-sized, negligible).
    w_node = jnp.concatenate([params["w_src"], params["w_dst"]],
                             axis=1).astype(jnp.bfloat16)            # [D, 2*HF]
    kernel = functools.partial(_proj_kernel, hf=HF)
    grid_spec = pltpu.PrefetchScalarGridSpec(
        num_scalar_prefetch=0,
        grid=(N // tile_n,),
        in_specs=[
            pl.BlockSpec((tile_n, D), lambda i: (i, 0)),        # x
            pl.BlockSpec((D, 2 * HF), lambda i: (0, 0)),        # [w_src | w_dst] (bf16)
            pl.BlockSpec((1, HF), lambda i: (0, 0)),            # b_dst
            pl.BlockSpec((n_heads, D), lambda i: (0, 0)),       # w_attn_src (row form)
            pl.BlockSpec((D, n_heads), lambda i: (0, 0)),       # w_attn_dst
        ],
        out_specs=[
            pl.BlockSpec((tile_n, HF), lambda i: (i, 0)),       # feat_src_fc (bf16)
            pl.BlockSpec((tile_n, HF), lambda i: (i, 0)),       # feat_dst_fc (f32)
            pl.BlockSpec((n_heads, tile_n), lambda i: (0, i)),  # attn_src_t  [H, N]
            pl.BlockSpec((tile_n, n_heads), lambda i: (i, 0)),  # attn_dst    [N, H]
        ],
    )
    return pl.pallas_call(
        kernel,
        out_shape=(jax.ShapeDtypeStruct((N, HF), jnp.bfloat16),
                   jax.ShapeDtypeStruct((N, HF), jnp.float32),
                   jax.ShapeDtypeStruct((n_heads, N), jnp.float32),
                   jax.ShapeDtypeStruct((N, n_heads), jnp.float32)),
        grid_spec=grid_spec,
        compiler_params=pltpu.CompilerParams(
            dimension_semantics=("parallel",),
            vmem_limit_bytes=32 * 1024 * 1024),
    )(x, w_node, params["b_dst"], params["w_attn_src_t"], params["w_attn_dst"])


# ---------------------------------------------------------------------------
# Phase 2: edge softmax + aggregation, tiled over (dst block, src block) with
# an online (flash-style) softmax along the src axis.
# ---------------------------------------------------------------------------
def _attn_kernel(w_edge_ref,                                   # SMEM [E, H]
                 adj_ref, ef_ref, asrc_t_ref, adst_ref, fsrc_ref, fdst_ref,
                 out_ref,
                 m_scr, l_scr, acc_scr,
                 *, n_heads, out_feats, edge_feats, negative_slope):
    j = pl.program_id(1)
    F = out_feats

    @pl.when(j == 0)
    def _init():
        m_scr[...] = jnp.full_like(m_scr, _M_INIT)
        l_scr[...] = jnp.zeros_like(l_scr)
        acc_scr[...] = jnp.zeros_like(acc_scr)

    adj = adj_ref[...]                                          # [Td, Ts] f32
    edge_mask = adj > 0.0                                       # hoisted out of head loop
    adst = adst_ref[...]                                        # [Td, H]  f32
    asrc_t = asrc_t_ref[...]                                    # [H, Ts]  f32
    fsrc = fsrc_ref[...]                                        # [Ts, H*F] bf16

    # Edge-feature contraction hoisted out of the head loop: each ef plane is
    # read from VMEM exactly once and reused for all heads (VPU, f32).
    ae = [None] * n_heads
    for k in range(edge_feats):
        plane = ef_ref[k]                                       # [Td, Ts]
        for h in range(n_heads):
            contrib = plane * w_edge_ref[k, h]
            ae[h] = contrib if ae[h] is None else ae[h] + contrib

    for h in range(n_heads):
        # Logits (f32): attn_dst[v] + attn_src[u] + attn_edge[v,u]; leaky-relu; mask.
        e = adst[:, h:h + 1] + asrc_t[h:h + 1, :] + ae[h]       # [Td, Ts]
        e = jnp.maximum(e, negative_slope * e)                  # leaky-relu (0 < slope < 1)
        e = jnp.where(edge_mask, e, _MASK)

        # Online softmax update (all f32). Masked entries underflow to exactly 0
        # in exp(), so no extra "* adj" pass is needed.
        m_prev = m_scr[h]                                       # [Td, 1]
        m_new = jnp.maximum(m_prev, jnp.max(e, axis=1, keepdims=True))
        alpha = jnp.exp(m_prev - m_new)                         # [Td, 1]
        p = jnp.exp(e - m_new)                                  # [Td, Ts]
        l_scr[h] = alpha * l_scr[h] + jnp.sum(p, axis=1, keepdims=True)
        m_scr[h] = m_new

        # Aggregation on the MXU in bf16 with f32 accumulation.
        # TODO(synk): with many heads / wide out_feats, batch the per-head matmuls
        # into one lane-dense contraction to fill the MXU width.
        sl = slice(h * F, (h + 1) * F)
        agg = jnp.dot(p.astype(jnp.bfloat16), fsrc[:, sl],
                      preferred_element_type=jnp.float32)       # [Td, F]
        acc_scr[:, sl] = alpha * acc_scr[:, sl] + agg

    @pl.when(j == pl.num_programs(1) - 1)
    def _finalize():
        acc = acc_scr[...]                                      # [Td, H*F] f32
        pieces = []
        for h in range(n_heads):
            l = l_scr[h]
            inv = pl.reciprocal(jnp.where(l == 0.0, 1.0, l), approx=True)
            pieces.append(acc[:, h * F:(h + 1) * F] * inv)      # zero-in-degree rows stay 0
        # Single lane-dense store of the full [Td, H*F] row slab (+ residual),
        # fused with normalization (no extra scratch read-modify-write).
        out_ref[...] = jnp.concatenate(pieces, axis=1) + fdst_ref[...]


def gat_conv(x, ef, adj, params, *, n_heads, out_feats, negative_slope=0.2,
             tile_dst=256, tile_src=256, tile_n=256):
    """GATConv forward (eval mode).

    Tile sizes are clamped to the largest aligned divisor of N; tile_src is
    additionally halved until the double-buffered resident set (dominated by the
    [E, td, ts] ef stream) fits the scoped-VMEM budget.
    """
    N, _ = x.shape
    E = ef.shape[0]
    HF = n_heads * out_feats

    td = _choose_tile(N, tile_dst, 8)
    ts = _choose_tile(N, tile_src, 128)
    tn = _choose_tile(N, tile_n, 128)

    # Keep the double-buffered streams within the scoped-VMEM budget (~24 MiB).
    def _resident_bytes(ts_):
        stream = (E * td * ts_ + td * ts_) * 4 + ts_ * HF * 2 + n_heads * ts_ * 4
        fixed = td * (HF * 4 * 2 + n_heads * 4)                   # fdst + out + adst
        scratch = td * HF * 4 + 2 * n_heads * td * 128 * 4        # acc + padded m/l
        return 2 * (stream + fixed) + scratch

    while ts > 128 and (ts // 2) % 128 == 0 and N % (ts // 2) == 0 \
            and _resident_bytes(ts) > 24 * 1024 * 1024:
        ts //= 2

    fsrc, fdst, asrc_t, adst = _project(x, params, n_heads=n_heads,
                                        out_feats=out_feats, tile_n=tn)

    kernel = functools.partial(_attn_kernel, n_heads=n_heads, out_feats=out_feats,
                               edge_feats=E, negative_slope=negative_slope)
    grid_spec = pltpu.PrefetchScalarGridSpec(
        num_scalar_prefetch=0,
        grid=(N // td, N // ts),
        in_specs=[
            pl.BlockSpec(memory_space=pltpu.MemorySpace.SMEM),   # w_attn_edge [E, H]
            pl.BlockSpec((td, ts), lambda i, j: (i, j)),         # adj
            pl.BlockSpec((E, td, ts), lambda i, j: (0, i, j)),   # ef
            pl.BlockSpec((n_heads, ts), lambda i, j: (0, j)),    # attn_src_t
            pl.BlockSpec((td, n_heads), lambda i, j: (i, 0)),    # attn_dst
            pl.BlockSpec((ts, HF), lambda i, j: (j, 0)),         # feat_src_fc (bf16)
            pl.BlockSpec((td, HF), lambda i, j: (i, 0)),         # feat_dst_fc (residual)
        ],
        out_specs=pl.BlockSpec((td, HF), lambda i, j: (i, 0)),
        scratch_shapes=[
            pltpu.VMEM((n_heads, td, 1), jnp.float32),           # running max
            pltpu.VMEM((n_heads, td, 1), jnp.float32),           # running denom
            pltpu.VMEM((td, HF), jnp.float32),                   # running weighted sum
        ],
    )
    return pl.pallas_call(
        kernel,
        out_shape=jax.ShapeDtypeStruct((N, HF), jnp.float32),
        grid_spec=grid_spec,
        compiler_params=pltpu.CompilerParams(
            dimension_semantics=("parallel", "arbitrary"),       # dst tiles megacore-sharded
            vmem_limit_bytes=32 * 1024 * 1024),
    )(params["w_attn_edge"], adj, ef, asrc_t, adst, fsrc, fdst)


# ---------------------------------------------------------------------------
# Pure-JAX reference (mirrors the kernel's bf16-matmul / f32-softmax numerics).
# ---------------------------------------------------------------------------
def gat_reference(x, ef, adj, params, *, n_heads, out_feats, negative_slope=0.2):
    F = out_feats
    xb = x.astype(jnp.bfloat16)
    fs = jnp.dot(xb, params["w_src"].astype(jnp.bfloat16),
                 preferred_element_type=jnp.float32).astype(jnp.bfloat16)
    fd = (jnp.dot(xb, params["w_dst"].astype(jnp.bfloat16),
                  preferred_element_type=jnp.float32) + params["b_dst"])
    a_s = x @ params["w_attn_src_t"].T          # [N, H] f32
    a_d = x @ params["w_attn_dst"]              # [N, H] f32
    a_e = jnp.einsum("evu,eh->vuh", ef, params["w_attn_edge"])
    outs = []
    for h in range(n_heads):
        e = a_d[:, h][:, None] + a_s[:, h][None, :] + a_e[:, :, h]
        e = jnp.where(e >= 0.0, e, negative_slope * e)
        e = jnp.where(adj > 0.0, e, _MASK)
        m = e.max(axis=1, keepdims=True)
        p = jnp.exp(e - m) * adj
        den = p.sum(axis=1, keepdims=True)
        a = (p / jnp.where(den == 0.0, 1.0, den)).astype(jnp.bfloat16)
        outs.append(jnp.dot(a, fs[:, h * F:(h + 1) * F],
                            preferred_element_type=jnp.float32)
                    + fd[:, h * F:(h + 1) * F])
    return jnp.concatenate(outs, axis=1)


def xavier_normal(key, shape, gain):
    fan_out, fan_in = shape
    std = gain * jnp.sqrt(2.0 / (fan_in + fan_out))
    return std * jax.random.normal(key, shape, jnp.float32)


if __name__ == "__main__":
    # Small but tiling-exercising sizes: 2x2 grid of 128x128 (dst, src) tiles so
    # the online-softmax path across src tiles is actually exercised.
    N, D, E_FEATS, H, F = 256, 64, 8, 2, 16
    slope = 0.2
    gain = float(jnp.sqrt(2.0))                 # calculate_gain('relu')

    key = jax.random.PRNGKey(0)
    ks = jax.random.split(key, 8)

    # PyTorch Linear stores weight as [out, in]; pre-transpose so kernels do x @ W.
    w_src = xavier_normal(ks[0], (H * F, D), gain).T              # [D, H*F]
    w_dst = xavier_normal(ks[1], (H * F, D), gain).T              # [D, H*F]
    b_dst = 0.01 * jax.random.normal(ks[2], (1, H * F), jnp.float32)
    w_attn_src_t = xavier_normal(ks[3], (H, D), gain)             # [H, D] (row form)
    w_attn_dst = xavier_normal(ks[4], (H, D), gain).T             # [D, H]
    w_attn_edge = xavier_normal(ks[5], (H, E_FEATS), gain).T      # [E, H]
    params = dict(w_src=w_src, w_dst=w_dst, b_dst=b_dst,
                  w_attn_src_t=w_attn_src_t, w_attn_dst=w_attn_dst,
                  w_attn_edge=w_attn_edge)

    # Synthetic graph: dense adjacency (incl. zero-in-degree rows) + edge features.
    x = jax.random.normal(ks[6], (N, D), jnp.float32)
    adj = (jax.random.uniform(ks[7], (N, N)) < 0.05).astype(jnp.float32)
    adj = adj.at[0, :].set(0.0).at[7, :].set(0.0)   # allow_zero_in_degree path
    ef = jax.random.normal(jax.random.fold_in(key, 99), (E_FEATS, N, N), jnp.float32)
    ef = ef * adj[None, :, :]

    gat = jax.jit(functools.partial(gat_conv, n_heads=H, out_feats=F,
                                    negative_slope=slope,
                                    tile_dst=128, tile_src=128, tile_n=128))
    out = jax.block_until_ready(gat(x, ef, adj, params))

    ref = gat_reference(x, ef, adj, params, n_heads=H, out_feats=F,
                        negative_slope=slope)
    assert out.shape == (N, H * F)
    assert bool(jnp.all(jnp.isfinite(out)))
    assert jnp.allclose(out, ref, rtol=1e-2, atol=3e-2), "mismatch vs reference"

    # TODO(synk): attn_drop / edge_drop are training-only stochastic ops and
    # norm='adj'/'avg' variants are not implemented; eval-mode norm='none' only.
    print("KERNEL_OK")
</pallas_src>

<mosaic_0001>
module attributes {stable_mosaic.version = 11 : i64} {
  func.func @_proj_kernel(%arg0: i32, %arg1: memref<128x64xf32, #tpu.memory_space<vmem>>, %arg2: memref<64x64xbf16, #tpu.memory_space<vmem>>, %arg3: memref<1x32xf32, #tpu.memory_space<vmem>>, %arg4: memref<2x64xf32, #tpu.memory_space<vmem>>, %arg5: memref<64x2xf32, #tpu.memory_space<vmem>>, %arg6: memref<128x32xbf16, #tpu.memory_space<vmem>>, %arg7: memref<128x32xf32, #tpu.memory_space<vmem>>, %arg8: memref<2x128xf32, #tpu.memory_space<vmem>>, %arg9: memref<128x2xf32, #tpu.memory_space<vmem>>) attributes {dimension_semantics = [#tpu.dimension_semantics<parallel>], iteration_bounds = array<i64: 2>, scalar_prefetch = 0 : i64, scratch_operands = 0 : i64, tpu.core_type = #tpu.core_type<tc>, window_params = [{transform_indices = @transform_0, window_bounds = array<i64: 128, 64>}, {pipeline_mode = #tpu.pipeline_mode<synchronous>, transform_indices = @transform_1, window_bounds = array<i64: 64, 64>}, {pipeline_mode = #tpu.pipeline_mode<synchronous>, transform_indices = @transform_2, window_bounds = array<i64: 1, 32>}, {pipeline_mode = #tpu.pipeline_mode<synchronous>, transform_indices = @transform_3, window_bounds = array<i64: 2, 64>}, {pipeline_mode = #tpu.pipeline_mode<synchronous>, transform_indices = @transform_4, window_bounds = array<i64: 64, 2>}, {transform_indices = @transform_5, window_bounds = array<i64: 128, 32>}, {transform_indices = @transform_6, window_bounds = array<i64: 128, 32>}, {transform_indices = @transform_7, window_bounds = array<i64: 2, 128>}, {transform_indices = @transform_8, window_bounds = array<i64: 128, 2>}]} {
    %c0 = arith.constant 0 : index
    %c0_0 = arith.constant 0 : index
    %0 = vector.load %arg1[%c0, %c0_0] : memref<128x64xf32, #tpu.memory_space<vmem>>, vector<128x64xf32>
    %1 = arith.truncf %0 : vector<128x64xf32> to vector<128x64xbf16>
    %c0_1 = arith.constant 0 : index
    %c0_2 = arith.constant 0 : index
    %2 = vector.load %arg2[%c0_1, %c0_2] : memref<64x64xbf16, #tpu.memory_space<vmem>>, vector<64x64xbf16>
    %cst = arith.constant dense<0.000000e+00> : vector<128x64xf32>
    %3 = tpu.matmul %1, %2, %cst {dimension_numbers = #tpu.dot_dimension_numbers<[1], [0], [0], [1], [0, 0, 1, 1], [], []>} : vector<128x64xbf16>, vector<64x64xbf16>, vector<128x64xf32> -> vector<128x64xf32>
    %4 = vector.extract_strided_slice %3 {offsets = [0, 0], sizes = [128, 32], strides = [1, 1]} : vector<128x64xf32> to vector<128x32xf32>
    %5 = arith.truncf %4 : vector<128x32xf32> to vector<128x32xbf16>
    %c0_3 = arith.constant 0 : index
    %c0_4 = arith.constant 0 : index
    %6 = vector.load %arg6[%c0_3, %c0_4] : memref<128x32xbf16, #tpu.memory_space<vmem>>, vector<128x32xbf16>
    tpu.vector_store %arg6[%c0_3, %c0_4], %5 {strides = array<i32>} : memref<128x32xbf16, #tpu.memory_space<vmem>>, vector<128x32xbf16>,
    %7 = vector.extract_strided_slice %3 {offsets = [0, 32], sizes = [128, 32], strides = [1, 1]} : vector<128x64xf32> to vector<128x32xf32>
    %c0_5 = arith.constant 0 : index
    %c0_6 = arith.constant 0 : index
    %8 = vector.load %arg3[%c0_5, %c0_6] : memref<1x32xf32, #tpu.memory_space<vmem>>, vector<1x32xf32>
    %9 = vector.broadcast %8 : vector<1x32xf32> to vector<128x32xf32>
    %10 = arith.addf %7, %9 : vector<128x32xf32>
    %c0_7 = arith.constant 0 : index
    %c0_8 = arith.constant 0 : index
    %11 = vector.load %arg7[%c0_7, %c0_8] : memref<128x32xf32, #tpu.memory_space<vmem>>, vector<128x32xf32>
    tpu.vector_store %arg7[%c0_7, %c0_8], %10 {strides = array<i32>} : memref<128x32xf32, #tpu.memory_space<vmem>>, vector<128x32xf32>,
    %c0_9 = arith.constant 0 : index
    %c0_10 = arith.constant 0 : index
    %12 = vector.load %arg4[%c0_9, %c0_10] : memref<2x64xf32, #tpu.memory_space<vmem>>, vector<2x64xf32>
    %cst_11 = arith.constant dense<0.000000e+00> : vector<2x128xf32>
    %13 = tpu.matmul %12, %0, %cst_11 {dimension_numbers = #tpu.dot_dimension_numbers<[1], [1], [0], [0], [0, 0, 1, 0], [], []>} : vector<2x64xf32>, vector<128x64xf32>, vector<2x128xf32> -> vector<2x128xf32>
    %c0_12 = arith.constant 0 : index
    %c0_13 = arith.constant 0 : index
    %14 = vector.load %arg8[%c0_12, %c0_13] : memref<2x128xf32, #tpu.memory_space<vmem>>, vector<2x128xf32>
    tpu.vector_store %arg8[%c0_12, %c0_13], %13 {strides = array<i32>} : memref<2x128xf32, #tpu.memory_space<vmem>>, vector<2x128xf32>,
    %c0_14 = arith.constant 0 : index
    %c0_15 = arith.constant 0 : index
    %15 = vector.load %arg5[%c0_14, %c0_15] : memref<64x2xf32, #tpu.memory_space<vmem>>, vector<64x2xf32>
    %cst_16 = arith.constant dense<0.000000e+00> : vector<128x2xf32>
    %16 = tpu.matmul %0, %15, %cst_16 {dimension_numbers = #tpu.dot_dimension_numbers<[1], [0], [0], [1], [0, 0, 1, 1], [], []>} : vector<128x64xf32>, vector<64x2xf32>, vector<128x2xf32> -> vector<128x2xf32>
    %c0_17 = arith.constant 0 : index
    %c0_18 = arith.constant 0 : index
    %17 = vector.load %arg9[%c0_17, %c0_18] : memref<128x2xf32, #tpu.memory_space<vmem>>, vector<128x2xf32>
    tpu.vector_store %arg9[%c0_17, %c0_18], %16 {strides = array<i32>} : memref<128x2xf32, #tpu.memory_space<vmem>>, vector<128x2xf32>,
    return
  }
  func.func @transform_0(%arg0: i32) -> (i32, i32) {
    %c0_i32 = arith.constant 0 : i32
    %c0_i32_0 = arith.constant 0 : i32
    return %arg0, %c0_i32 : i32, i32
  }
  func.func @transform_1(%arg0: i32) -> (i32, i32) {
    %c0_i32 = arith.constant 0 : i32
    %c0_i32_0 = arith.constant 0 : i32
    %c0_i32_1 = arith.constant 0 : i32
    return %c0_i32, %c0_i32_0 : i32, i32
  }
  func.func @transform_2(%arg0: i32) -> (i32, i32) {
    %c0_i32 = arith.constant 0 : i32
    %c0_i32_0 = arith.constant 0 : i32
    %c0_i32_1 = arith.constant 0 : i32
    return %c0_i32, %c0_i32_0 : i32, i32
  }
  func.func @transform_3(%arg0: i32) -> (i32, i32) {
    %c0_i32 = arith.constant 0 : i32
    %c0_i32_0 = arith.constant 0 : i32
    %c0_i32_1 = arith.constant 0 : i32
    return %c0_i32, %c0_i32_0 : i32, i32
  }
  func.func @transform_4(%arg0: i32) -> (i32, i32) {
    %c0_i32 = arith.constant 0 : i32
    %c0_i32_0 = arith.constant 0 : i32
    %c0_i32_1 = arith.constant 0 : i32
    return %c0_i32, %c0_i32_0 : i32, i32
  }
  func.func @transform_5(%arg0: i32) -> (i32, i32) {
    %c0_i32 = arith.constant 0 : i32
    %c0_i32_0 = arith.constant 0 : i32
    return %arg0, %c0_i32 : i32, i32
  }
  func.func @transform_6(%arg0: i32) -> (i32, i32) {
    %c0_i32 = arith.constant 0 : i32
    %c0_i32_0 = arith.constant 0 : i32
    return %arg0, %c0_i32 : i32, i32
  }
  func.func @transform_7(%arg0: i32) -> (i32, i32) {
    %c0_i32 = arith.constant 0 : i32
    %c0_i32_0 = arith.constant 0 : i32
    return %c0_i32, %arg0 : i32, i32
  }
  func.func @transform_8(%arg0: i32) -> (i32, i32) {
    %c0_i32 = arith.constant 0 : i32
    %c0_i32_0 = arith.constant 0 : i32
    return %arg0, %c0_i32 : i32, i32
  }
}

module attributes {stable_mosaic.version = 11 : i64} {
  func.func @_attn_kernel(%arg0: i32, %arg1: i32, %arg2: memref<8x2xf32, #tpu.memory_space<smem>>, %arg3: memref<128x128xf32, #tpu.memory_space<vmem>>, %arg4: memref<8x128x128xf32, #tpu.memory_space<vmem>>, %arg5: memref<2x128xf32, #tpu.memory_space<vmem>>, %arg6: memref<128x2xf32, #tpu.memory_space<vmem>>, %arg7: memref<128x32xbf16, #tpu.memory_space<vmem>>, %arg8: memref<128x32xf32, #tpu.memory_space<vmem>>, %arg9: memref<128x32xf32, #tpu.memory_space<vmem>>, %arg10: memref<2x128x1xf32, #tpu.memory_space<vmem>>, %arg11: memref<2x128x1xf32, #tpu.memory_space<vmem>>, %arg12: memref<128x32xf32, #tpu.memory_space<vmem>>) attributes {dimension_semantics = [#tpu.dimension_semantics<parallel>, #tpu.dimension_semantics<arbitrary>], iteration_bounds = array<i64: 2, 2>, scalar_prefetch = 0 : i64, scratch_operands = 3 : i64, tpu.core_type = #tpu.core_type<tc>, window_params = [{transform_indices = @transform_0, window_bounds = array<i64: 8, 2>}, {transform_indices = @transform_1, window_bounds = array<i64: 128, 128>}, {transform_indices = @transform_2, window_bounds = array<i64: 8, 128, 128>}, {transform_indices = @transform_3, window_bounds = array<i64: 2, 128>}, {transform_indices = @transform_4, window_bounds = array<i64: 128, 2>}, {transform_indices = @transform_5, window_bounds = array<i64: 128, 32>}, {transform_indices = @transform_6, window_bounds = array<i64: 128, 32>}, {transform_indices = @transform_7, window_bounds = array<i64: 128, 32>}]} {
    %c0_i32 = arith.constant 0 : i32
    %0 = arith.cmpi eq, %arg1, %c0_i32 : i32
    %1 = arith.extui %0 : i1 to i32
    %c0_i32_0 = arith.constant 0 : i32
    %2 = arith.cmpi ne, %1, %c0_i32_0 : i32
    scf.if %2 {
      %cst_99 = arith.constant -1.000000e+30 : f32
      %172 = vector.broadcast %cst_99 : f32 to vector<2x128x1xf32>
      %c0_100 = arith.constant 0 : index
      %c0_101 = arith.constant 0 : index
      %c0_102 = arith.constant 0 : index
      %173 = vector.load %arg10[%c0_100, %c0_101, %c0_102] : memref<2x128x1xf32, #tpu.memory_space<vmem>>, vector<2x128x1xf32>
      tpu.vector_store %arg10[%c0_100, %c0_101, %c0_102], %172 {strides = array<i32>} : memref<2x128x1xf32, #tpu.memory_space<vmem>>, vector<2x128x1xf32>,
      %cst_103 = arith.constant 0.000000e+00 : f32
      %174 = vector.broadcast %cst_103 : f32 to vector<2x128x1xf32>
      %c0_104 = arith.constant 0 : index
      %c0_105 = arith.constant 0 : index
      %c0_106 = arith.constant 0 : index
      %175 = vector.load %arg11[%c0_104, %c0_105, %c0_106] : memref<2x128x1xf32, #tpu.memory_space<vmem>>, vector<2x128x1xf32>
      tpu.vector_store %arg11[%c0_104, %c0_105, %c0_106], %174 {strides = array<i32>} : memref<2x128x1xf32, #tpu.memory_space<vmem>>, vector<2x128x1xf32>,
      %cst_107 = arith.constant 0.000000e+00 : f32
      %176 = vector.broadcast %cst_107 : f32 to vector<128x32xf32>
      %c0_108 = arith.constant 0 : index
      %c0_109 = arith.constant 0 : index
      %177 = vector.load %arg12[%c0_108, %c0_109] : memref<128x32xf32, #tpu.memory_space<vmem>>, vector<128x32xf32>
      tpu.vector_store %arg12[%c0_108, %c0_109], %176 {strides = array<i32>} : memref<128x32xf32, #tpu.memory_space<vmem>>, vector<128x32xf32>,
    } else {
    }
    %c0 = arith.constant 0 : index
    %c0_1 = arith.constant 0 : index
    %3 = vector.load %arg3[%c0, %c0_1] : memref<128x128xf32, #tpu.memory_space<vmem>>, vector<128x128xf32>
    %cst = arith.constant 0.000000e+00 : f32
    %4 = vector.broadcast %cst : f32 to vector<128x128xf32>
    %5 = arith.cmpf ogt, %3, %4 : vector<128x128xf32>
    %c0_2 = arith.constant 0 : index
    %c0_3 = arith.constant 0 : index
    %6 = vector.load %arg6[%c0_2, %c0_3] : memref<128x2xf32, #tpu.memory_space<vmem>>, vector<128x2xf32>
    %c0_4 = arith.constant 0 : index
    %c0_5 = arith.constant 0 : index
    %7 = vector.load %arg5[%c0_4, %c0_5] : memref<2x128xf32, #tpu.memory_space<vmem>>, vector<2x128xf32>
    %c0_6 = arith.constant 0 : index
    %c0_7 = arith.constant 0 : index
    %8 = vector.load %arg7[%c0_6, %c0_7] : memref<128x32xbf16, #tpu.memory_space<vmem>>, vector<128x32xbf16>
    %c0_8 = arith.constant 0 : index
    %c0_9 = arith.constant 0 : index
    %c0_10 = arith.constant 0 : index
    %9 = vector.load %arg4[%c0_8, %c0_9, %c0_10] : memref<8x128x128xf32, #tpu.memory_space<vmem>>, vector<1x128x128xf32>
    %10 = vector.shape_cast %9 : vector<1x128x128xf32> to vector<128x128xf32>
    %c0_11 = arith.constant 0 : index
    %c0_12 = arith.constant 0 : index
    %11 = memref.load %arg2[%c0_11, %c0_12] : memref<8x2xf32, #tpu.memory_space<smem>>
    %12 = vector.broadcast %11 : f32 to vector<128x128xf32>
    %13 = arith.mulf %10, %12 : vector<128x128xf32>
    %c0_13 = arith.constant 0 : index
    %c1 = arith.constant 1 : index
    %14 = memref.load %arg2[%c0_13, %c1] : memref<8x2xf32, #tpu.memory_space<smem>>
    %15 = vector.broadcast %14 : f32 to vector<128x128xf32>
    %16 = arith.mulf %10, %15 : vector<128x128xf32>
    %c1_14 = arith.constant 1 : index
    %c0_15 = arith.constant 0 : index
    %c0_16 = arith.constant 0 : index
    %17 = vector.load %arg4[%c1_14, %c0_15, %c0_16] : memref<8x128x128xf32, #tpu.memory_space<vmem>>, vector<1x128x128xf32>
    %18 = vector.shape_cast %17 : vector<1x128x128xf32> to vector<128x128xf32>
    %c1_17 = arith.constant 1 : index
    %c0_18 = arith.constant 0 : index
    %19 = memref.load %arg2[%c1_17, %c0_18] : memref<8x2xf32, #tpu.memory_space<smem>>
    %20 = vector.broadcast %19 : f32 to vector<128x128xf32>
    %21 = arith.mulf %18, %20 : vector<128x128xf32>
    %22 = arith.addf %13, %21 : vector<128x128xf32>
    %c1_19 = arith.constant 1 : index
    %c1_20 = arith.constant 1 : index
    %23 = memref.load %arg2[%c1_19, %c1_20] : memref<8x2xf32, #tpu.memory_space<smem>>
    %24 = vector.broadcast %23 : f32 to vector<128x128xf32>
    %25 = arith.mulf %18, %24 : vector<128x128xf32>
    %26 = arith.addf %16, %25 : vector<128x128xf32>
    %c2 = arith.constant 2 : index
    %c0_21 = arith.constant 0 : index
    %c0_22 = arith.constant 0 : index
    %27 = vector.load %arg4[%c2, %c0_21, %c0_22] : memref<8x128x128xf32, #tpu.memory_space<vmem>>, vector<1x128x128xf32>
    %28 = vector.shape_cast %27 : vector<1x128x128xf32> to vector<128x128xf32>
    %c2_23 = arith.constant 2 : index
    %c0_24 = arith.constant 0 : index
    %29 = memref.load %arg2[%c2_23, %c0_24] : memref<8x2xf32, #tpu.memory_space<smem>>
    %30 = vector.broadcast %29 : f32 to vector<128x128xf32>
    %31 = arith.mulf %28, %30 : vector<128x128xf32>
    %32 = arith.addf %22, %31 : vector<128x128xf32>
    %c2_25 = arith.constant 2 : index
    %c1_26 = arith.constant 1 : index
    %33 = memref.load %arg2[%c2_25, %c1_26] : memref<8x2xf32, #tpu.memory_space<smem>>
    %34 = vector.broadcast %33 : f32 to vector<128x128xf32>
    %35 = arith.mulf %28, %34 : vector<128x128xf32>
    %36 = arith.addf %26, %35 : vector<128x128xf32>
    %c3 = arith.constant 3 : index
    %c0_27 = arith.constant 0 : index
    %c0_28 = arith.constant 0 : index
    %37 = vector.load %arg4[%c3, %c0_27, %c0_28] : memref<8x128x128xf32, #tpu.memory_space<vmem>>, vector<1x128x128xf32>
    %38 = vector.shape_cast %37 : vector<1x128x128xf32> to vector<128x128xf32>
    %c3_29 = arith.constant 3 : index
    %c0_30 = arith.constant 0 : index
    %39 = memref.load %arg2[%c3_29, %c0_30] : memref<8x2xf32, #tpu.memory_space<smem>>
    %40 = vector.broadcast %39 : f32 to vector<128x128xf32>
    %41 = arith.mulf %38, %40 : vector<128x128xf32>
    %42 = arith.addf %32, %41 : vector<128x128xf32>
    %c3_31 = arith.constant 3 : index
    %c1_32 = arith.constant 1 : index
    %43 = memref.load %arg2[%c3_31, %c1_32] : memref<8x2xf32, #tpu.memory_space<smem>>
    %44 = vector.broadcast %43 : f32 to vector<128x128xf32>
    %45 = arith.mulf %38, %44 : vector<128x128xf32>
    %46 = arith.addf %36, %45 : vector<128x128xf32>
    %c4 = arith.constant 4 : index
    %c0_33 = arith.constant 0 : index
    %c0_34 = arith.constant 0 : index
    %47 = vector.load %arg4[%c4, %c0_33, %c0_34] : memref<8x128x128xf32, #tpu.memory_space<vmem>>, vector<1x128x128xf32>
    %48 = vector.shape_cast %47 : vector<1x128x128xf32> to vector<128x128xf32>
    %c4_35 = arith.constant 4 : index
    %c0_36 = arith.constant 0 : index
    %49 = memref.load %arg2[%c4_35, %c0_36] : memref<8x2xf32, #tpu.memory_space<smem>>
    %50 = vector.broadcast %49 : f32 to vector<128x128xf32>
    %51 = arith.mulf %48, %50 : vector<128x128xf32>
    %52 = arith.addf %42, %51 : vector<128x128xf32>
    %c4_37 = arith.constant 4 : index
    %c1_38 = arith.constant 1 : index
    %53 = memref.load %arg2[%c4_37, %c1_38] : memref<8x2xf32, #tpu.memory_space<smem>>
    %54 = vector.broadcast %53 : f32 to vector<128x128xf32>
    %55 = arith.mulf %48, %54 : vector<128x128xf32>
    %56 = arith.addf %46, %55 : vector<128x128xf32>
    %c5 = arith.constant 5 : index
    %c0_39 = arith.constant 0 : index
    %c0_40 = arith.constant 0 : index
    %57 = vector.load %arg4[%c5, %c0_39, %c0_40] : memref<8x128x128xf32, #tpu.memory_space<vmem>>, vector<1x128x128xf32>
    %58 = vector.shape_cast %57 : vector<1x128x128xf32> to vector<128x128xf32>
    %c5_41 = arith.constant 5 : index
    %c0_42 = arith.constant 0 : index
    %59 = memref.load %arg2[%c5_41, %c0_42] : memref<8x2xf32, #tpu.memory_space<smem>>
    %60 = vector.broadcast %59 : f32 to vector<128x128xf32>
    %61 = arith.mulf %58, %60 : vector<128x128xf32>
    %62 = arith.addf %52, %61 : vector<128x128xf32>
    %c5_43 = arith.constant 5 : index
    %c1_44 = arith.constant 1 : index
    %63 = memref.load %arg2[%c5_43, %c1_44] : memref<8x2xf32, #tpu.memory_space<smem>>
    %64 = vector.broadcast %63 : f32 to vector<128x128xf32>
    %65 = arith.mulf %58, %64 : vector<128x128xf32>
    %66 = arith.addf %56, %65 : vector<128x128xf32>
    %c6 = arith.constant 6 : index
    %c0_45 = arith.constant 0 : index
    %c0_46 = arith.constant 0 : index
    %67 = vector.load %arg4[%c6, %c0_45, %c0_46] : memref<8x128x128xf32, #tpu.memory_space<vmem>>, vector<1x128x128xf32>
    %68 = vector.shape_cast %67 : vector<1x128x128xf32> to vector<128x128xf32>
    %c6_47 = arith.constant 6 : index
    %c0_48 = arith.constant 0 : index
    %69 = memref.load %arg2[%c6_47, %c0_48] : memref<8x2xf32, #tpu.memory_space<smem>>
    %70 = vector.broadcast %69 : f32 to vector<128x128xf32>
    %71 = arith.mulf %68, %70 : vector<128x128xf32>
    %72 = arith.addf %62, %71 : vector<128x128xf32>
    %c6_49 = arith.constant 6 : index
    %c1_50 = arith.constant 1 : index
    %73 = memref.load %arg2[%c6_49, %c1_50] : memref<8x2xf32, #tpu.memory_space<smem>>
    %74 = vector.broadcast %73 : f32 to vector<128x128xf32>
    %75 = arith.mulf %68, %74 : vector<128x128xf32>
    %76 = arith.addf %66, %75 : vector<128x128xf32>
    %c7 = arith.constant 7 : index
    %c0_51 = arith.constant 0 : index
    %c0_52 = arith.constant 0 : index
    %77 = vector.load %arg4[%c7, %c0_51, %c0_52] : memref<8x128x128xf32, #tpu.memory_space<vmem>>, vector<1x128x128xf32>
    %78 = vector.shape_cast %77 : vector<1x128x128xf32> to vector<128x128xf32>
    %c7_53 = arith.constant 7 : index
    %c0_54 = arith.constant 0 : index
    %79 = memref.load %arg2[%c7_53, %c0_54] : memref<8x2xf32, #tpu.memory_space<smem>>
    %80 = vector.broadcast %79 : f32 to vector<128x128xf32>
    %81 = arith.mulf %78, %80 : vector<128x128xf32>
    %82 = arith.addf %72, %81 : vector<128x128xf32>
    %c7_55 = arith.constant 7 : index
    %c1_56 = arith.constant 1 : index
    %83 = memref.load %arg2[%c7_55, %c1_56] : memref<8x2xf32, #tpu.memory_space<smem>>
    %84 = vector.broadcast %83 : f32 to vector<128x128xf32>
    %85 = arith.mulf %78, %84 : vector<128x128xf32>
    %86 = arith.addf %76, %85 : vector<128x128xf32>
    %87 = vector.extract_strided_slice %6 {offsets = [0, 0], sizes = [128, 1], strides = [1, 1]} : vector<128x2xf32> to vector<128x1xf32>
    %88 = vector.extract_strided_slice %7 {offsets = [0, 0], sizes = [1, 128], strides = [1, 1]} : vector<2x128xf32> to vector<1x128xf32>
    %89 = vector.broadcast %87 : vector<128x1xf32> to vector<128x128xf32>
    %90 = vector.broadcast %88 : vector<1x128xf32> to vector<128x128xf32>
    %91 = arith.addf %89, %90 : vector<128x128xf32>
    %92 = arith.addf %91, %82 : vector<128x128xf32>
    %cst_57 = arith.constant 2.000000e-01 : f32
    %93 = vector.broadcast %cst_57 : f32 to vector<128x128xf32>
    %94 = arith.mulf %93, %92 : vector<128x128xf32>
    %95 = arith.maximumf %92, %94 : vector<128x128xf32>
    %cst_58 = arith.constant -3.000000e+38 : f32
    %96 = vector.broadcast %cst_58 : f32 to vector<128x128xf32>
    %97 = arith.select %5, %95, %96 : vector<128x128xi1>, vector<128x128xf32>
    %c0_59 = arith.constant 0 : index
    %c0_60 = arith.constant 0 : index
    %c0_61 = arith.constant 0 : index
    %98 = vector.load %arg10[%c0_59, %c0_60, %c0_61] : memref<2x128x1xf32, #tpu.memory_space<vmem>>, vector<1x128x1xf32>
    %99 = vector.shape_cast %98 : vector<1x128x1xf32> to vector<128x1xf32>
    %cst_62 = arith.constant dense<0xFF800000> : vector<128xf32>
    %100 = vector.multi_reduction <maximumf>, %97, %cst_62 [1] : vector<128x128xf32> to vector<128xf32>
    %101 = vector.shape_cast %100 : vector<128xf32> to vector<128x1xf32>
    %102 = arith.maximumf %99, %101 : vector<128x1xf32>
    %103 = arith.subf %99, %102 : vector<128x1xf32>
    %104 = math.exp %103 : vector<128x1xf32>
    %105 = vector.broadcast %102 : vector<128x1xf32> to vector<128x128xf32>
    %106 = arith.subf %97, %105 : vector<128x128xf32>
    %107 = math.exp %106 : vector<128x128xf32>
    %c0_63 = arith.constant 0 : index
    %c0_64 = arith.constant 0 : index
    %c0_65 = arith.constant 0 : index
    %108 = vector.load %arg11[%c0_63, %c0_64, %c0_65] : memref<2x128x1xf32, #tpu.memory_space<vmem>>, vector<1x128x1xf32>
    %109 = vector.shape_cast %108 : vector<1x128x1xf32> to vector<128x1xf32>
    %110 = arith.mulf %104, %109 : vector<128x1xf32>
    %cst_66 = arith.constant dense<0.000000e+00> : vector<128xf32>
    %111 = vector.multi_reduction <add>, %107, %cst_66 [1] : vector<128x128xf32> to vector<128xf32>
    %112 = vector.shape_cast %111 : vector<128xf32> to vector<128x1xf32>
    %113 = arith.addf %110, %112 : vector<128x1xf32>
    %c0_67 = arith.constant 0 : index
    %c0_68 = arith.constant 0 : index
    %c0_69 = arith.constant 0 : index
    %114 = vector.load %arg11[%c0_67, %c0_68, %c0_69] : memref<2x128x1xf32, #tpu.memory_space<vmem>>, vector<1x128x1xf32>
    %115 = vector.shape_cast %114 : vector<1x128x1xf32> to vector<128x1xf32>
    %116 = vector.shape_cast %113 : vector<128x1xf32> to vector<1x128x1xf32>
    tpu.vector_store %arg11[%c0_67, %c0_68, %c0_69], %116 {strides = array<i32>} : memref<2x128x1xf32, #tpu.memory_space<vmem>>, vector<1x128x1xf32>,
    %c0_70 = arith.constant 0 : index
    %c0_71 = arith.constant 0 : index
    %c0_72 = arith.constant 0 : index
    %117 = vector.load %arg10[%c0_70, %c0_71, %c0_72] : memref<2x128x1xf32, #tpu.memory_space<vmem>>, vector<1x128x1xf32>
    %118 = vector.shape_cast %117 : vector<1x128x1xf32> to vector<128x1xf32>
    %119 = vector.shape_cast %102 : vector<128x1xf32> to vector<1x128x1xf32>
    tpu.vector_store %arg10[%c0_70, %c0_71, %c0_72], %119 {strides = array<i32>} : memref<2x128x1xf32, #tpu.memory_space<vmem>>, vector<1x128x1xf32>,
    %120 = arith.truncf %107 : vector<128x128xf32> to vector<128x128xbf16>
    %121 = vector.extract_strided_slice %8 {offsets = [0, 0], sizes = [128, 16], strides = [1, 1]} : vector<128x32xbf16> to vector<128x16xbf16>
    %cst_73 = arith.constant dense<0.000000e+00> : vector<128x16xf32>
    %122 = tpu.matmul %120, %121, %cst_73 {dimension_numbers = #tpu.dot_dimension_numbers<[1], [0], [0], [1], [0, 0, 1, 1], [], []>} : vector<128x128xbf16>, vector<128x16xbf16>, vector<128x16xf32> -> vector<128x16xf32>
    %c0_74 = arith.constant 0 : index
    %c0_75 = arith.constant 0 : index
    %123 = vector.load %arg12[%c0_74, %c0_75] : memref<128x32xf32, #tpu.memory_space<vmem>>, vector<128x16xf32>
    %124 = vector.broadcast %104 : vector<128x1xf32> to vector<128x16xf32>
    %125 = arith.mulf %124, %123 : vector<128x16xf32>
    %126 = arith.addf %125, %122 : vector<128x16xf32>
    %c0_76 = arith.constant 0 : index
    %c0_77 = arith.constant 0 : index
    %127 = vector.load %arg12[%c0_76, %c0_77] : memref<128x32xf32, #tpu.memory_space<vmem>>, vector<128x16xf32>
    tpu.vector_store %arg12[%c0_76, %c0_77], %126 {strides = array<i32>} : memref<128x32xf32, #tpu.memory_space<vmem>>, vector<128x16xf32>,
    %128 = vector.extract_strided_slice %6 {offsets = [0, 1], sizes = [128, 1], strides = [1, 1]} : vector<128x2xf32> to vector<128x1xf32>
    %129 = vector.extract_strided_slice %7 {offsets = [1, 0], sizes = [1, 128], strides = [1, 1]} : vector<2x128xf32> to vector<1x128xf32>
    %130 = vector.broadcast %128 : vector<128x1xf32> to vector<128x128xf32>
    %131 = vector.broadcast %129 : vector<1x128xf32> to vector<128x128xf32>
    %132 = arith.addf %130, %131 : vector<128x128xf32>
    %133 = arith.addf %132, %86 : vector<128x128xf32>
    %cst_78 = arith.constant 2.000000e-01 : f32
    %134 = vector.broadcast %cst_78 : f32 to vector<128x128xf32>
    %135 = arith.mulf %134, %133 : vector<128x128xf32>
    %136 = arith.maximumf %133, %135 : vector<128x128xf32>
    %cst_79 = arith.constant -3.000000e+38 : f32
    %137 = vector.broadcast %cst_79 : f32 to vector<128x128xf32>
    %138 = arith.select %5, %136, %137 : vector<128x128xi1>, vector<128x128xf32>
    %c1_80 = arith.constant 1 : index
    %c0_81 = arith.constant 0 : index
    %c0_82 = arith.constant 0 : index
    %139 = vector.load %arg10[%c1_80, %c0_81, %c0_82] : memref<2x128x1xf32, #tpu.memory_space<vmem>>, vector<1x128x1xf32>
    %140 = vector.shape_cast %139 : vector<1x128x1xf32> to vector<128x1xf32>
    %cst_83 = arith.constant dense<0xFF800000> : vector<128xf32>
    %141 = vector.multi_reduction <maximumf>, %138, %cst_83 [1] : vector<128x128xf32> to vector<128xf32>
    %142 = vector.shape_cast %141 : vector<128xf32> to vector<128x1xf32>
    %143 = arith.maximumf %140, %142 : vector<128x1xf32>
    %144 = arith.subf %140, %143 : vector<128x1xf32>
    %145 = math.exp %144 : vector<128x1xf32>
    %146 = vector.broadcast %143 : vector<128x1xf32> to vector<128x128xf32>
    %147 = arith.subf %138, %146 : vector<128x128xf32>
    %148 = math.exp %147 : vector<128x128xf32>
    %c1_84 = arith.constant 1 : index
    %c0_85 = arith.constant 0 : index
    %c0_86 = arith.constant 0 : index
    %149 = vector.load %arg11[%c1_84, %c0_85, %c0_86] : memref<2x128x1xf32, #tpu.memory_space<vmem>>, vector<1x128x1xf32>
    %150 = vector.shape_cast %149 : vector<1x128x1xf32> to vector<128x1xf32>
    %151 = arith.mulf %145, %150 : vector<128x1xf32>
    %cst_87 = arith.constant dense<0.000000e+00> : vector<128xf32>
    %152 = vector.multi_reduction <add>, %148, %cst_87 [1] : vector<128x128xf32> to vector<128xf32>
    %153 = vector.shape_cast %152 : vector<128xf32> to vector<128x1xf32>
    %154 = arith.addf %151, %153 : vector<128x1xf32>
    %c1_88 = arith.constant 1 : index
    %c0_89 = arith.constant 0 : index
    %c0_90 = arith.constant 0 : index
    %155 = vector.load %arg11[%c1_88, %c0_89, %c0_90] : memref<2x128x1xf32, #tpu.memory_space<vmem>>, vector<1x128x1xf32>
    %156 = vector.shape_cast %155 : vector<1x128x1xf32> to vector<128x1xf32>
    %157 = vector.shape_cast %154 : vector<128x1xf32> to vector<1x128x1xf32>
    tpu.vector_store %arg11[%c1_88, %c0_89, %c0_90], %157 {strides = array<i32>} : memref<2x128x1xf32, #tpu.memory_space<vmem>>, vector<1x128x1xf32>,
    %c1_91 = arith.constant 1 : index
    %c0_92 = arith.constant 0 : index
    %c0_93 = arith.constant 0 : index
    %158 = vector.load %arg10[%c1_91, %c0_92, %c0_93] : memref<2x128x1xf32, #tpu.memory_space<vmem>>, vector<1x128x1xf32>
    %159 = vector.shape_cast %158 : vector<1x128x1xf32> to vector<128x1xf32>
    %160 = vector.shape_cast %143 : vector<128x1xf32> to vector<1x128x1xf32>
    tpu.vector_store %arg10[%c1_91, %c0_92, %c0_93], %160 {strides = array<i32>} : memref<2x128x1xf32, #tpu.memory_space<vmem>>, vector<1x128x1xf32>,
    %161 = arith.truncf %148 : vector<128x128xf32> to vector<128x128xbf16>
    %162 = vector.extract_strided_slice %8 {offsets = [0, 16], sizes = [128, 16], strides = [1, 1]} : vector<128x32xbf16> to vector<128x16xbf16>
    %cst_94 = arith.constant dense<0.000000e+00> : vector<128x16xf32>
    %163 = tpu.matmul %161, %162, %cst_94 {dimension_numbers = #tpu.dot_dimension_numbers<[1], [0], [0], [1], [0, 0, 1, 1], [], []>} : vector<128x128xbf16>, vector<128x16xbf16>, vector<128x16xf32> -> vector<128x16xf32>
    %c0_95 = arith.constant 0 : index
    %c16 = arith.constant 16 : index
    %164 = vector.load %arg12[%c0_95, %c16] : memref<128x32xf32, #tpu.memory_space<vmem>>, vector<128x16xf32>
    %165 = vector.broadcast %145 : vector<128x1xf32> to vector<128x16xf32>
    %166 = arith.mulf %165, %164 : vector<128x16xf32>
    %167 = arith.addf %166, %163 : vector<128x16xf32>
    %c0_96 = arith.constant 0 : index
    %c16_97 = arith.constant 16 : index
    %168 = vector.load %arg12[%c0_96, %c16_97] : memref<128x32xf32, #tpu.memory_space<vmem>>, vector<128x16xf32>
    tpu.vector_store %arg12[%c0_96, %c16_97], %167 {strides = array<i32>} : memref<128x32xf32, #tpu.memory_space<vmem>>, vector<128x16xf32>,
    %c1_i32 = arith.constant 1 : i32
    %169 = arith.cmpi eq, %arg1, %c1_i32 : i32
    %170 = arith.extui %169 : i1 to i32
    %c0_i32_98 = arith.constant 0 : i32
    %171 = arith.cmpi ne, %170, %c0_i32_98 : i32
    scf.if %171 {
      %c0_99 = arith.constant 0 : index
      %c0_100 = arith.constant 0 : index
      %172 = vector.load %arg12[%c0_99, %c0_100] : memref<128x32xf32, #tpu.memory_space<vmem>>, vector<128x32xf32>
      %c0_101 = arith.constant 0 : index
      %c0_102 = arith.constant 0 : index
      %c0_103 = arith.constant 0 : index
      %173 = vector.load %arg11[%c0_101, %c0_102, %c0_103] : memref<2x128x1xf32, #tpu.memory_space<vmem>>, vector<1x128x1xf32>
      %174 = vector.shape_cast %173 : vector<1x128x1xf32> to vector<128x1xf32>
      %cst_104 = arith.constant 0.000000e+00 : f32
      %175 = vector.broadcast %cst_104 : f32 to vector<128x1xf32>
      %176 = arith.cmpf oeq, %174, %175 : vector<128x1xf32>
      %cst_105 = arith.constant 1.000000e+00 : f32
      %177 = vector.broadcast %cst_105 : f32 to vector<128x1xf32>
      %178 = arith.select %176, %177, %174 : vector<128x1xi1>, vector<128x1xf32>
      %179 = tpu.reciprocal %178 {approx = true} : vector<128x1xf32> -> vector<128x1xf32>
      %180 = vector.extract_strided_slice %172 {offsets = [0, 0], sizes = [128, 16], strides = [1, 1]} : vector<128x32xf32> to vector<128x16xf32>
      %181 = vector.broadcast %179 : vector<128x1xf32> to vector<128x16xf32>
      %182 = arith.mulf %180, %181 : vector<128x16xf32>
      %c1_106 = arith.constant 1 : index
      %c0_107 = arith.constant 0 : index
      %c0_108 = arith.constant 0 : index
      %183 = vector.load %arg11[%c1_106, %c0_107, %c0_108] : memref<2x128x1xf32, #tpu.memory_space<vmem>>, vector<1x128x1xf32>
      %184 = vector.shape_cast %183 : vector<1x128x1xf32> to vector<128x1xf32>
      %cst_109 = arith.constant 0.000000e+00 : f32
      %185 = vector.broadcast %cst_109 : f32 to vector<128x1xf32>
      %186 = arith.cmpf oeq, %184, %185 : vector<128x1xf32>
      %cst_110 = arith.constant 1.000000e+00 : f32
      %187 = vector.broadcast %cst_110 : f32 to vector<128x1xf32>
      %188 = arith.select %186, %187, %184 : vector<128x1xi1>, vector<128x1xf32>
      %189 = tpu.reciprocal %188 {approx = true} : vector<128x1xf32> -> vector<128x1xf32>
      %190 = vector.extract_strided_slice %172 {offsets = [0, 16], sizes = [128, 16], strides = [1, 1]} : vector<128x32xf32> to vector<128x16xf32>
      %191 = vector.broadcast %189 : vector<128x1xf32> to vector<128x16xf32>
      %192 = arith.mulf %190, %191 : vector<128x16xf32>
      %193 = tpu.concatenate %182, %192 in 1 : vector<128x16xf32>, vector<128x16xf32> -> vector<128x32xf32>
      %c0_111 = arith.constant 0 : index
      %c0_112 = arith.constant 0 : index
      %194 = vector.load %arg8[%c0_111, %c0_112] : memref<128x32xf32, #tpu.memory_space<vmem>>, vector<128x32xf32>
      %195 = arith.addf %193, %194 : vector<128x32xf32>
      %c0_113 = arith.constant 0 : index
      %c0_114 = arith.constant 0 : index
      %196 = vector.load %arg9[%c0_113, %c0_114] : memref<128x32xf32, #tpu.memory_space<vmem>>, vector<128x32xf32>
      tpu.vector_store %arg9[%c0_113, %c0_114], %195 {strides = array<i32>} : memref<128x32xf32, #tpu.memory_space<vmem>>, vector<128x32xf32>,
    } else {
    }
    return
  }
  func.func @transform_0(%arg0: i32, %arg1: i32) -> (i32, i32) {
    %c0_i32 = arith.constant 0 : i32
    %c0_i32_0 = arith.constant 0 : i32
    %c0_i32_1 = arith.constant 0 : i32
    return %c0_i32, %c0_i32_0 : i32, i32
  }
  func.func @transform_1(%arg0: i32, %arg1: i32) -> (i32, i32) {
    %c0_i32 = arith.constant 0 : i32
    return %arg0, %arg1 : i32, i32
  }
  func.func @transform_2(%arg0: i32, %arg1: i32) -> (i32, i32, i32) {
    %c0_i32 = arith.constant 0 : i32
    %c0_i32_0 = arith.constant 0 : i32
    return %c0_i32, %arg0, %arg1 : i32, i32, i32
  }
  func.func @transform_3(%arg0: i32, %arg1: i32) -> (i32, i32) {
    %c0_i32 = arith.constant 0 : i32
    %c0_i32_0 = arith.constant 0 : i32
    return %c0_i32, %arg1 : i32, i32
  }
  func.func @transform_4(%arg0: i32, %arg1: i32) -> (i32, i32) {
    %c0_i32 = arith.constant 0 : i32
    %c0_i32_0 = arith.constant 0 : i32
    return %arg0, %c0_i32 : i32, i32
  }
  func.func @transform_5(%arg0: i32, %arg1: i32) -> (i32, i32) {
    %c0_i32 = arith.constant 0 : i32
    %c0_i32_0 = arith.constant 0 : i32
    return %arg1, %c0_i32 : i32, i32
  }
  func.func @transform_6(%arg0: i32, %arg1: i32) -> (i32, i32) {
    %c0_i32 = arith.constant 0 : i32
    %c0_i32_0 = arith.constant 0 : i32
    return %arg0, %c0_i32 : i32, i32
  }
  func.func @transform_7(%arg0: i32, %arg1: i32) -> (i32, i32) {
    %c0_i32 = arith.constant 0 : i32
    %c0_i32_0 = arith.constant 0 : i32
    return %arg0, %c0_i32 : i32, i32
  }
}

</mosaic_0001>

<llo_original>
// kernel: gat_conv.2
$region0: #{gat_conv.2}
  #allocation0 [shape = 'u32[]', space=smem, size = 0x4, offset = 0x4, fixed_abs, tag = 'smem constant byte address 0x4 - core index']
  #allocation1 [shape = 'u32[144,128]{1,0:T(1,128)}', space=vmem, size = 0x12000, scoped, tag = 'internal scratch']
  %s0 = inlined_call_operand.vmem [shape: f32[256,64], index: 0, kind: input, shape index: {}]
  %s1 = inlined_call_operand.vmem [shape: bf16[64,64], index: 1, kind: input, shape index: {}]
  %s2 = inlined_call_operand.hbm [shape: f32[1,32], index: 2, kind: input, shape index: {}]
  %s3 = inlined_call_operand.hbm [shape: f32[2,64], index: 3, kind: input, shape index: {}]
  %s4 = inlined_call_operand.vmem [shape: f32[64,2], index: 4, kind: input, shape index: {}]
  %s5 = inlined_call_operand.vmem [shape: bf16[256,32], index: 5, kind: output, shape index: {0}]
  %s6 = inlined_call_operand.vmem [shape: f32[256,32], index: 6, kind: output, shape index: {1}]
  %s7 = inlined_call_operand.vmem [shape: f32[2,256], index: 7, kind: output, shape index: {2}]
  %s8 = inlined_call_operand.vmem [shape: f32[256,2], index: 8, kind: output, shape index: {3}]
  %9 = xla_tuple %s5, %s6, %s7, %s8
  %s10 = sld [smem:[#allocation0]]
  $region85: #{gat_conv.2} parent=0
    _
  %s12 = ssub.s32 1, %s10
  %s13 = scalar_select 0, %s12, %s10
  $region1: #{gat_conv.2} parent=0
    #allocation2 [shape = 'u8[512]{0}', space=vmem, size = 0x400, scoped, tag = 'input window, operand 2, single buffered']
    #allocation3 [shape = 's32[2]{0}', space=sflag, size = 0x8, scoped, tag = 'scoped memory for gat_conv.2']
    #allocation4 [shape = 'u8[1024]{0}', space=vmem, size = 0x400, scoped, tag = 'input window, operand 3, single buffered']
    #allocation5 [shape = 's32[1]{0}', space=sflag, size = 0x4, scoped, tag = 'scoped memory for gat_conv.2']
    %14 = vsyncpa [#allocation3], 0
    %15 = vsyncpa [#allocation5], 0
    loop: start=0, step=1, limit=4
    $region2: #{gat_conv.2} parent=1 // loop_pre_header
      _
    $region3: #{gat_conv.2} parent=1 // loop_header
      %s17 = sphi 0, %s21
      %p18 = scmp.ge.s32.totalorder %s17, 4
      %s27 = sphi 0, %s29
      %s30 = sphi 0, %s27
      %s31 = sphi 0, %s30
      %s47 = sphi 0, %s31
      %s51 = sphi 0, %s51
      %s53 = sphi 0, %s51
      %s54 = sphi 0, %s53
      %s68 = sphi 0, %s54
      %s72 = sphi 0, %s72
      %s74 = sphi 0, %s72
      %s75 = sphi 0, %s74
      %s89 = sphi 0, %s75
      %s93 = sphi 0, %s93
      %s95 = sphi 0, %s93
      %s96 = sphi 0, %s95
      %s110 = sphi 0, %s96
      %s114 = sphi 0, %s114
      %s116 = sphi 0, %s114
      %s117 = sphi 0, %s116
      %s131 = sphi 0, %s117
      %s137 = sphi 0, %s139
      %s140 = sphi 0, %s137
      %s141 = sphi 0, %s140
      %s157 = sphi 0, %s141
      %s163 = sphi 0, %s165
      %s166 = sphi 0, %s163
      %s167 = sphi 0, %s166
      %s183 = sphi 0, %s167
      %s189 = sphi 0, %s191
      %s192 = sphi 0, %s189
      %s193 = sphi 0, %s192
      %s209 = sphi 0, %s193
      %s215 = sphi 0, %s217
      %s218 = sphi 0, %s215
      %s219 = sphi 0, %s218
      %s235 = sphi 0, %s219
    $region4: #{gat_conv.2} parent=1 // loop_header_branch
      %20 = sbr.rel (%p18) target = $region8
    $region5: #{gat_conv.2} parent=1 // loop_body
      %s22 = ssub.s32 %s17, 1
      %s23 = ssub.s32 %s17, 2
      %s24 = sadd.s32 %s17, 1
      %s25 = ssub.s32 %s17, %s24
      %p26 = scmp.eq.s32.totalorder %s25, 0
      %s28 = sadd.s32 %s27, 1
      %s29 = scalar_select %p26, %s27, %s28
      %p32 = pneg %p26
      %p33 = scmp.eq.s32.totalorder %s17, 1
      %p34 = por %p32, %p33
      %p35 = scmp.ne.s32.totalorder %s27, %s30
      %p36 = scmp.eq.s32.totalorder %s17, 0
      %p37 = por %p35, %p36
      %p38 = scmp.ne.s32.totalorder %s27, %s30
      %p39 = scmp.eq.s32.totalorder %s22, 1
      %p40 = por %p38, %p39
      %p41 = scmp.ne.s32.totalorder %s30, %s31
      %p42 = scmp.eq.s32.totalorder %s22, 0
      %p43 = por %p41, %p42
      %p44 = scmp.ne.s32.totalorder %s30, %s31
      %p45 = scmp.eq.s32.totalorder %s23, 1
      %p46 = por %p44, %p45
      %p48 = scmp.ne.s32.totalorder %s31, %s47
      %p49 = scmp.eq.s32.totalorder %s23, 0
      %p50 = por %p48, %p49
      %s52 = sadd.s32 %s51, 1
      %p55 = scmp.eq.s32.totalorder %s17, 1
      %p56 = scmp.ne.s32.totalorder %s51, %s53
      %p57 = scmp.eq.s32.totalorder %s17, 0
      %p58 = por %p56, %p57
      %p59 = scmp.ne.s32.totalorder %s51, %s53
      %p60 = scmp.eq.s32.totalorder %s22, 1
      %p61 = por %p59, %p60
      %p62 = scmp.ne.s32.totalorder %s53, %s54
      %p63 = scmp.eq.s32.totalorder %s22, 0
      %p64 = por %p62, %p63
      %p65 = scmp.ne.s32.totalorder %s53, %s54
      %p66 = scmp.eq.s32.totalorder %s23, 1
      %p67 = por %p65, %p66
      %p69 = scmp.ne.s32.totalorder %s54, %s68
      %p70 = scmp.eq.s32.totalorder %s23, 0
      %p71 = por %p69, %p70
      %s73 = sadd.s32 %s72, 1
      %p76 = scmp.eq.s32.totalorder %s17, 1
      %p77 = scmp.ne.s32.totalorder %s72, %s74
      %p78 = scmp.eq.s32.totalorder %s17, 0
      %p79 = por %p77, %p78
      %p80 = scmp.ne.s32.totalorder %s72, %s74
      %p81 = scmp.eq.s32.totalorder %s22, 1
      %p82 = por %p80, %p81
      %p83 = scmp.ne.s32.totalorder %s74, %s75
      %p84 = scmp.eq.s32.totalorder %s22, 0
      %p85 = por %p83, %p84
      %p86 = scmp.ne.s32.totalorder %s74, %s75
      %p87 = scmp.eq.s32.totalorder %s23, 1
      %p88 = por %p86, %p87
      %p90 = scmp.ne.s32.totalorder %s75, %s89
      %p91 = scmp.eq.s32.totalorder %s23, 0
      %p92 = por %p90, %p91
      %s94 = sadd.s32 %s93, 1
      %p97 = scmp.eq.s32.totalorder %s17, 1
      %p98 = scmp.ne.s32.totalorder %s93, %s95
      %p99 = scmp.eq.s32.totalorder %s17, 0
      %p100 = por %p98, %p99
      %p101 = scmp.ne.s32.totalorder %s93, %s95
      %p102 = scmp.eq.s32.totalorder %s22, 1
      %p103 = por %p101, %p102
      %p104 = scmp.ne.s32.totalorder %s95, %s96
      %p105 = scmp.eq.s32.totalorder %s22, 0
      %p106 = por %p104, %p105
      %p107 = scmp.ne.s32.totalorder %s95, %s96
      %p108 = scmp.eq.s32.totalorder %s23, 1
      %p109 = por %p107, %p108
      %p111 = scmp.ne.s32.totalorder %s96, %s110
      %p112 = scmp.eq.s32.totalorder %s23, 0
      %p113 = por %p111, %p112
      %s115 = sadd.s32 %s114, 1
      %p118 = scmp.eq.s32.totalorder %s17, 1
      %p119 = scmp.ne.s32.totalorder %s114, %s116
      %p120 = scmp.eq.s32.totalorder %s17, 0
      %p121 = por %p119, %p120
      %p122 = scmp.ne.s32.totalorder %s114, %s116
      %p123 = scmp.eq.s32.totalorder %s22, 1
      %p124 = por %p122, %p123
      %p125 = scmp.ne.s32.totalorder %s116, %s117
      %p126 = scmp.eq.s32.totalorder %s22, 0
      %p127 = por %p125, %p126
      %p128 = scmp.ne.s32.totalorder %s116, %s117
      %p129 = scmp.eq.s32.totalorder %s23, 1
      %p130 = por %p128, %p129
      %p132 = scmp.ne.s32.totalorder %s117, %s131
      %p133 = scmp.eq.s32.totalorder %s23, 0
      %p134 = por %p132, %p133
      %s135 = ssub.s32 %s17, %s24
      %p136 = scmp.eq.s32.totalorder %s135, 0
      %s138 = sadd.s32 %s137, 1
      %s139 = scalar_select %p136, %s137, %s138
      %p142 = pneg %p136
      %p143 = scmp.eq.s32.totalorder %s17, 1
      %p144 = por %p142, %p143
      %p145 = scmp.ne.s32.totalorder %s137, %s140
      %p146 = scmp.eq.s32.totalorder %s17, 0
      %p147 = por %p145, %p146
      %p148 = scmp.ne.s32.totalorder %s137, %s140
      %p149 = scmp.eq.s32.totalorder %s22, 1
      %p150 = por %p148, %p149
      %p151 = scmp.ne.s32.totalorder %s140, %s141
      %p152 = scmp.eq.s32.totalorder %s22, 0
      %p153 = por %p151, %p152
      %p154 = scmp.ne.s32.totalorder %s140, %s141
      %p155 = scmp.eq.s32.totalorder %s23, 1
      %p156 = por %p154, %p155
      %p158 = scmp.ne.s32.totalorder %s141, %s157
      %p159 = scmp.eq.s32.totalorder %s23, 0
      %p160 = por %p158, %p159
      %s161 = ssub.s32 %s17, %s24
      %p162 = scmp.eq.s32.totalorder %s161, 0
      %s164 = sadd.s32 %s163, 1
      %s165 = scalar_select %p162, %s163, %s164
      %p168 = pneg %p162
      %p169 = scmp.eq.s32.totalorder %s17, 1
      %p170 = por %p168, %p169
      %p171 = scmp.ne.s32.totalorder %s163, %s166
      %p172 = scmp.eq.s32.totalorder %s17, 0
      %p173 = por %p171, %p172
      %p174 = scmp.ne.s32.totalorder %s163, %s166
      %p175 = scmp.eq.s32.totalorder %s22, 1
      %p176 = por %p174, %p175
      %p177 = scmp.ne.s32.totalorder %s166, %s167
      %p178 = scmp.eq.s32.totalorder %s22, 0
      %p179 = por %p177, %p178
      %p180 = scmp.ne.s32.totalorder %s166, %s167
      %p181 = scmp.eq.s32.totalorder %s23, 1
      %p182 = por %p180, %p181
      %p184 = scmp.ne.s32.totalorder %s167, %s183
      %p185 = scmp.eq.s32.totalorder %s23, 0
      %p186 = por %p184, %p185
      %s187 = ssub.s32 %s17, %s24
      %p188 = scmp.eq.s32.totalorder %s187, 0
      %s190 = sadd.s32 %s189, 1
      %s191 = scalar_select %p188, %s189, %s190
      %p194 = pneg %p188
      %p195 = scmp.eq.s32.totalorder %s17, 1
      %p196 = por %p194, %p195
      %p197 = scmp.ne.s32.totalorder %s189, %s192
      %p198 = scmp.eq.s32.totalorder %s17, 0
      %p199 = por %p197, %p198
      %p200 = scmp.ne.s32.totalorder %s189, %s192
      %p201 = scmp.eq.s32.totalorder %s22, 1
      %p202 = por %p200, %p201
      %p203 = scmp.ne.s32.totalorder %s192, %s193
      %p204 = scmp.eq.s32.totalorder %s22, 0
      %p205 = por %p203, %p204
      %p206 = scmp.ne.s32.totalorder %s192, %s193
      %p207 = scmp.eq.s32.totalorder %s23, 1
      %p208 = por %p206, %p207
      %p210 = scmp.ne.s32.totalorder %s193, %s209
      %p211 = scmp.eq.s32.totalorder %s23, 0
      %p212 = por %p210, %p211
      %s213 = ssub.s32 %s17, %s24
      %p214 = scmp.eq.s32.totalorder %s213, 0
      %s216 = sadd.s32 %s215, 1
      %s217 = scalar_select %p214, %s215, %s216
      %p220 = pneg %p214
      %p221 = scmp.eq.s32.totalorder %s17, 1
      %p222 = por %p220, %p221
      %p223 = scmp.ne.s32.totalorder %s215, %s218
      %p224 = scmp.eq.s32.totalorder %s17, 0
      %p225 = por %p223, %p224
      %p226 = scmp.ne.s32.totalorder %s215, %s218
      %p227 = scmp.eq.s32.totalorder %s22, 1
      %p228 = por %p226, %p227
      %p229 = scmp.ne.s32.totalorder %s218, %s219
      %p230 = scmp.eq.s32.totalorder %s22, 0
      %p231 = por %p229, %p230
      %p232 = scmp.ne.s32.totalorder %s218, %s219
      %p233 = scmp.eq.s32.totalorder %s23, 1
      %p234 = por %p232, %p233
      %p236 = scmp.ne.s32.totalorder %s219, %s235
      %p237 = scmp.eq.s32.totalorder %s23, 0
      %p238 = por %p236, %p237
      %p239 = scmp.le.s32.totalorder 1, %s17
      %p240 = scmp.lt.s32.totalorder %s17, 3
      %p241 = pnand %p239, %p240
      %p242 = pneg %p241
      // Predicated region
      $region9: #{gat_conv.2} parent=5 // pred_check
        _
      $region10: #{gat_conv.2} parent=5 // pred_check_branch
        %244 = sbr.rel (%p241) target = $region12
      $region11: #{gat_conv.2} parent=5 // pred_region
        %s245 = ssub.s32 %s17, 1
        // Predicated region
        $region13: #{gat_conv.2} parent=11 // pred_check
          %p246 = pneg %p64
        $region14: #{gat_conv.2} parent=11 // pred_check_branch
          %248 = sbr.rel (%p246) target = $region16
        $region15: #{gat_conv.2} parent=11 // pred_region
          _
        $region16: #{gat_conv.2} parent=11 // pred_fallthru
          _
        // Predicated region
        $region17: #{gat_conv.2} parent=11 // pred_check
          %p249 = pneg %p85
        $region18: #{gat_conv.2} parent=11 // pred_check_branch
          %251 = sbr.rel (%p249) target = $region20
        $region19: #{gat_conv.2} parent=11 // pred_region
          %s253 = ssub.s32 16, 16
          %254 = vsyncadd [#allocation3], %s253
          %s256 = sshll.u32 [#allocation2], 4
          %s257 = int_to_ptr.vmem [resolvable:$true] %s256
          %259 = dma.hbm_to_vmem [thread:$0]  %s2, 16, %s257, [#allocation3]
        $region20: #{gat_conv.2} parent=11 // pred_fallthru
          _
        // Predicated region
        $region21: #{gat_conv.2} parent=11 // pred_check
          %p260 = pneg %p106
        $region22: #{gat_conv.2} parent=11 // pred_check_branch
          %262 = sbr.rel (%p260) target = $region24
        $region23: #{gat_conv.2} parent=11 // pred_region
          %s264 = ssub.s32 32, 32
          %265 = vsyncadd [#allocation5], %s264
          %s267 = sshll.u32 [#allocation4], 4
          %s268 = int_to_ptr.vmem [resolvable:$true] %s267
          %270 = dma.hbm_to_vmem [thread:$0]  %s3, 32, %s268, [#allocation5]
        $region24: #{gat_conv.2} parent=11 // pred_fallthru
          _
        // Predicated region
        $region25: #{gat_conv.2} parent=11 // pred_check
          %p271 = pneg %p127
        $region26: #{gat_conv.2} parent=11 // pred_check_branch
          %273 = sbr.rel (%p271) target = $region28
        $region27: #{gat_conv.2} parent=11 // pred_region
          _
        $region28: #{gat_conv.2} parent=11 // pred_fallthru
          _
      $region12: #{gat_conv.2} parent=5 // pred_fallthru
        _
      %p274 = scmp.lt.s32.totalorder %s17, 2
      // Predicated region
      $region29: #{gat_conv.2} parent=5 // pred_check
        %p275 = pneg %p274
      $region30: #{gat_conv.2} parent=5 // pred_check_branch
        %277 = sbr.rel (%p275) target = $region32
      $region31: #{gat_conv.2} parent=5 // pred_region
        // Predicated region
        $region33: #{gat_conv.2} parent=31 // pred_check
          %p278 = pneg %p37
        $region34: #{gat_conv.2} parent=31 // pred_check_branch
          %280 = sbr.rel (%p278) target = $region36
        $region35: #{gat_conv.2} parent=31 // pred_region
          %s281 = smul.u32 16, %s17
          %p282 = scmp.lt.s32.totalorder %s281, 31
          %s283 = scalar_select %p282, %s281, 31
          %s284 = smul.addr %s283, 8
          %s285 = scalar_lea.vmem %s0, %s284
          %s286 = smul.u32 16, %s17
        $region36: #{gat_conv.2} parent=31 // pred_fallthru
          _
      $region32: #{gat_conv.2} parent=5 // pred_fallthru
        _
      %p287 = scmp.le.s32.totalorder 1, %s17
      %p288 = scmp.lt.s32.totalorder %s17, 3
      %p289 = pnand %p287, %p288
      %p290 = pneg %p289
      // Predicated region
      $region37: #{gat_conv.2} parent=5 // pred_check
        _
      $region38: #{gat_conv.2} parent=5 // pred_check_branch
        %292 = sbr.rel (%p289) target = $region40
      $region39: #{gat_conv.2} parent=5 // pred_region
        %s293 = ssub.s32 %s17, 1
        // Predicated region
        $region41: #{gat_conv.2} parent=39 // pred_check
          %p294 = pneg %p85
        $region42: #{gat_conv.2} parent=39 // pred_check_branch
          %296 = sbr.rel (%p294) target = $region44
        $region43: #{gat_conv.2} parent=39 // pred_region
          %297 = dma.done [#allocation3], 16
        $region44: #{gat_conv.2} parent=39 // pred_fallthru
          _
        // Predicated region
        $region45: #{gat_conv.2} parent=39 // pred_check
          %p298 = pneg %p106
        $region46: #{gat_conv.2} parent=39 // pred_check_branch
          %300 = sbr.rel (%p298) target = $region48
        $region47: #{gat_conv.2} parent=39 // pred_region
          %301 = dma.done [#allocation5], 32
        $region48: #{gat_conv.2} parent=39 // pred_fallthru
          _
        %s302 = smul.u32 16, %s22
        %p303 = scmp.lt.s32.totalorder %s302, 31
        %s304 = scalar_select %p303, %s302, 31
        %s305 = smul.addr %s304, 8
        %s306 = scalar_lea.vmem %s0, %s305
        %p307 = pneg %p43
        %p308 = pneg %p40
        %p309 = pneg %p64
        %p310 = pneg %p61
        %p311 = pneg %p85
        %p312 = pneg %p82
        %p313 = pneg %p106
        %p314 = pneg %p103
        %p315 = pneg %p127
        %p316 = pneg %p124
        %p317 = pneg %p153
        %p318 = pneg %p150
        %s319 = smul.u32 16, %s22
        %p320 = scmp.lt.s32.totalorder %s319, 31
        %s321 = scalar_select %p320, %s319, 31
        %s322 = smul.addr %s321, 4
        %s323 = scalar_lea.vmem %s5, %s322
        %p324 = pneg %p179
        %p325 = pneg %p176
        %s326 = smul.u32 16, %s22
        %p327 = scmp.lt.s32.totalorder %s326, 31
        %s328 = scalar_select %p327, %s326, 31
        %s329 = smul.addr %s328, 8
        %s330 = scalar_lea.vmem %s6, %s329
        %p331 = pneg %p205
        %p332 = pneg %p202
        %p333 = scmp.lt.s32.totalorder %s22, 1
        %s334 = scalar_select %p333, %s22, 1
        %s335 = smul.addr %s334, 2
        %s336 = scalar_lea.vmem %s7, %s335
        %p337 = pneg %p231
        %p338 = pneg %p228
        %s339 = smul.u32 16, %s22
        %p340 = scmp.lt.s32.totalorder %s339, 31
        %s341 = scalar_select %p340, %s339, 31
        %s342 = smul.addr %s341, 8
        %s343 = scalar_lea.vmem %s8, %s342
        %s344 = smul.u32 16, %s22
        %p345 = scmp.lt.s32.totalorder %s344, 31
        %s346 = scalar_select %p345, %s344, 31
        %s347 = smul.addr %s346, 8
        %s348 = scalar_lea.vmem %s0, %s347
        %s349 = smul.u32 16, %s22
        %s350 = smul.u32 16, %s22
        %p351 = scmp.lt.s32.totalorder %s350, 31
        %s352 = scalar_select %p351, %s350, 31
        %s353 = smul.addr %s352, 4
        %s354 = scalar_lea.vmem %s5, %s353
        %s355 = smul.u32 16, %s22
        %s356 = smul.u32 16, %s22
        %p357 = scmp.lt.s32.totalorder %s356, 31
        %s358 = scalar_select %p357, %s356, 31
        %s359 = smul.addr %s358, 8
        %s360 = scalar_lea.vmem %s6, %s359
        %s361 = smul.u32 16, %s22
        %p362 = scmp.lt.s32.totalorder %s22, 1
        %s363 = scalar_select %p362, %s22, 1
        %s364 = smul.addr %s363, 2
        %s365 = scalar_lea.vmem %s7, %s364
        %s366 = smul.u32 16, %s22
        %p367 = scmp.lt.s32.totalorder %s366, 31
        %s368 = scalar_select %p367, %s366, 31
        %s369 = smul.addr %s368, 8
        %s370 = scalar_lea.vmem %s8, %s369
        %s371 = smul.u32 16, %s22
        %v373 = vld [vmem:[%s348] sm:$0xff]
        %v374 = vld [vmem:[%s348 + $0x8] sm:$0xff]
        %v375 = vld [vmem:[%s348 + $0x10] sm:$0xff]
        %v376 = vld [vmem:[%s348 + $0x18] sm:$0xff]
        %v377 = vld [vmem:[%s348 + $0x20] sm:$0xff]
        %v378 = vld [vmem:[%s348 + $0x28] sm:$0xff]
        %v379 = vld [vmem:[%s348 + $0x30] sm:$0xff]
        %v380 = vld [vmem:[%s348 + $0x38] sm:$0xff]
        %v381 = vld [vmem:[%s348 + $0x40] sm:$0xff]
        %v382 = vld [vmem:[%s348 + $0x48] sm:$0xff]
        %v383 = vld [vmem:[%s348 + $0x50] sm:$0xff]
        %v384 = vld [vmem:[%s348 + $0x58] sm:$0xff]
        %v385 = vld [vmem:[%s348 + $0x60] sm:$0xff]
        %v386 = vld [vmem:[%s348 + $0x68] sm:$0xff]
        %v387 = vld [vmem:[%s348 + $0x70] sm:$0xff]
        %v388 = vld [vmem:[%s348 + $0x78] sm:$0xff]
        %v389 = vpack.c.bf16 %v374, %v373
        %v390 = vpack.c.bf16 %v376, %v375
        %v391 = vpack.c.bf16 %v378, %v377
        %v392 = vpack.c.bf16 %v380, %v379
        %v393 = vpack.c.bf16 %v382, %v381
        %v394 = vpack.c.bf16 %v384, %v383
        %v395 = vpack.c.bf16 %v386, %v385
        %v396 = vpack.c.bf16 %v388, %v387
        %v397 = vld [vmem:[%s1] sm:$0xf]
        %v398 = vld [vmem:[%s1 + $0x4] sm:$0xf]
        %v399 = vld [vmem:[%s1 + $0x8] sm:$0xf]
        %v400 = vld [vmem:[%s1 + $0xc] sm:$0xf]
        %v401 = vld [vmem:[%s1 + $0x10] sm:$0xf]
        %v402 = vld [vmem:[%s1 + $0x14] sm:$0xf]
        %v403 = vld [vmem:[%s1 + $0x18] sm:$0xf]
        %v404 = vld [vmem:[%s1 + $0x1c] sm:$0xf]
        %v413 = vunpack.c.l.b16 %v397
        %v414 = vunpack.c.l.b16 %v398
        %v415 = vunpack.c.l.b16 %v399
        %v416 = vunpack.c.l.b16 %v400
        %v417 = vunpack.c.l.b16 %v401
        %v418 = vunpack.c.l.b16 %v402
        %v419 = vunpack.c.l.b16 %v403
        %v420 = vunpack.c.l.b16 %v404
        %v421 = vpack.c.b16 %v414, %v413
        %v422 = vpack.c.b16 %v416, %v415
        %v423 = vpack.c.b16 %v418, %v417
        %v424 = vpack.c.b16 %v420, %v419
        %vm429 = vcmask 523264
        %v431 = vsel %vm429, %v389, 0
        %v434 = vsel %vm429, %v390, 0
        %v437 = vsel %vm429, %v391, 0
        %v440 = vsel %vm429, %v392, 0
        %v443 = vsel %vm429, %v393, 0
        %v446 = vsel %vm429, %v394, 0
        %v449 = vsel %vm429, %v395, 0
        %v452 = vsel %vm429, %v396, 0
        %454 = vmatprep.subr.bf16.mxu0 0
        %455 = vmatpush1.bf16.msra.mxu0 %v421
        %456 = vmatprep.subr.bf16.mxu0 0
        %457 = vmatpush1.bf16.msra.mxu0 %v422
        %458 = vmatprep.subr.bf16.mxu0 0
        %459 = vmatpush1.bf16.msra.mxu0 %v423
        %460 = vmatprep.subr.bf16.mxu0 0
        %461 = vmatpush1.bf16.msra.mxu0 %v424
        %462 = vmatprep.subr.bf16.mxu0 0
        %463 = vmatpush1.bf16.msra.mxu0 0
        %464 = vmatprep.subr.bf16.mxu0 0
        %465 = vmatpush1.bf16.msra.mxu0 0
        %466 = vmatprep.subr.bf16.mxu0 0
        %467 = vmatpush1.bf16.msra.mxu0 0
        %468 = vmatprep.subr.bf16.mxu0 0
        %469 = vmatpush1.bf16.msra.mxu0 0
        %470 = vmatprep.subr.bf16.mxu0 0
        %471 = vmatpush1.bf16.msra.mxu0 0
        %472 = vmatprep.subr.bf16.mxu0 0
        %473 = vmatpush1.bf16.msra.mxu0 0
        %474 = vmatprep.subr.bf16.mxu0 0
        %475 = vmatpush1.bf16.msra.mxu0 0
        %476 = vmatprep.subr.bf16.mxu0 0
        %477 = vmatpush1.bf16.msra.mxu0 0
        %478 = vmatprep.subr.bf16.mxu0 0
        %479 = vmatpush1.bf16.msra.mxu0 0
        %480 = vmatprep.subr.bf16.mxu0 0
        %481 = vmatpush1.bf16.msra.mxu0 0
        %482 = vmatprep.subr.bf16.mxu0 0
        %483 = vmatpush1.bf16.msra.mxu0 0
        %484 = vmatprep.subr.bf16.mxu0 0
        %485 = vmatpush1.bf16.msra.mxu0 0
        %486 = vmatprep.mubr.bf16.mxu0 0
        %487 = vmatmul.mubr.bf16.gmra.mrb[0].mxu0 %v431
        %v488 = vpop.f32.mrb[0].mxu0
        %v489 = vadd.f32 0.0, %v488
        %v490 = vpop.f32.mrb[0].mxu0
        %v491 = vpop.f32.mrb[0].mxu0
        %v492 = vadd.f32 0.0, %v491
        %v493 = vpop.f32.mrb[0].mxu0
        %494 = vmatprep.mubr.bf16.mxu0 0
        %495 = vmatmul.mubr.bf16.gmra.mrb[0].mxu0 %v434
        %v496 = vpop.f32.mrb[0].mxu0
        %v497 = vadd.f32 0.0, %v496
        %v498 = vpop.f32.mrb[0].mxu0
        %v499 = vpop.f32.mrb[0].mxu0
        %v500 = vadd.f32 0.0, %v499
        %v501 = vpop.f32.mrb[0].mxu0
        %502 = vmatprep.mubr.bf16.mxu0 0
        %503 = vmatmul.mubr.bf16.gmra.mrb[0].mxu0 %v437
        %v504 = vpop.f32.mrb[0].mxu0
        %v505 = vadd.f32 0.0, %v504
        %v506 = vpop.f32.mrb[0].mxu0
        %v507 = vpop.f32.mrb[0].mxu0
        %v508 = vadd.f32 0.0, %v507
        %v509 = vpop.f32.mrb[0].mxu0
        %510 = vmatprep.mubr.bf16.mxu0 0
        %511 = vmatmul.mubr.bf16.gmra.mrb[0].mxu0 %v440
        %v512 = vpop.f32.mrb[0].mxu0
        %v513 = vadd.f32 0.0, %v512
        %v514 = vpop.f32.mrb[0].mxu0
        %v515 = vpop.f32.mrb[0].mxu0
        %v516 = vadd.f32 0.0, %v515
        %v517 = vpop.f32.mrb[0].mxu0
        %518 = vmatprep.mubr.bf16.mxu0 0
        %519 = vmatmul.mubr.bf16.gmra.mrb[0].mxu0 %v443
        %v520 = vpop.f32.mrb[0].mxu0
        %v521 = vadd.f32 0.0, %v520
        %v522 = vpop.f32.mrb[0].mxu0
        %v523 = vpop.f32.mrb[0].mxu0
        %v524 = vadd.f32 0.0, %v523
        %v525 = vpop.f32.mrb[0].mxu0
        %526 = vmatprep.mubr.bf16.mxu0 0
        %527 = vmatmul.mubr.bf16.gmra.mrb[0].mxu0 %v446
        %v528 = vpop.f32.mrb[0].mxu0
        %v529 = vadd.f32 0.0, %v528
        %v530 = vpop.f32.mrb[0].mxu0
        %v531 = vpop.f32.mrb[0].mxu0
        %v532 = vadd.f32 0.0, %v531
        %v533 = vpop.f32.mrb[0].mxu0
        %534 = vmatprep.mubr.bf16.mxu0 0
        %535 = vmatmul.mubr.bf16.gmra.mrb[0].mxu0 %v449
        %v536 = vpop.f32.mrb[0].mxu0
        %v537 = vadd.f32 0.0, %v536
        %v538 = vpop.f32.mrb[0].mxu0
        %v539 = vpop.f32.mrb[0].mxu0
        %v540 = vadd.f32 0.0, %v539
        %v541 = vpop.f32.mrb[0].mxu0
        %542 = vmatprep.mubr.bf16.mxu0 0
        %543 = vmatmul.mubr.bf16.gmra.mrb[0].mxu0 %v452
        %v544 = vpop.f32.mrb[0].mxu0
        %v545 = vadd.f32 0.0, %v544
        %v546 = vpop.f32.mrb[0].mxu0
        %v547 = vpop.f32.mrb[0].mxu0
        %v548 = vadd.f32 0.0, %v547
        %v549 = vpop.f32.mrb[0].mxu0
        %550 = vdwg.mxu0
        %v551 = vpack.c.bf16 %v492, %v489
        %v552 = vpack.c.bf16 %v500, %v497
        %v553 = vpack.c.bf16 %v508, %v505
        %v554 = vpack.c.bf16 %v516, %v513
        %v555 = vpack.c.bf16 %v524, %v521
        %v556 = vpack.c.bf16 %v532, %v529
        %v557 = vpack.c.bf16 %v540, %v537
        %v558 = vpack.c.bf16 %v548, %v545
        %v567 = vunpack.c.l.b16 %v551
        %v568 = vunpack.c.h.b16 %v551
        %v569 = vunpack.c.l.b16 %v552
        %v570 = vunpack.c.h.b16 %v552
        %v571 = vunpack.c.l.b16 %v553
        %v572 = vunpack.c.h.b16 %v553
        %v573 = vunpack.c.l.b16 %v554
        %v574 = vunpack.c.h.b16 %v554
        %v575 = vunpack.c.l.b16 %v555
        %v576 = vunpack.c.h.b16 %v555
        %v577 = vunpack.c.l.b16 %v556
        %v578 = vunpack.c.h.b16 %v556
        %v579 = vunpack.c.l.b16 %v557
        %v580 = vunpack.c.h.b16 %v557
        %v581 = vunpack.c.l.b16 %v558
        %v582 = vunpack.c.h.b16 %v558
        %v583 = vpack.c.b16 %v567, %v567
        %v584 = vpack.c.b16 %v568, %v568
        %v585 = vpack.c.b16 %v569, %v569
        %v586 = vpack.c.b16 %v570, %v570
        %v587 = vpack.c.b16 %v571, %v571
        %v588 = vpack.c.b16 %v572, %v572
        %v589 = vpack.c.b16 %v573, %v573
        %v590 = vpack.c.b16 %v574, %v574
        %v591 = vpack.c.b16 %v575, %v575
        %v592 = vpack.c.b16 %v576, %v576
        %v593 = vpack.c.b16 %v577, %v577
        %v594 = vpack.c.b16 %v578, %v578
        %v595 = vpack.c.b16 %v579, %v579
        %v596 = vpack.c.b16 %v580, %v580
        %v597 = vpack.c.b16 %v581, %v581
        %v598 = vpack.c.b16 %v582, %v582
        %vm615 = vcmask 257024
        %616 = vst.msk [vmem:[%s354] sm:$0xf] %vm615, %v583
        %617 = vst.msk [vmem:[%s354 + $0x4] sm:$0xf] %vm615, %v584
        %618 = vst.msk [vmem:[%s354 + $0x8] sm:$0xf] %vm615, %v585
        %619 = vst.msk [vmem:[%s354 + $0xc] sm:$0xf] %vm615, %v586
        %620 = vst.msk [vmem:[%s354 + $0x10] sm:$0xf] %vm615, %v587
        %621 = vst.msk [vmem:[%s354 + $0x14] sm:$0xf] %vm615, %v588
        %622 = vst.msk [vmem:[%s354 + $0x18] sm:$0xf] %vm615, %v589
        %623 = vst.msk [vmem:[%s354 + $0x1c] sm:$0xf] %vm615, %v590
        %624 = vst.msk [vmem:[%s354 + $0x20] sm:$0xf] %vm615, %v591
        %625 = vst.msk [vmem:[%s354 + $0x24] sm:$0xf] %vm615, %v592
        %626 = vst.msk [vmem:[%s354 + $0x28] sm:$0xf] %vm615, %v593
        %627 = vst.msk [vmem:[%s354 + $0x2c] sm:$0xf] %vm615, %v594
        %628 = vst.msk [vmem:[%s354 + $0x30] sm:$0xf] %vm615, %v595
        %629 = vst.msk [vmem:[%s354 + $0x34] sm:$0xf] %vm615, %v596
        %630 = vst.msk [vmem:[%s354 + $0x38] sm:$0xf] %vm615, %v597
        %631 = vst.msk [vmem:[%s354 + $0x3c] sm:$0xf] %vm615, %v598
        %v632 = vld [vmem:[#allocation2] sm:$0x1]
        %v634 = vlaneseq
        %v635 = vshrl.u32 %v634, 7
        %v636 = vsub.s32 0, %v635
        %v637 = vrot.slane %v632, %v636
        %638 = vrot.lane.b32.xlu0 %v637, 32
        %v639 = vpop.permute.xlu0 %638
        %v641 = vadd.f32 %v489, %v639
        %v642 = vadd.f32 %v492, %v639
        %v643 = vadd.f32 %v497, %v639
        %v644 = vadd.f32 %v500, %v639
        %v645 = vadd.f32 %v505, %v639
        %v646 = vadd.f32 %v508, %v639
        %v647 = vadd.f32 %v513, %v639
        %v648 = vadd.f32 %v516, %v639
        %v649 = vadd.f32 %v521, %v639
        %v650 = vadd.f32 %v524, %v639
        %v651 = vadd.f32 %v529, %v639
        %v652 = vadd.f32 %v532, %v639
        %v653 = vadd.f32 %v537, %v639
        %v654 = vadd.f32 %v540, %v639
        %v655 = vadd.f32 %v545, %v639
        %v656 = vadd.f32 %v548, %v639
        %673 = vrot.lane.b32.xlu0 %v641, 96
        %v674 = vpop.permute.xlu0 %673
        %675 = vrot.lane.b32.xlu0 %v642, 96
        %v676 = vpop.permute.xlu0 %675
        %677 = vrot.lane.b32.xlu0 %v643, 96
        %v678 = vpop.permute.xlu0 %677
        %679 = vrot.lane.b32.xlu0 %v644, 96
        %v680 = vpop.permute.xlu0 %679
        %681 = vrot.lane.b32.xlu0 %v645, 96
        %v682 = vpop.permute.xlu0 %681
        %683 = vrot.lane.b32.xlu0 %v646, 96
        %v684 = vpop.permute.xlu0 %683
        %685 = vrot.lane.b32.xlu0 %v647, 96
        %v686 = vpop.permute.xlu0 %685
        %687 = vrot.lane.b32.xlu0 %v648, 96
        %v688 = vpop.permute.xlu0 %687
        %689 = vrot.lane.b32.xlu0 %v649, 96
        %v690 = vpop.permute.xlu0 %689
        %691 = vrot.lane.b32.xlu0 %v650, 96
        %v692 = vpop.permute.xlu0 %691
        %693 = vrot.lane.b32.xlu0 %v651, 96
        %v694 = vpop.permute.xlu0 %693
        %695 = vrot.lane.b32.xlu0 %v652, 96
        %v696 = vpop.permute.xlu0 %695
        %697 = vrot.lane.b32.xlu0 %v653, 96
        %v698 = vpop.permute.xlu0 %697
        %699 = vrot.lane.b32.xlu0 %v654, 96
        %v700 = vpop.permute.xlu0 %699
        %701 = vrot.lane.b32.xlu0 %v655, 96
        %v702 = vpop.permute.xlu0 %701
        %703 = vrot.lane.b32.xlu0 %v656, 96
        %v704 = vpop.permute.xlu0 %703
        %vm721 = vcmask 261120
        %722 = vst.msk [vmem:[%s360] sm:$0xff] %vm721, %v674
        %723 = vst.msk [vmem:[%s360 + $0x8] sm:$0xff] %vm721, %v676
        %724 = vst.msk [vmem:[%s360 + $0x10] sm:$0xff] %vm721, %v678
        %725 = vst.msk [vmem:[%s360 + $0x18] sm:$0xff] %vm721, %v680
        %726 = vst.msk [vmem:[%s360 + $0x20] sm:$0xff] %vm721, %v682
        %727 = vst.msk [vmem:[%s360 + $0x28] sm:$0xff] %vm721, %v684
        %728 = vst.msk [vmem:[%s360 + $0x30] sm:$0xff] %vm721, %v686
        %729 = vst.msk [vmem:[%s360 + $0x38] sm:$0xff] %vm721, %v688
        %730 = vst.msk [vmem:[%s360 + $0x40] sm:$0xff] %vm721, %v690
        %731 = vst.msk [vmem:[%s360 + $0x48] sm:$0xff] %vm721, %v692
        %732 = vst.msk [vmem:[%s360 + $0x50] sm:$0xff] %vm721, %v694
        %733 = vst.msk [vmem:[%s360 + $0x58] sm:$0xff] %vm721, %v696
        %734 = vst.msk [vmem:[%s360 + $0x60] sm:$0xff] %vm721, %v698
        %735 = vst.msk [vmem:[%s360 + $0x68] sm:$0xff] %vm721, %v700
        %736 = vst.msk [vmem:[%s360 + $0x70] sm:$0xff] %vm721, %v702
        %737 = vst.msk [vmem:[%s360 + $0x78] sm:$0xff] %vm721, %v704
        %v738 = vld [vmem:[#allocation4] sm:$0x3]
        %v740 = vsel %vm429, %v738, 0
        %v743 = vsel %vm429, %v373, 0
        %v746 = vsel %vm429, %v374, 0
        %v749 = vsel %vm429, %v375, 0
        %v752 = vsel %vm429, %v376, 0
        %v755 = vsel %vm429, %v377, 0
        %v758 = vsel %vm429, %v378, 0
        %v761 = vsel %vm429, %v379, 0
        %v764 = vsel %vm429, %v380, 0
        %v767 = vsel %vm429, %v381, 0
        %v770 = vsel %vm429, %v382, 0
        %v773 = vsel %vm429, %v383, 0
        %v776 = vsel %vm429, %v384, 0
        %v779 = vsel %vm429, %v385, 0
        %v782 = vsel %vm429, %v386, 0
        %v785 = vsel %vm429, %v387, 0
        %v788 = vsel %vm429, %v388, 0
        %790 = vmatprep.subr.mxu0 0.0
        %791 = vmatpush1.xpose.msra.mxu0 %v743
        %792 = vmatprep.subr.mxu0 0.0
        %793 = vmatpush1.xpose.msra.mxu0 %v746
        %794 = vmatprep.subr.mxu0 0.0
        %795 = vmatpush1.xpose.msra.mxu0 %v749
        %796 = vmatprep.subr.mxu0 0.0
        %797 = vmatpush1.xpose.msra.mxu0 %v752
        %798 = vmatprep.subr.mxu0 0.0
        %799 = vmatpush1.xpose.msra.mxu0 %v755
        %800 = vmatprep.subr.mxu0 0.0
        %801 = vmatpush1.xpose.msra.mxu0 %v758
        %802 = vmatprep.subr.mxu0 0.0
        %803 = vmatpush1.xpose.msra.mxu0 %v761
        %804 = vmatprep.subr.mxu0 0.0
        %805 = vmatpush1.xpose.msra.mxu0 %v764
        %806 = vmatprep.subr.mxu0 0.0
        %807 = vmatpush1.xpose.msra.mxu0 %v767
        %808 = vmatprep.subr.mxu0 0.0
        %809 = vmatpush1.xpose.msra.mxu0 %v770
        %810 = vmatprep.subr.mxu0 0.0
        %811 = vmatpush1.xpose.msra.mxu0 %v773
        %812 = vmatprep.subr.mxu0 0.0
        %813 = vmatpush1.xpose.msra.mxu0 %v776
        %814 = vmatprep.subr.mxu0 0.0
        %815 = vmatpush1.xpose.msra.mxu0 %v779
        %816 = vmatprep.subr.mxu0 0.0
        %817 = vmatpush1.xpose.msra.mxu0 %v782
        %818 = vmatprep.subr.mxu0 0.0
        %819 = vmatpush1.xpose.msra.mxu0 %v785
        %820 = vmatprep.subr.mxu0 0.0
        %821 = vmatpush1.xpose.msra.mxu0 %v788
        %822 = vmatprep.subr.mxu0 0.0
        %823 = vmatpush1.xpose.msra.mxu0 0.0
        %824 = vmatprep.subr.mxu0 0.0
        %825 = vmatpush1.xpose.msra.mxu0 0.0
        %826 = vmatprep.subr.mxu0 0.0
        %827 = vmatpush1.xpose.msra.mxu0 0.0
        %828 = vmatprep.subr.mxu0 0.0
        %829 = vmatpush1.xpose.msra.mxu0 0.0
        %830 = vmatprep.subr.mxu0 0.0
        %831 = vmatpush1.xpose.msra.mxu0 0.0
        %832 = vmatprep.subr.mxu0 0.0
        %833 = vmatpush1.xpose.msra.mxu0 0.0
        %834 = vmatprep.subr.mxu0 0.0
        %835 = vmatpush1.xpose.msra.mxu0 0.0
        %836 = vmatprep.subr.mxu0 0.0
        %837 = vmatpush1.xpose.msra.mxu0 0.0
        %838 = vmatprep.subr.mxu0 0.0
        %839 = vmatpush1.xpose.msra.mxu0 0.0
        %840 = vmatprep.subr.mxu0 0.0
        %841 = vmatpush1.xpose.msra.mxu0 0.0
        %842 = vmatprep.subr.mxu0 0.0
        %843 = vmatpush1.xpose.msra.mxu0 0.0
        %844 = vmatprep.subr.mxu0 0.0
        %845 = vmatpush1.xpose.msra.mxu0 0.0
        %846 = vmatprep.subr.mxu0 0.0
        %847 = vmatpush1.xpose.msra.mxu0 0.0
        %848 = vmatprep.subr.mxu0 0.0
        %849 = vmatpush1.xpose.msra.mxu0 0.0
        %850 = vmatprep.subr.mxu0 0.0
        %851 = vmatpush1.xpose.msra.mxu0 0.0
        %852 = vmatprep.subr.mxu0 0.0
        %853 = vmatpush1.xpose.msra.mxu0 0.0
        %854 = vmatprep.mubr.f32.mxu0 0.0
        %855 = vmatmul.mubr.f32.gmra.mrb[0].mxu0 %v740
        %v856 = vpop.f32.mrb[0].mxu0
        %v857 = vadd.f32 0.0, %v856
        %v858 = vpop.f32.mrb[0].mxu0
        %859 = vdwg.mxu0
        %860 = vst [vmem:[%s365] sm:$0x3] %v857
        %v861 = vld [vmem:[%s4] sm:$0xff]
        %v862 = vld [vmem:[%s4 + $0x8] sm:$0xff]
        %v863 = vld [vmem:[%s4 + $0x10] sm:$0xff]
        %v864 = vld [vmem:[%s4 + $0x18] sm:$0xff]
        %v865 = vld [vmem:[%s4 + $0x20] sm:$0xff]
        %v866 = vld [vmem:[%s4 + $0x28] sm:$0xff]
        %v867 = vld [vmem:[%s4 + $0x30] sm:$0xff]
        %v868 = vld [vmem:[%s4 + $0x38] sm:$0xff]
        %869 = vmatprep.subr.mxu0 0.0
        %870 = vmatpush1.msra.mxu0 %v861
        %871 = vmatprep.subr.mxu0 0.0
        %872 = vmatpush1.msra.mxu0 %v862
        %873 = vmatprep.subr.mxu0 0.0
        %874 = vmatpush1.msra.mxu0 %v863
        %875 = vmatprep.subr.mxu0 0.0
        %876 = vmatpush1.msra.mxu0 %v864
        %877 = vmatprep.subr.mxu0 0.0
        %878 = vmatpush1.msra.mxu0 %v865
        %879 = vmatprep.subr.mxu0 0.0
        %880 = vmatpush1.msra.mxu0 %v866
        %881 = vmatprep.subr.mxu0 0.0
        %882 = vmatpush1.msra.mxu0 %v867
        %883 = vmatprep.subr.mxu0 0.0
        %884 = vmatpush1.msra.mxu0 %v868
        %885 = vmatprep.subr.mxu0 0.0
        %886 = vmatpush1.msra.mxu0 0.0
        %887 = vmatprep.subr.mxu0 0.0
        %888 = vmatpush1.msra.mxu0 0.0
        %889 = vmatprep.subr.mxu0 0.0
        %890 = vmatpush1.msra.mxu0 0.0
        %891 = vmatprep.subr.mxu0 0.0
        %892 = vmatpush1.msra.mxu0 0.0
        %893 = vmatprep.subr.mxu0 0.0
        %894 = vmatpush1.msra.mxu0 0.0
        %895 = vmatprep.subr.mxu0 0.0
        %896 = vmatpush1.msra.mxu0 0.0
        %897 = vmatprep.subr.mxu0 0.0
        %898 = vmatpush1.msra.mxu0 0.0
        %899 = vmatprep.subr.mxu0 0.0
        %900 = vmatpush1.msra.mxu0 0.0
        %901 = vmatprep.subr.mxu0 0.0
        %902 = vmatpush1.msra.mxu0 0.0
        %903 = vmatprep.subr.mxu0 0.0
        %904 = vmatpush1.msra.mxu0 0.0
        %905 = vmatprep.subr.mxu0 0.0
        %906 = vmatpush1.msra.mxu0 0.0
        %907 = vmatprep.subr.mxu0 0.0
        %908 = vmatpush1.msra.mxu0 0.0
        %909 = vmatprep.subr.mxu0 0.0
        %910 = vmatpush1.msra.mxu0 0.0
        %911 = vmatprep.subr.mxu0 0.0
        %912 = vmatpush1.msra.mxu0 0.0
        %913 = vmatprep.subr.mxu0 0.0
        %914 = vmatpush1.msra.mxu0 0.0
        %915 = vmatprep.subr.mxu0 0.0
        %916 = vmatpush1.msra.mxu0 0.0
        %917 = vmatprep.subr.mxu0 0.0
        %918 = vmatpush1.msra.mxu0 0.0
        %919 = vmatprep.subr.mxu0 0.0
        %920 = vmatpush1.msra.mxu0 0.0
        %921 = vmatprep.subr.mxu0 0.0
        %922 = vmatpush1.msra.mxu0 0.0
        %923 = vmatprep.subr.mxu0 0.0
        %924 = vmatpush1.msra.mxu0 0.0
        %925 = vmatprep.subr.mxu0 0.0
        %926 = vmatpush1.msra.mxu0 0.0
        %927 = vmatprep.subr.mxu0 0.0
        %928 = vmatpush1.msra.mxu0 0.0
        %929 = vmatprep.subr.mxu0 0.0
        %930 = vmatpush1.msra.mxu0 0.0
        %931 = vmatprep.subr.mxu0 0.0
        %932 = vmatpush1.msra.mxu0 0.0
        %933 = vmatprep.mubr.f32.mxu0 0.0
        %934 = vmatmul.mubr.f32.gmra.mrb[0].mxu0 %v743
        %v935 = vpop.f32.mrb[0].mxu0
        %v936 = vadd.f32 0.0, %v935
        %v937 = vpop.f32.mrb[0].mxu0
        %938 = vmatprep.mubr.f32.mxu0 0.0
        %939 = vmatmul.mubr.f32.gmra.mrb[0].mxu0 %v746
        %v940 = vpop.f32.mrb[0].mxu0
        %v941 = vadd.f32 0.0, %v940
        %v942 = vpop.f32.mrb[0].mxu0
        %943 = vmatprep.mubr.f32.mxu0 0.0
        %944 = vmatmul.mubr.f32.gmra.mrb[0].mxu0 %v749
        %v945 = vpop.f32.mrb[0].mxu0
        %v946 = vadd.f32 0.0, %v945
        %v947 = vpop.f32.mrb[0].mxu0
        %948 = vmatprep.mubr.f32.mxu0 0.0
        %949 = vmatmul.mubr.f32.gmra.mrb[0].mxu0 %v752
        %v950 = vpop.f32.mrb[0].mxu0
        %v951 = vadd.f32 0.0, %v950
        %v952 = vpop.f32.mrb[0].mxu0
        %953 = vmatprep.mubr.f32.mxu0 0.0
        %954 = vmatmul.mubr.f32.gmra.mrb[0].mxu0 %v755
        %v955 = vpop.f32.mrb[0].mxu0
        %v956 = vadd.f32 0.0, %v955
        %v957 = vpop.f32.mrb[0].mxu0
        %958 = vmatprep.mubr.f32.mxu0 0.0
        %959 = vmatmul.mubr.f32.gmra.mrb[0].mxu0 %v758
        %v960 = vpop.f32.mrb[0].mxu0
        %v961 = vadd.f32 0.0, %v960
        %v962 = vpop.f32.mrb[0].mxu0
        %963 = vmatprep.mubr.f32.mxu0 0.0
        %964 = vmatmul.mubr.f32.gmra.mrb[0].mxu0 %v761
        %v965 = vpop.f32.mrb[0].mxu0
        %v966 = vadd.f32 0.0, %v965
        %v967 = vpop.f32.mrb[0].mxu0
        %968 = vmatprep.mubr.f32.mxu0 0.0
        %969 = vmatmul.mubr.f32.gmra.mrb[0].mxu0 %v764
        %v970 = vpop.f32.mrb[0].mxu0
        %v971 = vadd.f32 0.0, %v970
        %v972 = vpop.f32.mrb[0].mxu0
        %973 = vmatprep.mubr.f32.mxu0 0.0
        %974 = vmatmul.mubr.f32.gmra.mrb[0].mxu0 %v767
        %v975 = vpop.f32.mrb[0].mxu0
        %v976 = vadd.f32 0.0, %v975
        %v977 = vpop.f32.mrb[0].mxu0
        %978 = vmatprep.mubr.f32.mxu0 0.0
        %979 = vmatmul.mubr.f32.gmra.mrb[0].mxu0 %v770
        %v980 = vpop.f32.mrb[0].mxu0
        %v981 = vadd.f32 0.0, %v980
        %v982 = vpop.f32.mrb[0].mxu0
        %983 = vmatprep.mubr.f32.mxu0 0.0
        %984 = vmatmul.mubr.f32.gmra.mrb[0].mxu0 %v773
        %v985 = vpop.f32.mrb[0].mxu0
        %v986 = vadd.f32 0.0, %v985
        %v987 = vpop.f32.mrb[0].mxu0
        %988 = vmatprep.mubr.f32.mxu0 0.0
        %989 = vmatmul.mubr.f32.gmra.mrb[0].mxu0 %v776
        %v990 = vpop.f32.mrb[0].mxu0
        %v991 = vadd.f32 0.0, %v990
        %v992 = vpop.f32.mrb[0].mxu0
        %993 = vmatprep.mubr.f32.mxu0 0.0
        %994 = vmatmul.mubr.f32.gmra.mrb[0].mxu0 %v779
        %v995 = vpop.f32.mrb[0].mxu0
        %v996 = vadd.f32 0.0, %v995
        %v997 = vpop.f32.mrb[0].mxu0
        %998 = vmatprep.mubr.f32.mxu0 0.0
        %999 = vmatmul.mubr.f32.gmra.mrb[0].mxu0 %v782
        %v1000 = vpop.f32.mrb[0].mxu0
        %v1001 = vadd.f32 0.0, %v1000
        %v1002 = vpop.f32.mrb[0].mxu0
        %1003 = vmatprep.mubr.f32.mxu0 0.0
        %1004 = vmatmul.mubr.f32.gmra.mrb[0].mxu0 %v785
        %v1005 = vpop.f32.mrb[0].mxu0
        %v1006 = vadd.f32 0.0, %v1005
        %v1007 = vpop.f32.mrb[0].mxu0
        %1008 = vmatprep.mubr.f32.mxu0 0.0
        %1009 = vmatmul.mubr.f32.gmra.mrb[0].mxu0 %v788
        %v1010 = vpop.f32.mrb[0].mxu0
        %v1011 = vadd.f32 0.0, %v1010
        %v1012 = vpop.f32.mrb[0].mxu0
        %1013 = vdwg.mxu0
        %vm1014 = vcmask 15360
        %1015 = vst.msk [vmem:[%s370] sm:$0xff] %vm1014, %v936
        %1016 = vst.msk [vmem:[%s370 + $0x8] sm:$0xff] %vm1014, %v941
        %1017 = vst.msk [vmem:[%s370 + $0x10] sm:$0xff] %vm1014, %v946
        %1018 = vst.msk [vmem:[%s370 + $0x18] sm:$0xff] %vm1014, %v951
        %1019 = vst.msk [vmem:[%s370 + $0x20] sm:$0xff] %vm1014, %v956
        %1020 = vst.msk [vmem:[%s370 + $0x28] sm:$0xff] %vm1014, %v961
        %1021 = vst.msk [vmem:[%s370 + $0x30] sm:$0xff] %vm1014, %v966
        %1022 = vst.msk [vmem:[%s370 + $0x38] sm:$0xff] %vm1014, %v971
        %1023 = vst.msk [vmem:[%s370 + $0x40] sm:$0xff] %vm1014, %v976
        %1024 = vst.msk [vmem:[%s370 + $0x48] sm:$0xff] %vm1014, %v981
        %1025 = vst.msk [vmem:[%s370 + $0x50] sm:$0xff] %vm1014, %v986
        %1026 = vst.msk [vmem:[%s370 + $0x58] sm:$0xff] %vm1014, %v991
        %1027 = vst.msk [vmem:[%s370 + $0x60] sm:$0xff] %vm1014, %v996
        %1028 = vst.msk [vmem:[%s370 + $0x68] sm:$0xff] %vm1014, %v1001
        %1029 = vst.msk [vmem:[%s370 + $0x70] sm:$0xff] %vm1014, %v1006
        %1030 = vst.msk [vmem:[%s370 + $0x78] sm:$0xff] %vm1014, %v1011
        %s1031 = smul.u32 16, %s22
        %p1032 = scmp.lt.s32.totalorder %s1031, 31
        %s1033 = scalar_select %p1032, %s1031, 31
        %s1034 = smul.addr %s1033, 4
        %s1035 = scalar_lea.vmem %s5, %s1034
        %s1036 = smul.u32 16, %s22
        %p1037 = scmp.lt.s32.totalorder %s1036, 31
        %s1038 = scalar_select %p1037, %s1036, 31
        %s1039 = smul.addr %s1038, 8
        %s1040 = scalar_lea.vmem %s6, %s1039
        %p1041 = scmp.lt.s32.totalorder %s22, 1
        %s1042 = scalar_select %p1041, %s22, 1
        %s1043 = smul.addr %s1042, 2
        %s1044 = scalar_lea.vmem %s7, %s1043
        %s1045 = smul.u32 16, %s22
        %p1046 = scmp.lt.s32.totalorder %s1045, 31
        %s1047 = scalar_select %p1046, %s1045, 31
        %s1048 = smul.addr %s1047, 8
        %s1049 = scalar_lea.vmem %s8, %s1048
        // Predicated region
        $region49: #{gat_conv.2} parent=39 // pred_check
          %p1050 = pneg %p150
        $region50: #{gat_conv.2} parent=39 // pred_check_branch
          %1052 = sbr.rel (%p1050) target = $region52
        $region51: #{gat_conv.2} parent=39 // pred_region
          %s1053 = smul.u32 16, %s22
        $region52: #{gat_conv.2} parent=39 // pred_fallthru
          _
        // Predicated region
        $region53: #{gat_conv.2} parent=39 // pred_check
          %p1054 = pneg %p176
        $region54: #{gat_conv.2} parent=39 // pred_check_branch
          %1056 = sbr.rel (%p1054) target = $region56
        $region55: #{gat_conv.2} parent=39 // pred_region
          %s1057 = smul.u32 16, %s22
        $region56: #{gat_conv.2} parent=39 // pred_fallthru
          _
        // Predicated region
        $region57: #{gat_conv.2} parent=39 // pred_check
          %p1058 = pneg %p202
        $region58: #{gat_conv.2} parent=39 // pred_check_branch
          %1060 = sbr.rel (%p1058) target = $region60
        $region59: #{gat_conv.2} parent=39 // pred_region
          _
        $region60: #{gat_conv.2} parent=39 // pred_fallthru
          _
        // Predicated region
        $region61: #{gat_conv.2} parent=39 // pred_check
          %p1061 = pneg %p228
        $region62: #{gat_conv.2} parent=39 // pred_check_branch
          %1063 = sbr.rel (%p1061) target = $region64
        $region63: #{gat_conv.2} parent=39 // pred_region
          %s1064 = smul.u32 16, %s22
        $region64: #{gat_conv.2} parent=39 // pred_fallthru
          _
      $region40: #{gat_conv.2} parent=5 // pred_fallthru
        _
      %p1065 = scmp.le.s32.totalorder 2, %s17
      // Predicated region
      $region65: #{gat_conv.2} parent=5 // pred_check
        %p1066 = pneg %p1065
      $region66: #{gat_conv.2} parent=5 // pred_check_branch
        %1068 = sbr.rel (%p1066) target = $region68
      $region67: #{gat_conv.2} parent=5 // pred_region
        %s1069 = ssub.s32 %s17, 2
        // Predicated region
        $region69: #{gat_conv.2} parent=67 // pred_check
          %p1070 = pneg %p156
        $region70: #{gat_conv.2} parent=67 // pred_check_branch
          %1072 = sbr.rel (%p1070) target = $region72
        $region71: #{gat_conv.2} parent=67 // pred_region
          %s1073 = smul.u32 16, %s23
          %p1074 = scmp.lt.s32.totalorder %s1073, 31
          %s1075 = scalar_select %p1074, %s1073, 31
          %s1076 = smul.addr %s1075, 4
          %s1077 = scalar_lea.vmem %s5, %s1076
        $region72: #{gat_conv.2} parent=67 // pred_fallthru
          _
        // Predicated region
        $region73: #{gat_conv.2} parent=67 // pred_check
          %p1078 = pneg %p182
        $region74: #{gat_conv.2} parent=67 // pred_check_branch
          %1080 = sbr.rel (%p1078) target = $region76
        $region75: #{gat_conv.2} parent=67 // pred_region
          %s1081 = smul.u32 16, %s23
          %p1082 = scmp.lt.s32.totalorder %s1081, 31
          %s1083 = scalar_select %p1082, %s1081, 31
          %s1084 = smul.addr %s1083, 8
          %s1085 = scalar_lea.vmem %s6, %s1084
        $region76: #{gat_conv.2} parent=67 // pred_fallthru
          _
        // Predicated region
        $region77: #{gat_conv.2} parent=67 // pred_check
          %p1086 = pneg %p208
        $region78: #{gat_conv.2} parent=67 // pred_check_branch
          %1088 = sbr.rel (%p1086) target = $region80
        $region79: #{gat_conv.2} parent=67 // pred_region
          %p1089 = scmp.lt.s32.totalorder %s23, 1
          %s1090 = scalar_select %p1089, %s23, 1
          %s1091 = smul.addr %s1090, 2
          %s1092 = scalar_lea.vmem %s7, %s1091
        $region80: #{gat_conv.2} parent=67 // pred_fallthru
          _
        // Predicated region
        $region81: #{gat_conv.2} parent=67 // pred_check
          %p1093 = pneg %p234
        $region82: #{gat_conv.2} parent=67 // pred_check_branch
          %1095 = sbr.rel (%p1093) target = $region84
        $region83: #{gat_conv.2} parent=67 // pred_region
          %s1096 = smul.u32 16, %s23
          %p1097 = scmp.lt.s32.totalorder %s1096, 31
          %s1098 = scalar_select %p1097, %s1096, 31
          %s1099 = smul.addr %s1098, 8
          %s1100 = scalar_lea.vmem %s8, %s1099
        $region84: #{gat_conv.2} parent=67 // pred_fallthru
          _
      $region68: #{gat_conv.2} parent=5 // pred_fallthru
        _
    $region6: #{gat_conv.2} parent=1 // loop_footer
      %s21 = sadd.s32 1, %s17
    $region7: #{gat_conv.2} parent=1 // loop_footer_branch
      %16 = sbr.rel target = $region3
    $region8: #{gat_conv.2} parent=1 // loop_exit
      _
    %1101 = vsyncpa [#allocation3], 1
    %s1102 = scalar_lea.sflag [#allocation3], 1
    %1103 = vsyncpa %s1102, 1
    %1104 = vsyncpa [#allocation5], 1

// kernel: gat_conv.3
$region0: #{gat_conv.3}
  #allocation0 [shape = 'u32[]', space=smem, size = 0x4, offset = 0x4, fixed_abs, tag = 'smem constant byte address 0x4 - core index']
  #allocation1 [shape = 'u32[144,128]{1,0:T(1,128)}', space=vmem, size = 0x12000, scoped, tag = 'internal scratch']
  #allocation2 [shape = 'f32[2,128,1]{2,1,0:T(8,128)}', space=vmem, size = 0x20000, scoped, tag = 'scratch operand']
  #allocation3 [shape = 'f32[2,128,1]{2,1,0:T(8,128)}', space=vmem, size = 0x20000, scoped, tag = 'scratch operand']
  #allocation4 [shape = 'f32[128,32]{1,0:T(8,128)}', space=vmem, size = 0x10000, scoped, tag = 'scratch operand']
  #allocation11 [shape = 's32[]', space=sflag, size = 0x4, offset = 0, fixed_abs, tag = 'sflag constant byte address 0x0 - dummy sync flag']
  %s0 = inlined_call_operand.vmem [shape: f32[8,2], index: 0, kind: input, shape index: {}]
  %s1 = inlined_call_operand.hbm [shape: f32[256,256], index: 1, kind: input, shape index: {}]
  %s2 = inlined_call_operand.hbm [shape: f32[8,256,256], index: 2, kind: input, shape index: {}]
  %s3 = inlined_call_operand.vmem [shape: f32[2,256], index: 3, kind: input, shape index: {}]
  %s4 = inlined_call_operand.vmem [shape: f32[256,2], index: 4, kind: input, shape index: {}]
  %s5 = inlined_call_operand.vmem [shape: bf16[256,32], index: 5, kind: input, shape index: {}]
  %s6 = inlined_call_operand.vmem [shape: f32[256,32], index: 6, kind: input, shape index: {}]
  %s7 = inlined_call_operand.vmem [shape: f32[256,32], index: 7, kind: output, shape index: {}]
  %s8 = sld [smem:[#allocation0]]
  $region81: #{gat_conv.3} parent=0
    _
  %s10 = ssub.s32 1, %s8
  %s11 = scalar_select 0, %s10, %s8
  $region1: #{gat_conv.3} parent=0
    #allocation5 [shape = 'u8[4096]{0}', space=smem, size = 0x1000, scoped, tag = 'input window, operand 0, single buffered']
    #allocation6 [shape = 's32[2]{0}', space=sflag, size = 0x8, scoped, tag = 'scoped memory for gat_conv.3']
    #allocation7 [shape = 's32[2]{0}', space=sflag, size = 0x8, scoped, tag = 'scoped memory for gat_conv.3']
    #allocation8 [shape = 'u8[131072]{0}', space=vmem, size = 0x20000, scoped, tag = 'input window, operand 1']
    #allocation9 [shape = 'u8[1048576]{0}', space=vmem, size = 0x100000, scoped, tag = 'input window, operand 2']
    #allocation10 [shape = 's32[2]{0}', space=sflag, size = 0x8, scoped, tag = 'scoped memory for gat_conv.3']
    %12 = vsyncpa [#allocation7], 0
    %13 = vsyncpa [#allocation6], 0
    %s14 = scalar_lea.sflag [#allocation6], 1
    %15 = vsyncpa %s14, 0
    %16 = vsyncpa [#allocation10], 0
    %s17 = scalar_lea.sflag [#allocation10], 1
    %18 = vsyncpa %s17, 0
    loop: start=0, step=1, limit=6
    $region2: #{gat_conv.3} parent=1 // loop_pre_header
      _
    $region3: #{gat_conv.3} parent=1 // loop_header
      %s20 = sphi 0, %s24
      %p21 = scmp.ge.s32.totalorder %s20, 6
      %s27 = sphi 0, %s39
      %s28 = sphi 0, %s35
      %s29 = sphi 0, %s27
      %s30 = sphi 0, %s28
      %s31 = sphi 0, %s29
      %s32 = sphi 0, %s30
      %s40 = sphi 0, %s40
      %s42 = sphi 0, %s40
      %s43 = sphi 0, %s42
      %s57 = sphi 0, %s43
      %s65 = sphi 0, %s67
      %s68 = sphi 0, %s65
      %s69 = sphi 0, %s68
      %s85 = sphi 0, %s69
      %s93 = sphi 0, %s95
      %s96 = sphi 0, %s93
      %s97 = sphi 0, %s96
      %s113 = sphi 0, %s97
      %s119 = sphi 0, %s121
      %s122 = sphi 0, %s119
      %s123 = sphi 0, %s122
      %s139 = sphi 0, %s123
      %s145 = sphi 0, %s147
      %s148 = sphi 0, %s145
      %s149 = sphi 0, %s148
      %s165 = sphi 0, %s149
      %s171 = sphi 0, %s173
      %s174 = sphi 0, %s171
      %s175 = sphi 0, %s174
      %s191 = sphi 0, %s175
      %s197 = sphi 0, %s199
      %s200 = sphi 0, %s197
      %s201 = sphi 0, %s200
      %s217 = sphi 0, %s201
      %s223 = sphi 0, %s225
      %s226 = sphi 0, %s223
      %s227 = sphi 0, %s226
      %s243 = sphi 0, %s227
    $region4: #{gat_conv.3} parent=1 // loop_header_branch
      %23 = sbr.rel (%p21) target = $region8
    $region5: #{gat_conv.3} parent=1 // loop_body
      %s25 = ssub.s32 %s20, 1
      %s26 = ssub.s32 %s20, 2
      %s33 = sadd.s32 1, %s28
      %p34 = scmp.ge.s32.totalorder %s33, 2
      %s35 = scalar_select %p34, 0, %s33
      %s36 = sadd.s32 1, %s27
      %s37 = scalar_select %p34, %s36, %s27
      %p38 = scmp.ge.s32.totalorder %s37, 2
      %s39 = scalar_select %p38, 0, %s37
      %s41 = sadd.s32 %s40, 1
      %p44 = scmp.eq.s32.totalorder %s20, 3
      %p45 = scmp.ne.s32.totalorder %s40, %s42
      %p46 = scmp.eq.s32.totalorder %s20, 0
      %p47 = por %p45, %p46
      %p48 = scmp.ne.s32.totalorder %s40, %s42
      %p49 = scmp.eq.s32.totalorder %s25, 3
      %p50 = por %p48, %p49
      %p51 = scmp.ne.s32.totalorder %s42, %s43
      %p52 = scmp.eq.s32.totalorder %s25, 0
      %p53 = por %p51, %p52
      %p54 = scmp.ne.s32.totalorder %s42, %s43
      %p55 = scmp.eq.s32.totalorder %s26, 3
      %p56 = por %p54, %p55
      %p58 = scmp.ne.s32.totalorder %s43, %s57
      %p59 = scmp.eq.s32.totalorder %s26, 0
      %p60 = por %p58, %p59
      %s61 = ssub.s32 %s27, %s39
      %s62 = ssub.s32 %s28, %s35
      %s63 = sor.u32 %s61, %s62
      %p64 = scmp.eq.s32.totalorder %s63, 0
      %s66 = sadd.s32 %s65, 1
      %s67 = scalar_select %p64, %s65, %s66
      %p70 = pneg %p64
      %p71 = scmp.eq.s32.totalorder %s20, 3
      %p72 = por %p70, %p71
      %p73 = scmp.ne.s32.totalorder %s65, %s68
      %p74 = scmp.eq.s32.totalorder %s20, 0
      %p75 = por %p73, %p74
      %p76 = scmp.ne.s32.totalorder %s65, %s68
      %p77 = scmp.eq.s32.totalorder %s25, 3
      %p78 = por %p76, %p77
      %p79 = scmp.ne.s32.totalorder %s68, %s69
      %p80 = scmp.eq.s32.totalorder %s25, 0
      %p81 = por %p79, %p80
      %p82 = scmp.ne.s32.totalorder %s68, %s69
      %p83 = scmp.eq.s32.totalorder %s26, 3
      %p84 = por %p82, %p83
      %p86 = scmp.ne.s32.totalorder %s69, %s85
      %p87 = scmp.eq.s32.totalorder %s26, 0
      %p88 = por %p86, %p87
      %s89 = ssub.s32 %s27, %s39
      %s90 = ssub.s32 %s28, %s35
      %s91 = sor.u32 %s89, %s90
      %p92 = scmp.eq.s32.totalorder %s91, 0
      %s94 = sadd.s32 %s93, 1
      %s95 = scalar_select %p92, %s93, %s94
      %p98 = pneg %p92
      %p99 = scmp.eq.s32.totalorder %s20, 3
      %p100 = por %p98, %p99
      %p101 = scmp.ne.s32.totalorder %s93, %s96
      %p102 = scmp.eq.s32.totalorder %s20, 0
      %p103 = por %p101, %p102
      %p104 = scmp.ne.s32.totalorder %s93, %s96
      %p105 = scmp.eq.s32.totalorder %s25, 3
      %p106 = por %p104, %p105
      %p107 = scmp.ne.s32.totalorder %s96, %s97
      %p108 = scmp.eq.s32.totalorder %s25, 0
      %p109 = por %p107, %p108
      %p110 = scmp.ne.s32.totalorder %s96, %s97
      %p111 = scmp.eq.s32.totalorder %s26, 3
      %p112 = por %p110, %p111
      %p114 = scmp.ne.s32.totalorder %s97, %s113
      %p115 = scmp.eq.s32.totalorder %s26, 0
      %p116 = por %p114, %p115
      %s117 = ssub.s32 %s28, %s35
      %p118 = scmp.eq.s32.totalorder %s117, 0
      %s120 = sadd.s32 %s119, 1
      %s121 = scalar_select %p118, %s119, %s120
      %p124 = pneg %p118
      %p125 = scmp.eq.s32.totalorder %s20, 3
      %p126 = por %p124, %p125
      %p127 = scmp.ne.s32.totalorder %s119, %s122
      %p128 = scmp.eq.s32.totalorder %s20, 0
      %p129 = por %p127, %p128
      %p130 = scmp.ne.s32.totalorder %s119, %s122
      %p131 = scmp.eq.s32.totalorder %s25, 3
      %p132 = por %p130, %p131
      %p133 = scmp.ne.s32.totalorder %s122, %s123
      %p134 = scmp.eq.s32.totalorder %s25, 0
      %p135 = por %p133, %p134
      %p136 = scmp.ne.s32.totalorder %s122, %s123
      %p137 = scmp.eq.s32.totalorder %s26, 3
      %p138 = por %p136, %p137
      %p140 = scmp.ne.s32.totalorder %s123, %s139
      %p141 = scmp.eq.s32.totalorder %s26, 0
      %p142 = por %p140, %p141
      %s143 = ssub.s32 %s27, %s39
      %p144 = scmp.eq.s32.totalorder %s143, 0
      %s146 = sadd.s32 %s145, 1
      %s147 = scalar_select %p144, %s145, %s146
      %p150 = pneg %p144
      %p151 = scmp.eq.s32.totalorder %s20, 3
      %p152 = por %p150, %p151
      %p153 = scmp.ne.s32.totalorder %s145, %s148
      %p154 = scmp.eq.s32.totalorder %s20, 0
      %p155 = por %p153, %p154
      %p156 = scmp.ne.s32.totalorder %s145, %s148
      %p157 = scmp.eq.s32.totalorder %s25, 3
      %p158 = por %p156, %p157
      %p159 = scmp.ne.s32.totalorder %s148, %s149
      %p160 = scmp.eq.s32.totalorder %s25, 0
      %p161 = por %p159, %p160
      %p162 = scmp.ne.s32.totalorder %s148, %s149
      %p163 = scmp.eq.s32.totalorder %s26, 3
      %p164 = por %p162, %p163
      %p166 = scmp.ne.s32.totalorder %s149, %s165
      %p167 = scmp.eq.s32.totalorder %s26, 0
      %p168 = por %p166, %p167
      %s169 = ssub.s32 %s28, %s35
      %p170 = scmp.eq.s32.totalorder %s169, 0
      %s172 = sadd.s32 %s171, 1
      %s173 = scalar_select %p170, %s171, %s172
      %p176 = pneg %p170
      %p177 = scmp.eq.s32.totalorder %s20, 3
      %p178 = por %p176, %p177
      %p179 = scmp.ne.s32.totalorder %s171, %s174
      %p180 = scmp.eq.s32.totalorder %s20, 0
      %p181 = por %p179, %p180
      %p182 = scmp.ne.s32.totalorder %s171, %s174
      %p183 = scmp.eq.s32.totalorder %s25, 3
      %p184 = por %p182, %p183
      %p185 = scmp.ne.s32.totalorder %s174, %s175
      %p186 = scmp.eq.s32.totalorder %s25, 0
      %p187 = por %p185, %p186
      %p188 = scmp.ne.s32.totalorder %s174, %s175
      %p189 = scmp.eq.s32.totalorder %s26, 3
      %p190 = por %p188, %p189
      %p192 = scmp.ne.s32.totalorder %s175, %s191
      %p193 = scmp.eq.s32.totalorder %s26, 0
      %p194 = por %p192, %p193
      %s195 = ssub.s32 %s27, %s39
      %p196 = scmp.eq.s32.totalorder %s195, 0
      %s198 = sadd.s32 %s197, 1
      %s199 = scalar_select %p196, %s197, %s198
      %p202 = pneg %p196
      %p203 = scmp.eq.s32.totalorder %s20, 3
      %p204 = por %p202, %p203
      %p205 = scmp.ne.s32.totalorder %s197, %s200
      %p206 = scmp.eq.s32.totalorder %s20, 0
      %p207 = por %p205, %p206
      %p208 = scmp.ne.s32.totalorder %s197, %s200
      %p209 = scmp.eq.s32.totalorder %s25, 3
      %p210 = por %p208, %p209
      %p211 = scmp.ne.s32.totalorder %s200, %s201
      %p212 = scmp.eq.s32.totalorder %s25, 0
      %p213 = por %p211, %p212
      %p214 = scmp.ne.s32.totalorder %s200, %s201
      %p215 = scmp.eq.s32.totalorder %s26, 3
      %p216 = por %p214, %p215
      %p218 = scmp.ne.s32.totalorder %s201, %s217
      %p219 = scmp.eq.s32.totalorder %s26, 0
      %p220 = por %p218, %p219
      %s221 = ssub.s32 %s27, %s39
      %p222 = scmp.eq.s32.totalorder %s221, 0
      %s224 = sadd.s32 %s223, 1
      %s225 = scalar_select %p222, %s223, %s224
      %p228 = pneg %p222
      %p229 = scmp.eq.s32.totalorder %s20, 3
      %p230 = por %p228, %p229
      %p231 = scmp.ne.s32.totalorder %s223, %s226
      %p232 = scmp.eq.s32.totalorder %s20, 0
      %p233 = por %p231, %p232
      %p234 = scmp.ne.s32.totalorder %s223, %s226
      %p235 = scmp.eq.s32.totalorder %s25, 3
      %p236 = por %p234, %p235
      %p237 = scmp.ne.s32.totalorder %s226, %s227
      %p238 = scmp.eq.s32.totalorder %s25, 0
      %p239 = por %p237, %p238
      %p240 = scmp.ne.s32.totalorder %s226, %s227
      %p241 = scmp.eq.s32.totalorder %s26, 3
      %p242 = por %p240, %p241
      %p244 = scmp.ne.s32.totalorder %s227, %s243
      %p245 = scmp.eq.s32.totalorder %s26, 0
      %p246 = por %p244, %p245
      %p247 = scmp.le.s32.totalorder 1, %s20
      %p248 = scmp.lt.s32.totalorder %s20, 5
      %p249 = pnand %p247, %p248
      %p250 = pneg %p249
      // Predicated region
      $region9: #{gat_conv.3} parent=5 // pred_check
        _
      $region10: #{gat_conv.3} parent=5 // pred_check_branch
        %252 = sbr.rel (%p249) target = $region12
      $region11: #{gat_conv.3} parent=5 // pred_region
        %s253 = ssub.s32 %s20, 1
        // Predicated region
        $region13: #{gat_conv.3} parent=11 // pred_check
          %p254 = pneg %p53
        $region14: #{gat_conv.3} parent=11 // pred_check_branch
          %256 = sbr.rel (%p254) target = $region16
        $region15: #{gat_conv.3} parent=11 // pred_region
          %s258 = ssub.s32 128, 128
          %259 = vsyncadd [#allocation7], %s258
          %s261 = sshll.u32 %s0, 4
          %s262 = int_to_ptr.vmem [resolvable:$true] %s261
          %264 = dma.vmem_to_smem %s262, 128, [#allocation5], [#allocation7]
        $region16: #{gat_conv.3} parent=11 // pred_fallthru
          _
      $region12: #{gat_conv.3} parent=5 // pred_fallthru
        _
      %p265 = scmp.lt.s32.totalorder %s20, 4
      // Predicated region
      $region17: #{gat_conv.3} parent=5 // pred_check
        %p266 = pneg %p265
      $region18: #{gat_conv.3} parent=5 // pred_check_branch
        %268 = sbr.rel (%p266) target = $region20
      $region19: #{gat_conv.3} parent=5 // pred_region
        // Predicated region
        $region21: #{gat_conv.3} parent=19 // pred_check
          %p269 = pneg %p75
        $region22: #{gat_conv.3} parent=19 // pred_check_branch
          %271 = sbr.rel (%p269) target = $region24
        $region23: #{gat_conv.3} parent=19 // pred_region
          %s272 = sand.u32 %s65, 1
          %s273 = scalar_lea.sflag [#allocation6], %s272
          %s274 = sand.u32 %s65, 1
          %s275 = smul.addr %s274, 128
          %s276 = scalar_lea.vmem [#allocation8], %s275
          %s277 = smul.u32 16, %s27
          %s279 = ssub.s32 2048, 2048
          %280 = vsyncadd %s273, %s279
          %s281 = smul.addr %s277, 2
          %s282 = sadd.s32 %s28, %s281
          %s283 = smul.addr %s282, 128
          %s284 = scalar_lea.hbm %s1, %s283
          %s285 = sshll.u32 %s276, 4
          %s286 = int_to_ptr.vmem [resolvable:$true] %s285
          %291 = dma.hbm_to_vmem [thread:$0]  %s284, 2048, %s286, %s273, 256, 128, 8
        $region24: #{gat_conv.3} parent=19 // pred_fallthru
          _
        // Predicated region
        $region25: #{gat_conv.3} parent=19 // pred_check
          %p292 = pneg %p103
        $region26: #{gat_conv.3} parent=19 // pred_check_branch
          %294 = sbr.rel (%p292) target = $region28
        $region27: #{gat_conv.3} parent=19 // pred_region
          #allocation12 [shape = 'u32[6]{0}', space=smem, size = 0x18, scoped, tag = 'DMA stride descriptor']
          %s295 = sand.u32 %s93, 1
          %s296 = scalar_lea.sflag [#allocation10], %s295
          %s297 = sand.u32 %s93, 1
          %s298 = smul.addr %s297, 1024
          %s299 = scalar_lea.vmem [#allocation9], %s298
          %s300 = smul.u32 16, %s27
          %s302 = ssub.s32 16384, 16384
          %303 = vsyncadd %s296, %s302
          %s304 = smul.addr %s300, 2
          %s305 = sadd.s32 %s28, %s304
          %s306 = smul.addr %s305, 128
          %s307 = scalar_lea.hbm %s2, %s306
          %s309 = sshll.u32 1, 14
          %s310 = sxor.u32 4294967295, %s309
          %s312 = sld [smem:[#allocation0]]
          %s313 = sadd.s32 2, %s312
          %s315 = sshll.u32 7, 26
          %s316 = sxor.u32 4294967295, %s315
          %s317 = sand.u32 0, %s316
          %s318 = sshll.u32 %s313, 26
          %s319 = sor.u32 %s317, %s318
          %s320 = sshll.u32 %s299, 4
          %s321 = int_to_ptr.vmem [resolvable:$true] %s320
          %327 = sst [smem:[#allocation12]] 8192
          %s328 = scalar_lea.smem [#allocation12], 1
          %329 = sst [smem:[%s328]] 2048
          %s330 = scalar_lea.smem [#allocation12], 2
          %331 = sst [smem:[%s330]] 16
          %s332 = scalar_lea.smem [#allocation12], 3
          %333 = sst [smem:[%s332]] 256
          %s334 = scalar_lea.smem [#allocation12], 4
          %335 = sst [smem:[%s334]] 128
          %s336 = scalar_lea.smem [#allocation12], 5
          %337 = sst [smem:[%s336]] 8
          %339 = dma.general %s307, 16384, %s321, %s296, [#allocation11], [#allocation12], %s319, 0
        $region28: #{gat_conv.3} parent=19 // pred_fallthru
          _
        // Predicated region
        $region29: #{gat_conv.3} parent=19 // pred_check
          %p340 = pneg %p129
        $region30: #{gat_conv.3} parent=19 // pred_check_branch
          %342 = sbr.rel (%p340) target = $region32
        $region31: #{gat_conv.3} parent=19 // pred_region
          %p343 = scmp.lt.s32.totalorder %s28, 1
          %s344 = scalar_select %p343, %s28, 1
          %s345 = smul.addr %s344, 2
          %s346 = scalar_lea.vmem %s3, %s345
        $region32: #{gat_conv.3} parent=19 // pred_fallthru
          _
        // Predicated region
        $region33: #{gat_conv.3} parent=19 // pred_check
          %p347 = pneg %p155
        $region34: #{gat_conv.3} parent=19 // pred_check_branch
          %349 = sbr.rel (%p347) target = $region36
        $region35: #{gat_conv.3} parent=19 // pred_region
          %s350 = smul.u32 16, %s27
          %p351 = scmp.lt.s32.totalorder %s350, 31
          %s352 = scalar_select %p351, %s350, 31
          %s353 = smul.addr %s352, 8
          %s354 = scalar_lea.vmem %s4, %s353
          %s355 = smul.u32 16, %s27
        $region36: #{gat_conv.3} parent=19 // pred_fallthru
          _
        // Predicated region
        $region37: #{gat_conv.3} parent=19 // pred_check
          %p356 = pneg %p181
        $region38: #{gat_conv.3} parent=19 // pred_check_branch
          %358 = sbr.rel (%p356) target = $region40
        $region39: #{gat_conv.3} parent=19 // pred_region
          %s359 = smul.u32 16, %s28
          %p360 = scmp.lt.s32.totalorder %s359, 31
          %s361 = scalar_select %p360, %s359, 31
          %s362 = smul.addr %s361, 4
          %s363 = scalar_lea.vmem %s5, %s362
          %s364 = smul.u32 16, %s28
        $region40: #{gat_conv.3} parent=19 // pred_fallthru
          _
        // Predicated region
        $region41: #{gat_conv.3} parent=19 // pred_check
          %p365 = pneg %p207
        $region42: #{gat_conv.3} parent=19 // pred_check_branch
          %367 = sbr.rel (%p365) target = $region44
        $region43: #{gat_conv.3} parent=19 // pred_region
          %s368 = smul.u32 16, %s27
          %p369 = scmp.lt.s32.totalorder %s368, 31
          %s370 = scalar_select %p369, %s368, 31
          %s371 = smul.addr %s370, 8
          %s372 = scalar_lea.vmem %s6, %s371
          %s373 = smul.u32 16, %s27
        $region44: #{gat_conv.3} parent=19 // pred_fallthru
          _
      $region20: #{gat_conv.3} parent=5 // pred_fallthru
        _
      %p374 = scmp.le.s32.totalorder 1, %s20
      %p375 = scmp.lt.s32.totalorder %s20, 5
      %p376 = pnand %p374, %p375
      %p377 = pneg %p376
      // Predicated region
      $region45: #{gat_conv.3} parent=5 // pred_check
        _
      $region46: #{gat_conv.3} parent=5 // pred_check_branch
        %379 = sbr.rel (%p376) target = $region48
      $region47: #{gat_conv.3} parent=5 // pred_region
        %s380 = ssub.s32 %s20, 1
        // Predicated region
        $region49: #{gat_conv.3} parent=47 // pred_check
          %p381 = pneg %p53
        $region50: #{gat_conv.3} parent=47 // pred_check_branch
          %383 = sbr.rel (%p381) target = $region52
        $region51: #{gat_conv.3} parent=47 // pred_region
          %384 = dma.done [#allocation7], 128
        $region52: #{gat_conv.3} parent=47 // pred_fallthru
          _
        %s385 = sand.u32 %s68, 1
        %s386 = scalar_lea.sflag [#allocation6], %s385
        %s387 = sand.u32 %s68, 1
        %s388 = smul.addr %s387, 128
        %s389 = scalar_lea.vmem [#allocation8], %s388
        // Predicated region
        $region53: #{gat_conv.3} parent=47 // pred_check
          %p390 = pneg %p81
        $region54: #{gat_conv.3} parent=47 // pred_check_branch
          %392 = sbr.rel (%p390) target = $region56
        $region55: #{gat_conv.3} parent=47 // pred_region
          %393 = dma.done %s386, 2048
        $region56: #{gat_conv.3} parent=47 // pred_fallthru
          _
        %s394 = sand.u32 %s96, 1
        %s395 = scalar_lea.sflag [#allocation10], %s394
        %s396 = sand.u32 %s96, 1
        %s397 = smul.addr %s396, 1024
        %s398 = scalar_lea.vmem [#allocation9], %s397
        // Predicated region
        $region57: #{gat_conv.3} parent=47 // pred_check
          %p399 = pneg %p109
        $region58: #{gat_conv.3} parent=47 // pred_check_branch
          %401 = sbr.rel (%p399) target = $region60
        $region59: #{gat_conv.3} parent=47 // pred_region
          %402 = dma.done %s395, 16384
        $region60: #{gat_conv.3} parent=47 // pred_fallthru
          _
        %403 = sfence
        %p404 = pneg %p53
        %p405 = pneg %p50
        %s406 = sand.u32 %s68, 1
        %s407 = scalar_lea.sflag [#allocation6], %s406
        %s408 = sand.u32 %s68, 1
        %s409 = smul.addr %s408, 128
        %s410 = scalar_lea.vmem [#allocation8], %s409
        %p411 = pneg %p81
        %p412 = pneg %p78
        %s413 = sand.u32 %s96, 1
        %s414 = scalar_lea.sflag [#allocation10], %s413
        %s415 = sand.u32 %s96, 1
        %s416 = smul.addr %s415, 1024
        %s417 = scalar_lea.vmem [#allocation9], %s416
        %p418 = pneg %p109
        %p419 = pneg %p106
        %p420 = scmp.lt.s32.totalorder %s30, 1
        %s421 = scalar_select %p420, %s30, 1
        %s422 = smul.addr %s421, 2
        %s423 = scalar_lea.vmem %s3, %s422
        %p424 = pneg %p135
        %p425 = pneg %p132
        %s426 = smul.u32 16, %s29
        %p427 = scmp.lt.s32.totalorder %s426, 31
        %s428 = scalar_select %p427, %s426, 31
        %s429 = smul.addr %s428, 8
        %s430 = scalar_lea.vmem %s4, %s429
        %p431 = pneg %p161
        %p432 = pneg %p158
        %s433 = smul.u32 16, %s30
        %p434 = scmp.lt.s32.totalorder %s433, 31
        %s435 = scalar_select %p434, %s433, 31
        %s436 = smul.addr %s435, 4
        %s437 = scalar_lea.vmem %s5, %s436
        %p438 = pneg %p187
        %p439 = pneg %p184
        %s440 = smul.u32 16, %s29
        %p441 = scmp.lt.s32.totalorder %s440, 31
        %s442 = scalar_select %p441, %s440, 31
        %s443 = smul.addr %s442, 8
        %s444 = scalar_lea.vmem %s6, %s443
        %p445 = pneg %p213
        %p446 = pneg %p210
        %p447 = pneg %p239
        %p448 = pneg %p236
        %s449 = smul.u32 16, %s29
        %p450 = scmp.lt.s32.totalorder %s449, 31
        %s451 = scalar_select %p450, %s449, 31
        %s452 = smul.addr %s451, 8
        %s453 = scalar_lea.vmem %s7, %s452
        %s454 = smul.u32 16, %s29
        %s455 = smul.u32 16, %s29
        %p456 = scmp.lt.s32.totalorder %s30, 1
        %s457 = scalar_select %p456, %s30, 1
        %s458 = smul.addr %s457, 2
        %s459 = scalar_lea.vmem %s3, %s458
        %s460 = smul.u32 16, %s29
        %p461 = scmp.lt.s32.totalorder %s460, 31
        %s462 = scalar_select %p461, %s460, 31
        %s463 = smul.addr %s462, 8
        %s464 = scalar_lea.vmem %s4, %s463
        %s465 = smul.u32 16, %s29
        %s466 = smul.u32 16, %s30
        %p467 = scmp.lt.s32.totalorder %s466, 31
        %s468 = scalar_select %p467, %s466, 31
        %s469 = smul.addr %s468, 4
        %s470 = scalar_lea.vmem %s5, %s469
        %s471 = smul.u32 16, %s30
        %s472 = smul.u32 16, %s29
        %p473 = scmp.lt.s32.totalorder %s472, 31
        %s474 = scalar_select %p473, %s472, 31
        %s475 = smul.addr %s474, 8
        %s476 = scalar_lea.vmem %s6, %s475
        %s477 = smul.u32 16, %s29
        %s478 = smul.u32 16, %s29
        %p479 = scmp.lt.s32.totalorder %s478, 31
        %s480 = scalar_select %p479, %s478, 31
        %s481 = smul.addr %s480, 8
        %s482 = scalar_lea.vmem %s7, %s481
        %s483 = smul.u32 16, %s29
        %p485 = scmp.eq.s32.totalorder %s30, 0
        // Predicated region
        $region61: #{gat_conv.3} parent=47 // pred_check
          %p486 = pneg %p485
        $region62: #{gat_conv.3} parent=47 // pred_check_branch
          %488 = sbr.rel (%p486) target = $region64
        $region63: #{gat_conv.3} parent=47 // pred_region
          %vm489 = vcmask 7168
          %490 = vst.msk [vmem:[#allocation2] sm:$0xff] %vm489, -1e+30
          %491 = vst.msk [vmem:[#allocation2 + $0x8] sm:$0xff] %vm489, -1e+30
          %492 = vst.msk [vmem:[#allocation2 + $0x10] sm:$0xff] %vm489, -1e+30
          %493 = vst.msk [vmem:[#allocation2 + $0x18] sm:$0xff] %vm489, -1e+30
          %494 = vst.msk [vmem:[#allocation2 + $0x20] sm:$0xff] %vm489, -1e+30
          %495 = vst.msk [vmem:[#allocation2 + $0x28] sm:$0xff] %vm489, -1e+30
          %496 = vst.msk [vmem:[#allocation2 + $0x30] sm:$0xff] %vm489, -1e+30
          %497 = vst.msk [vmem:[#allocation2 + $0x38] sm:$0xff] %vm489, -1e+30
          %498 = vst.msk [vmem:[#allocation2 + $0x40] sm:$0xff] %vm489, -1e+30
          %499 = vst.msk [vmem:[#allocation2 + $0x48] sm:$0xff] %vm489, -1e+30
          %500 = vst.msk [vmem:[#allocation2 + $0x50] sm:$0xff] %vm489, -1e+30
          %501 = vst.msk [vmem:[#allocation2 + $0x58] sm:$0xff] %vm489, -1e+30
          %502 = vst.msk [vmem:[#allocation2 + $0x60] sm:$0xff] %vm489, -1e+30
          %503 = vst.msk [vmem:[#allocation2 + $0x68] sm:$0xff] %vm489, -1e+30
          %504 = vst.msk [vmem:[#allocation2 + $0x70] sm:$0xff] %vm489, -1e+30
          %505 = vst.msk [vmem:[#allocation2 + $0x78] sm:$0xff] %vm489, -1e+30
          %506 = vst.msk [vmem:[#allocation2 + $0x80] sm:$0xff] %vm489, -1e+30
          %507 = vst.msk [vmem:[#allocation2 + $0x88] sm:$0xff] %vm489, -1e+30
          %508 = vst.msk [vmem:[#allocation2 + $0x90] sm:$0xff] %vm489, -1e+30
          %509 = vst.msk [vmem:[#allocation2 + $0x98] sm:$0xff] %vm489, -1e+30
          %510 = vst.msk [vmem:[#allocation2 + $0xa0] sm:$0xff] %vm489, -1e+30
          %511 = vst.msk [vmem:[#allocation2 + $0xa8] sm:$0xff] %vm489, -1e+30
          %512 = vst.msk [vmem:[#allocation2 + $0xb0] sm:$0xff] %vm489, -1e+30
          %513 = vst.msk [vmem:[#allocation2 + $0xb8] sm:$0xff] %vm489, -1e+30
          %514 = vst.msk [vmem:[#allocation2 + $0xc0] sm:$0xff] %vm489, -1e+30
          %515 = vst.msk [vmem:[#allocation2 + $0xc8] sm:$0xff] %vm489, -1e+30
          %516 = vst.msk [vmem:[#allocation2 + $0xd0] sm:$0xff] %vm489, -1e+30
          %517 = vst.msk [vmem:[#allocation2 + $0xd8] sm:$0xff] %vm489, -1e+30
          %518 = vst.msk [vmem:[#allocation2 + $0xe0] sm:$0xff] %vm489, -1e+30
          %519 = vst.msk [vmem:[#allocation2 + $0xe8] sm:$0xff] %vm489, -1e+30
          %520 = vst.msk [vmem:[#allocation2 + $0xf0] sm:$0xff] %vm489, -1e+30
          %521 = vst.msk [vmem:[#allocation2 + $0xf8] sm:$0xff] %vm489, -1e+30
          %522 = vst.msk [vmem:[#allocation3] sm:$0xff] %vm489, 0.0
          %523 = vst.msk [vmem:[#allocation3 + $0x8] sm:$0xff] %vm489, 0.0
          %524 = vst.msk [vmem:[#allocation3 + $0x10] sm:$0xff] %vm489, 0.0
          %525 = vst.msk [vmem:[#allocation3 + $0x18] sm:$0xff] %vm489, 0.0
          %526 = vst.msk [vmem:[#allocation3 + $0x20] sm:$0xff] %vm489, 0.0
          %527 = vst.msk [vmem:[#allocation3 + $0x28] sm:$0xff] %vm489, 0.0
          %528 = vst.msk [vmem:[#allocation3 + $0x30] sm:$0xff] %vm489, 0.0
          %529 = vst.msk [vmem:[#allocation3 + $0x38] sm:$0xff] %vm489, 0.0
          %530 = vst.msk [vmem:[#allocation3 + $0x40] sm:$0xff] %vm489, 0.0
          %531 = vst.msk [vmem:[#allocation3 + $0x48] sm:$0xff] %vm489, 0.0
          %532 = vst.msk [vmem:[#allocation3 + $0x50] sm:$0xff] %vm489, 0.0
          %533 = vst.msk [vmem:[#allocation3 + $0x58] sm:$0xff] %vm489, 0.0
          %534 = vst.msk [vmem:[#allocation3 + $0x60] sm:$0xff] %vm489, 0.0
          %535 = vst.msk [vmem:[#allocation3 + $0x68] sm:$0xff] %vm489, 0.0
          %536 = vst.msk [vmem:[#allocation3 + $0x70] sm:$0xff] %vm489, 0.0
          %537 = vst.msk [vmem:[#allocation3 + $0x78] sm:$0xff] %vm489, 0.0
          %538 = vst.msk [vmem:[#allocation3 + $0x80] sm:$0xff] %vm489, 0.0
          %539 = vst.msk [vmem:[#allocation3 + $0x88] sm:$0xff] %vm489, 0.0
          %540 = vst.msk [vmem:[#allocation3 + $0x90] sm:$0xff] %vm489, 0.0
          %541 = vst.msk [vmem:[#allocation3 + $0x98] sm:$0xff] %vm489, 0.0
          %542 = vst.msk [vmem:[#allocation3 + $0xa0] sm:$0xff] %vm489, 0.0
          %543 = vst.msk [vmem:[#allocation3 + $0xa8] sm:$0xff] %vm489, 0.0
          %544 = vst.msk [vmem:[#allocation3 + $0xb0] sm:$0xff] %vm489, 0.0
          %545 = vst.msk [vmem:[#allocation3 + $0xb8] sm:$0xff] %vm489, 0.0
          %546 = vst.msk [vmem:[#allocation3 + $0xc0] sm:$0xff] %vm489, 0.0
          %547 = vst.msk [vmem:[#allocation3 + $0xc8] sm:$0xff] %vm489, 0.0
          %548 = vst.msk [vmem:[#allocation3 + $0xd0] sm:$0xff] %vm489, 0.0
          %549 = vst.msk [vmem:[#allocation3 + $0xd8] sm:$0xff] %vm489, 0.0
          %550 = vst.msk [vmem:[#allocation3 + $0xe0] sm:$0xff] %vm489, 0.0
          %551 = vst.msk [vmem:[#allocation3 + $0xe8] sm:$0xff] %vm489, 0.0
          %552 = vst.msk [vmem:[#allocation3 + $0xf0] sm:$0xff] %vm489, 0.0
          %553 = vst.msk [vmem:[#allocation3 + $0xf8] sm:$0xff] %vm489, 0.0
          %vm554 = vcmask 261120
          %555 = vst.msk [vmem:[#allocation4] sm:$0xff] %vm554, 0.0
          %556 = vst.msk [vmem:[#allocation4 + $0x8] sm:$0xff] %vm554, 0.0
          %557 = vst.msk [vmem:[#allocation4 + $0x10] sm:$0xff] %vm554, 0.0
          %558 = vst.msk [vmem:[#allocation4 + $0x18] sm:$0xff] %vm554, 0.0
          %559 = vst.msk [vmem:[#allocation4 + $0x20] sm:$0xff] %vm554, 0.0
          %560 = vst.msk [vmem:[#allocation4 + $0x28] sm:$0xff] %vm554, 0.0
          %561 = vst.msk [vmem:[#allocation4 + $0x30] sm:$0xff] %vm554, 0.0
          %562 = vst.msk [vmem:[#allocation4 + $0x38] sm:$0xff] %vm554, 0.0
          %563 = vst.msk [vmem:[#allocation4 + $0x40] sm:$0xff] %vm554, 0.0
          %564 = vst.msk [vmem:[#allocation4 + $0x48] sm:$0xff] %vm554, 0.0
          %565 = vst.msk [vmem:[#allocation4 + $0x50] sm:$0xff] %vm554, 0.0
          %566 = vst.msk [vmem:[#allocation4 + $0x58] sm:$0xff] %vm554, 0.0
          %567 = vst.msk [vmem:[#allocation4 + $0x60] sm:$0xff] %vm554, 0.0
          %568 = vst.msk [vmem:[#allocation4 + $0x68] sm:$0xff] %vm554, 0.0
          %569 = vst.msk [vmem:[#allocation4 + $0x70] sm:$0xff] %vm554, 0.0
          %570 = vst.msk [vmem:[#allocation4 + $0x78] sm:$0xff] %vm554, 0.0
        $region64: #{gat_conv.3} parent=47 // pred_fallthru
          _
        %v571 = vld [vmem:[%s389] sm:$0xff]
        %v572 = vld [vmem:[%s389 + $0x8] sm:$0xff]
        %v573 = vld [vmem:[%s389 + $0x10] sm:$0xff]
        %v574 = vld [vmem:[%s389 + $0x18] sm:$0xff]
        %v575 = vld [vmem:[%s389 + $0x20] sm:$0xff]
        %v576 = vld [vmem:[%s389 + $0x28] sm:$0xff]
        %v577 = vld [vmem:[%s389 + $0x30] sm:$0xff]
        %v578 = vld [vmem:[%s389 + $0x38] sm:$0xff]
        %v579 = vld [vmem:[%s389 + $0x40] sm:$0xff]
        %v580 = vld [vmem:[%s389 + $0x48] sm:$0xff]
        %v581 = vld [vmem:[%s389 + $0x50] sm:$0xff]
        %v582 = vld [vmem:[%s389 + $0x58] sm:$0xff]
        %v583 = vld [vmem:[%s389 + $0x60] sm:$0xff]
        %v584 = vld [vmem:[%s389 + $0x68] sm:$0xff]
        %v585 = vld [vmem:[%s389 + $0x70] sm:$0xff]
        %v586 = vld [vmem:[%s389 + $0x78] sm:$0xff]
        %vm587 = vcmp.gt.f32.partialorder %v571, 0.0
        %vm588 = vcmp.gt.f32.partialorder %v572, 0.0
        %vm589 = vcmp.gt.f32.partialorder %v573, 0.0
        %vm590 = vcmp.gt.f32.partialorder %v574, 0.0
        %vm591 = vcmp.gt.f32.partialorder %v575, 0.0
        %vm592 = vcmp.gt.f32.partialorder %v576, 0.0
        %vm593 = vcmp.gt.f32.partialorder %v577, 0.0
        %vm594 = vcmp.gt.f32.partialorder %v578, 0.0
        %vm595 = vcmp.gt.f32.partialorder %v579, 0.0
        %vm596 = vcmp.gt.f32.partialorder %v580, 0.0
        %vm597 = vcmp.gt.f32.partialorder %v581, 0.0
        %vm598 = vcmp.gt.f32.partialorder %v582, 0.0
        %vm599 = vcmp.gt.f32.partialorder %v583, 0.0
        %vm600 = vcmp.gt.f32.partialorder %v584, 0.0
        %vm601 = vcmp.gt.f32.partialorder %v585, 0.0
        %vm602 = vcmp.gt.f32.partialorder %v586, 0.0
        %v603 = vld [vmem:[%s464] sm:$0xff]
        %v604 = vld [vmem:[%s464 + $0x8] sm:$0xff]
        %v605 = vld [vmem:[%s464 + $0x10] sm:$0xff]
        %v606 = vld [vmem:[%s464 + $0x18] sm:$0xff]
        %v607 = vld [vmem:[%s464 + $0x20] sm:$0xff]
        %v608 = vld [vmem:[%s464 + $0x28] sm:$0xff]
        %v609 = vld [vmem:[%s464 + $0x30] sm:$0xff]
        %v610 = vld [vmem:[%s464 + $0x38] sm:$0xff]
        %v611 = vld [vmem:[%s464 + $0x40] sm:$0xff]
        %v612 = vld [vmem:[%s464 + $0x48] sm:$0xff]
        %v613 = vld [vmem:[%s464 + $0x50] sm:$0xff]
        %v614 = vld [vmem:[%s464 + $0x58] sm:$0xff]
        %v615 = vld [vmem:[%s464 + $0x60] sm:$0xff]
        %v616 = vld [vmem:[%s464 + $0x68] sm:$0xff]
        %v617 = vld [vmem:[%s464 + $0x70] sm:$0xff]
        %v618 = vld [vmem:[%s464 + $0x78] sm:$0xff]
        %v619 = vld [vmem:[%s459] sm:$0x3]
        %v620 = vld [vmem:[%s470] sm:$0xf]
        %v621 = vld [vmem:[%s470 + $0x4] sm:$0xf]
        %v622 = vld [vmem:[%s470 + $0x8] sm:$0xf]
        %v623 = vld [vmem:[%s470 + $0xc] sm:$0xf]
        %v624 = vld [vmem:[%s470 + $0x10] sm:$0xf]
        %v625 = vld [vmem:[%s470 + $0x14] sm:$0xf]
        %v626 = vld [vmem:[%s470 + $0x18] sm:$0xf]
        %v627 = vld [vmem:[%s470 + $0x1c] sm:$0xf]
        %v628 = vld [vmem:[%s470 + $0x20] sm:$0xf]
        %v629 = vld [vmem:[%s470 + $0x24] sm:$0xf]
        %v630 = vld [vmem:[%s470 + $0x28] sm:$0xf]
        %v631 = vld [vmem:[%s470 + $0x2c] sm:$0xf]
        %v632 = vld [vmem:[%s470 + $0x30] sm:$0xf]
        %v633 = vld [vmem:[%s470 + $0x34] sm:$0xf]
        %v634 = vld [vmem:[%s470 + $0x38] sm:$0xf]
        %v635 = vld [vmem:[%s470 + $0x3c] sm:$0xf]
        %v636 = vld [vmem:[%s398] sm:$0xff]
        %v637 = vld [vmem:[%s398 + $0x8] sm:$0xff]
        %v638 = vld [vmem:[%s398 + $0x10] sm:$0xff]
        %v639 = vld [vmem:[%s398 + $0x18] sm:$0xff]
        %v640 = vld [vmem:[%s398 + $0x20] sm:$0xff]
        %v641 = vld [vmem:[%s398 + $0x28] sm:$0xff]
        %v642 = vld [vmem:[%s398 + $0x30] sm:$0xff]
        %v643 = vld [vmem:[%s398 + $0x38] sm:$0xff]
        %v644 = vld [vmem:[%s398 + $0x40] sm:$0xff]
        %v645 = vld [vmem:[%s398 + $0x48] sm:$0xff]
        %v646 = vld [vmem:[%s398 + $0x50] sm:$0xff]
        %v647 = vld [vmem:[%s398 + $0x58] sm:$0xff]
        %v648 = vld [vmem:[%s398 + $0x60] sm:$0xff]
        %v649 = vld [vmem:[%s398 + $0x68] sm:$0xff]
        %v650 = vld [vmem:[%s398 + $0x70] sm:$0xff]
        %v651 = vld [vmem:[%s398 + $0x78] sm:$0xff]
        %s652 = sld [smem:[#allocation5]]
        %v653 = vstv %s652
        %v654 = vmul.f32 %v636, %v653
        %v655 = vmul.f32 %v637, %v653
        %v656 = vmul.f32 %v638, %v653
        %v657 = vmul.f32 %v639, %v653
        %v658 = vmul.f32 %v640, %v653
        %v659 = vmul.f32 %v641, %v653
        %v660 = vmul.f32 %v642, %v653
        %v661 = vmul.f32 %v643, %v653
        %v662 = vmul.f32 %v644, %v653
        %v663 = vmul.f32 %v645, %v653
        %v664 = vmul.f32 %v646, %v653
        %v665 = vmul.f32 %v647, %v653
        %v666 = vmul.f32 %v648, %v653
        %v667 = vmul.f32 %v649, %v653
        %v668 = vmul.f32 %v650, %v653
        %v669 = vmul.f32 %v651, %v653
        %s670 = sld [smem:[#allocation5 + $0x1]]
        %v671 = vstv %s670
        %v672 = vmul.f32 %v636, %v671
        %v673 = vmul.f32 %v637, %v671
        %v674 = vmul.f32 %v638, %v671
        %v675 = vmul.f32 %v639, %v671
        %v676 = vmul.f32 %v640, %v671
        %v677 = vmul.f32 %v641, %v671
        %v678 = vmul.f32 %v642, %v671
        %v679 = vmul.f32 %v643, %v671
        %v680 = vmul.f32 %v644, %v671
        %v681 = vmul.f32 %v645, %v671
        %v682 = vmul.f32 %v646, %v671
        %v683 = vmul.f32 %v647, %v671
        %v684 = vmul.f32 %v648, %v671
        %v685 = vmul.f32 %v649, %v671
        %v686 = vmul.f32 %v650, %v671
        %v687 = vmul.f32 %v651, %v671
        %s688 = scalar_lea.vmem %s398, 128 [#allocation9]
        %v689 = vld [vmem:[%s688] sm:$0xff]
        %v690 = vld [vmem:[%s688 + $0x8] sm:$0xff]
        %v691 = vld [vmem:[%s688 + $0x10] sm:$0xff]
        %v692 = vld [vmem:[%s688 + $0x18] sm:$0xff]
        %v693 = vld [vmem:[%s688 + $0x20] sm:$0xff]
        %v694 = vld [vmem:[%s688 + $0x28] sm:$0xff]
        %v695 = vld [vmem:[%s688 + $0x30] sm:$0xff]
        %v696 = vld [vmem:[%s688 + $0x38] sm:$0xff]
        %v697 = vld [vmem:[%s688 + $0x40] sm:$0xff]
        %v698 = vld [vmem:[%s688 + $0x48] sm:$0xff]
        %v699 = vld [vmem:[%s688 + $0x50] sm:$0xff]
        %v700 = vld [vmem:[%s688 + $0x58] sm:$0xff]
        %v701 = vld [vmem:[%s688 + $0x60] sm:$0xff]
        %v702 = vld [vmem:[%s688 + $0x68] sm:$0xff]
        %v703 = vld [vmem:[%s688 + $0x70] sm:$0xff]
        %v704 = vld [vmem:[%s688 + $0x78] sm:$0xff]
        %s705 = sld [smem:[#allocation5 + $0x80]]
        %v706 = vstv %s705
        %v707 = vmul.f32 %v689, %v706
        %v708 = vmul.f32 %v690, %v706
        %v709 = vmul.f32 %v691, %v706
        %v710 = vmul.f32 %v692, %v706
        %v711 = vmul.f32 %v693, %v706
        %v712 = vmul.f32 %v694, %v706
        %v713 = vmul.f32 %v695, %v706
        %v714 = vmul.f32 %v696, %v706
        %v715 = vmul.f32 %v697, %v706
        %v716 = vmul.f32 %v698, %v706
        %v717 = vmul.f32 %v699, %v706
        %v718 = vmul.f32 %v700, %v706
        %v719 = vmul.f32 %v701, %v706
        %v720 = vmul.f32 %v702, %v706
        %v721 = vmul.f32 %v703, %v706
        %v722 = vmul.f32 %v704, %v706
        %v723 = vadd.f32 %v654, %v707
        %v724 = vadd.f32 %v655, %v708
        %v725 = vadd.f32 %v656, %v709
        %v726 = vadd.f32 %v657, %v710
        %v727 = vadd.f32 %v658, %v711
        %v728 = vadd.f32 %v659, %v712
        %v729 = vadd.f32 %v660, %v713
        %v730 = vadd.f32 %v661, %v714
        %v731 = vadd.f32 %v662, %v715
        %v732 = vadd.f32 %v663, %v716
        %v733 = vadd.f32 %v664, %v717
        %v734 = vadd.f32 %v665, %v718
        %v735 = vadd.f32 %v666, %v719
        %v736 = vadd.f32 %v667, %v720
        %v737 = vadd.f32 %v668, %v721
        %v738 = vadd.f32 %v669, %v722
        %s739 = sld [smem:[#allocation5 + $0x81]]
        %v740 = vstv %s739
        %v741 = vmul.f32 %v689, %v740
        %v742 = vmul.f32 %v690, %v740
        %v743 = vmul.f32 %v691, %v740
        %v744 = vmul.f32 %v692, %v740
        %v745 = vmul.f32 %v693, %v740
        %v746 = vmul.f32 %v694, %v740
        %v747 = vmul.f32 %v695, %v740
        %v748 = vmul.f32 %v696, %v740
        %v749 = vmul.f32 %v697, %v740
        %v750 = vmul.f32 %v698, %v740
        %v751 = vmul.f32 %v699, %v740
        %v752 = vmul.f32 %v700, %v740
        %v753 = vmul.f32 %v701, %v740
        %v754 = vmul.f32 %v702, %v740
        %v755 = vmul.f32 %v703, %v740
        %v756 = vmul.f32 %v704, %v740
        %v757 = vadd.f32 %v672, %v741
        %v758 = vadd.f32 %v673, %v742
        %v759 = vadd.f32 %v674, %v743
        %v760 = vadd.f32 %v675, %v744
        %v761 = vadd.f32 %v676, %v745
        %v762 = vadd.f32 %v677, %v746
        %v763 = vadd.f32 %v678, %v747
        %v764 = vadd.f32 %v679, %v748
        %v765 = vadd.f32 %v680, %v749
        %v766 = vadd.f32 %v681, %v750
        %v767 = vadd.f32 %v682, %v751
        %v768 = vadd.f32 %v683, %v752
        %v769 = vadd.f32 %v684, %v753
        %v770 = vadd.f32 %v685, %v754
        %v771 = vadd.f32 %v686, %v755
        %v772 = vadd.f32 %v687, %v756
        %s773 = scalar_lea.vmem %s398, 256 [#allocation9]
        %v774 = vld [vmem:[%s773] sm:$0xff]
        %v775 = vld [vmem:[%s773 + $0x8] sm:$0xff]
        %v776 = vld [vmem:[%s773 + $0x10] sm:$0xff]
        %v777 = vld [vmem:[%s773 + $0x18] sm:$0xff]
        %v778 = vld [vmem:[%s773 + $0x20] sm:$0xff]
        %v779 = vld [vmem:[%s773 + $0x28] sm:$0xff]
        %v780 = vld [vmem:[%s773 + $0x30] sm:$0xff]
        %v781 = vld [vmem:[%s773 + $0x38] sm:$0xff]
        %v782 = vld [vmem:[%s773 + $0x40] sm:$0xff]
        %v783 = vld [vmem:[%s773 + $0x48] sm:$0xff]
        %v784 = vld [vmem:[%s773 + $0x50] sm:$0xff]
        %v785 = vld [vmem:[%s773 + $0x58] sm:$0xff]
        %v786 = vld [vmem:[%s773 + $0x60] sm:$0xff]
        %v787 = vld [vmem:[%s773 + $0x68] sm:$0xff]
        %v788 = vld [vmem:[%s773 + $0x70] sm:$0xff]
        %v789 = vld [vmem:[%s773 + $0x78] sm:$0xff]
        %s790 = sld [smem:[#allocation5 + $0x100]]
        %v791 = vstv %s790
        %v792 = vmul.f32 %v774, %v791
        %v793 = vmul.f32 %v775, %v791
        %v794 = vmul.f32 %v776, %v791
        %v795 = vmul.f32 %v777, %v791
        %v796 = vmul.f32 %v778, %v791
        %v797 = vmul.f32 %v779, %v791
        %v798 = vmul.f32 %v780, %v791
        %v799 = vmul.f32 %v781, %v791
        %v800 = vmul.f32 %v782, %v791
        %v801 = vmul.f32 %v783, %v791
        %v802 = vmul.f32 %v784, %v791
        %v803 = vmul.f32 %v785, %v791
        %v804 = vmul.f32 %v786, %v791
        %v805 = vmul.f32 %v787, %v791
        %v806 = vmul.f32 %v788, %v791
        %v807 = vmul.f32 %v789, %v791
        %v808 = vadd.f32 %v723, %v792
        %v809 = vadd.f32 %v724, %v793
        %v810 = vadd.f32 %v725, %v794
        %v811 = vadd.f32 %v726, %v795
        %v812 = vadd.f32 %v727, %v796
        %v813 = vadd.f32 %v728, %v797
        %v814 = vadd.f32 %v729, %v798
        %v815 = vadd.f32 %v730, %v799
        %v816 = vadd.f32 %v731, %v800
        %v817 = vadd.f32 %v732, %v801
        %v818 = vadd.f32 %v733, %v802
        %v819 = vadd.f32 %v734, %v803
        %v820 = vadd.f32 %v735, %v804
        %v821 = vadd.f32 %v736, %v805
        %v822 = vadd.f32 %v737, %v806
        %v823 = vadd.f32 %v738, %v807
        %s824 = sld [smem:[#allocation5 + $0x101]]
        %v825 = vstv %s824
        %v826 = vmul.f32 %v774, %v825
        %v827 = vmul.f32 %v775, %v825
        %v828 = vmul.f32 %v776, %v825
        %v829 = vmul.f32 %v777, %v825
        %v830 = vmul.f32 %v778, %v825
        %v831 = vmul.f32 %v779, %v825
        %v832 = vmul.f32 %v780, %v825
        %v833 = vmul.f32 %v781, %v825
        %v834 = vmul.f32 %v782, %v825
        %v835 = vmul.f32 %v783, %v825
        %v836 = vmul.f32 %v784, %v825
        %v837 = vmul.f32 %v785, %v825
        %v838 = vmul.f32 %v786, %v825
        %v839 = vmul.f32 %v787, %v825
        %v840 = vmul.f32 %v788, %v825
        %v841 = vmul.f32 %v789, %v825
        %v842 = vadd.f32 %v757, %v826
        %v843 = vadd.f32 %v758, %v827
        %v844 = vadd.f32 %v759, %v828
        %v845 = vadd.f32 %v760, %v829
        %v846 = vadd.f32 %v761, %v830
        %v847 = vadd.f32 %v762, %v831
        %v848 = vadd.f32 %v763, %v832
        %v849 = vadd.f32 %v764, %v833
        %v850 = vadd.f32 %v765, %v834
        %v851 = vadd.f32 %v766, %v835
        %v852 = vadd.f32 %v767, %v836
        %v853 = vadd.f32 %v768, %v837
        %v854 = vadd.f32 %v769, %v838
        %v855 = vadd.f32 %v770, %v839
        %v856 = vadd.f32 %v771, %v840
        %v857 = vadd.f32 %v772, %v841
        %s858 = scalar_lea.vmem %s398, 384 [#allocation9]
        %v859 = vld [vmem:[%s858] sm:$0xff]
        %v860 = vld [vmem:[%s858 + $0x8] sm:$0xff]
        %v861 = vld [vmem:[%s858 + $0x10] sm:$0xff]
        %v862 = vld [vmem:[%s858 + $0x18] sm:$0xff]
        %v863 = vld [vmem:[%s858 + $0x20] sm:$0xff]
        %v864 = vld [vmem:[%s858 + $0x28] sm:$0xff]
        %v865 = vld [vmem:[%s858 + $0x30] sm:$0xff]
        %v866 = vld [vmem:[%s858 + $0x38] sm:$0xff]
        %v867 = vld [vmem:[%s858 + $0x40] sm:$0xff]
        %v868 = vld [vmem:[%s858 + $0x48] sm:$0xff]
        %v869 = vld [vmem:[%s858 + $0x50] sm:$0xff]
        %v870 = vld [vmem:[%s858 + $0x58] sm:$0xff]
        %v871 = vld [vmem:[%s858 + $0x60] sm:$0xff]
        %v872 = vld [vmem:[%s858 + $0x68] sm:$0xff]
        %v873 = vld [vmem:[%s858 + $0x70] sm:$0xff]
        %v874 = vld [vmem:[%s858 + $0x78] sm:$0xff]
        %s875 = sld [smem:[#allocation5 + $0x180]]
        %v876 = vstv %s875
        %v877 = vmul.f32 %v859, %v876
        %v878 = vmul.f32 %v860, %v876
        %v879 = vmul.f32 %v861, %v876
        %v880 = vmul.f32 %v862, %v876
        %v881 = vmul.f32 %v863, %v876
        %v882 = vmul.f32 %v864, %v876
        %v883 = vmul.f32 %v865, %v876
        %v884 = vmul.f32 %v866, %v876
        %v885 = vmul.f32 %v867, %v876
        %v886 = vmul.f32 %v868, %v876
        %v887 = vmul.f32 %v869, %v876
        %v888 = vmul.f32 %v870, %v876
        %v889 = vmul.f32 %v871, %v876
        %v890 = vmul.f32 %v872, %v876
        %v891 = vmul.f32 %v873, %v876
        %v892 = vmul.f32 %v874, %v876
        %v893 = vadd.f32 %v808, %v877
        %v894 = vadd.f32 %v809, %v878
        %v895 = vadd.f32 %v810, %v879
        %v896 = vadd.f32 %v811, %v880
        %v897 = vadd.f32 %v812, %v881
        %v898 = vadd.f32 %v813, %v882
        %v899 = vadd.f32 %v814, %v883
        %v900 = vadd.f32 %v815, %v884
        %v901 = vadd.f32 %v816, %v885
        %v902 = vadd.f32 %v817, %v886
        %v903 = vadd.f32 %v818, %v887
        %v904 = vadd.f32 %v819, %v888
        %v905 = vadd.f32 %v820, %v889
        %v906 = vadd.f32 %v821, %v890
        %v907 = vadd.f32 %v822, %v891
        %v908 = vadd.f32 %v823, %v892
        %s909 = sld [smem:[#allocation5 + $0x181]]
        %v910 = vstv %s909
        %v911 = vmul.f32 %v859, %v910
        %v912 = vmul.f32 %v860, %v910
        %v913 = vmul.f32 %v861, %v910
        %v914 = vmul.f32 %v862, %v910
        %v915 = vmul.f32 %v863, %v910
        %v916 = vmul.f32 %v864, %v910
        %v917 = vmul.f32 %v865, %v910
        %v918 = vmul.f32 %v866, %v910
        %v919 = vmul.f32 %v867, %v910
        %v920 = vmul.f32 %v868, %v910
        %v921 = vmul.f32 %v869, %v910
        %v922 = vmul.f32 %v870, %v910
        %v923 = vmul.f32 %v871, %v910
        %v924 = vmul.f32 %v872, %v910
        %v925 = vmul.f32 %v873, %v910
        %v926 = vmul.f32 %v874, %v910
        %v927 = vadd.f32 %v842, %v911
        %v928 = vadd.f32 %v843, %v912
        %v929 = vadd.f32 %v844, %v913
        %v930 = vadd.f32 %v845, %v914
        %v931 = vadd.f32 %v846, %v915
        %v932 = vadd.f32 %v847, %v916
        %v933 = vadd.f32 %v848, %v917
        %v934 = vadd.f32 %v849, %v918
        %v935 = vadd.f32 %v850, %v919
        %v936 = vadd.f32 %v851, %v920
        %v937 = vadd.f32 %v852, %v921
        %v938 = vadd.f32 %v853, %v922
        %v939 = vadd.f32 %v854, %v923
        %v940 = vadd.f32 %v855, %v924
        %v941 = vadd.f32 %v856, %v925
        %v942 = vadd.f32 %v857, %v926
        %s943 = scalar_lea.vmem %s398, 512 [#allocation9]
        %v944 = vld [vmem:[%s943] sm:$0xff]
        %v945 = vld [vmem:[%s943 + $0x8] sm:$0xff]
        %v946 = vld [vmem:[%s943 + $0x10] sm:$0xff]
        %v947 = vld [vmem:[%s943 + $0x18] sm:$0xff]
        %v948 = vld [vmem:[%s943 + $0x20] sm:$0xff]
        %v949 = vld [vmem:[%s943 + $0x28] sm:$0xff]
        %v950 = vld [vmem:[%s943 + $0x30] sm:$0xff]
        %v951 = vld [vmem:[%s943 + $0x38] sm:$0xff]
        %v952 = vld [vmem:[%s943 + $0x40] sm:$0xff]
        %v953 = vld [vmem:[%s943 + $0x48] sm:$0xff]
        %v954 = vld [vmem:[%s943 + $0x50] sm:$0xff]
        %v955 = vld [vmem:[%s943 + $0x58] sm:$0xff]
        %v956 = vld [vmem:[%s943 + $0x60] sm:$0xff]
        %v957 = vld [vmem:[%s943 + $0x68] sm:$0xff]
        %v958 = vld [vmem:[%s943 + $0x70] sm:$0xff]
        %v959 = vld [vmem:[%s943 + $0x78] sm:$0xff]
        %s960 = sld [smem:[#allocation5 + $0x200]]
        %v961 = vstv %s960
        %v962 = vmul.f32 %v944, %v961
        %v963 = vmul.f32 %v945, %v961
        %v964 = vmul.f32 %v946, %v961
        %v965 = vmul.f32 %v947, %v961
        %v966 = vmul.f32 %v948, %v961
        %v967 = vmul.f32 %v949, %v961
        %v968 = vmul.f32 %v950, %v961
        %v969 = vmul.f32 %v951, %v961
        %v970 = vmul.f32 %v952, %v961
        %v971 = vmul.f32 %v953, %v961
        %v972 = vmul.f32 %v954, %v961
        %v973 = vmul.f32 %v955, %v961
        %v974 = vmul.f32 %v956, %v961
        %v975 = vmul.f32 %v957, %v961
        %v976 = vmul.f32 %v958, %v961
        %v977 = vmul.f32 %v959, %v961
        %v978 = vadd.f32 %v893, %v962
        %v979 = vadd.f32 %v894, %v963
        %v980 = vadd.f32 %v895, %v964
        %v981 = vadd.f32 %v896, %v965
        %v982 = vadd.f32 %v897, %v966
        %v983 = vadd.f32 %v898, %v967
        %v984 = vadd.f32 %v899, %v968
        %v985 = vadd.f32 %v900, %v969
        %v986 = vadd.f32 %v901, %v970
        %v987 = vadd.f32 %v902, %v971
        %v988 = vadd.f32 %v903, %v972
        %v989 = vadd.f32 %v904, %v973
        %v990 = vadd.f32 %v905, %v974
        %v991 = vadd.f32 %v906, %v975
        %v992 = vadd.f32 %v907, %v976
        %v993 = vadd.f32 %v908, %v977
        %s994 = sld [smem:[#allocation5 + $0x201]]
        %v995 = vstv %s994
        %v996 = vmul.f32 %v944, %v995
        %v997 = vmul.f32 %v945, %v995
        %v998 = vmul.f32 %v946, %v995
        %v999 = vmul.f32 %v947, %v995
        %v1000 = vmul.f32 %v948, %v995
        %v1001 = vmul.f32 %v949, %v995
        %v1002 = vmul.f32 %v950, %v995
        %v1003 = vmul.f32 %v951, %v995
        %v1004 = vmul.f32 %v952, %v995
        %v1005 = vmul.f32 %v953, %v995
        %v1006 = vmul.f32 %v954, %v995
        %v1007 = vmul.f32 %v955, %v995
        %v1008 = vmul.f32 %v956, %v995
        %v1009 = vmul.f32 %v957, %v995
        %v1010 = vmul.f32 %v958, %v995
        %v1011 = vmul.f32 %v959, %v995
        %v1012 = vadd.f32 %v927, %v996
        %v1013 = vadd.f32 %v928, %v997
        %v1014 = vadd.f32 %v929, %v998
        %v1015 = vadd.f32 %v930, %v999
        %v1016 = vadd.f32 %v931, %v1000
        %v1017 = vadd.f32 %v932, %v1001
        %v1018 = vadd.f32 %v933, %v1002
        %v1019 = vadd.f32 %v934, %v1003
        %v1020 = vadd.f32 %v935, %v1004
        %v1021 = vadd.f32 %v936, %v1005
        %v1022 = vadd.f32 %v937, %v1006
        %v1023 = vadd.f32 %v938, %v1007
        %v1024 = vadd.f32 %v939, %v1008
        %v1025 = vadd.f32 %v940, %v1009
        %v1026 = vadd.f32 %v941, %v1010
        %v1027 = vadd.f32 %v942, %v1011
        %s1028 = scalar_lea.vmem %s398, 640 [#allocation9]
        %v1029 = vld [vmem:[%s1028] sm:$0xff]
        %v1030 = vld [vmem:[%s1028 + $0x8] sm:$0xff]
        %v1031 = vld [vmem:[%s1028 + $0x10] sm:$0xff]
        %v1032 = vld [vmem:[%s1028 + $0x18] sm:$0xff]
        %v1033 = vld [vmem:[%s1028 + $0x20] sm:$0xff]
        %v1034 = vld [vmem:[%s1028 + $0x28] sm:$0xff]
        %v1035 = vld [vmem:[%s1028 + $0x30] sm:$0xff]
        %v1036 = vld [vmem:[%s1028 + $0x38] sm:$0xff]
        %v1037 = vld [vmem:[%s1028 + $0x40] sm:$0xff]
        %v1038 = vld [vmem:[%s1028 + $0x48] sm:$0xff]
        %v1039 = vld [vmem:[%s1028 + $0x50] sm:$0xff]
        %v1040 = vld [vmem:[%s1028 + $0x58] sm:$0xff]
        %v1041 = vld [vmem:[%s1028 + $0x60] sm:$0xff]
        %v1042 = vld [vmem:[%s1028 + $0x68] sm:$0xff]
        %v1043 = vld [vmem:[%s1028 + $0x70] sm:$0xff]
        %v1044 = vld [vmem:[%s1028 + $0x78] sm:$0xff]
        %s1045 = sld [smem:[#allocation5 + $0x280]]
        %v1046 = vstv %s1045
        %v1047 = vmul.f32 %v1029, %v1046
        %v1048 = vmul.f32 %v1030, %v1046
        %v1049 = vmul.f32 %v1031, %v1046
        %v1050 = vmul.f32 %v1032, %v1046
        %v1051 = vmul.f32 %v1033, %v1046
        %v1052 = vmul.f32 %v1034, %v1046
        %v1053 = vmul.f32 %v1035, %v1046
        %v1054 = vmul.f32 %v1036, %v1046
        %v1055 = vmul.f32 %v1037, %v1046
        %v1056 = vmul.f32 %v1038, %v1046
        %v1057 = vmul.f32 %v1039, %v1046
        %v1058 = vmul.f32 %v1040, %v1046
        %v1059 = vmul.f32 %v1041, %v1046
        %v1060 = vmul.f32 %v1042, %v1046
        %v1061 = vmul.f32 %v1043, %v1046
        %v1062 = vmul.f32 %v1044, %v1046
        %v1063 = vadd.f32 %v978, %v1047
        %v1064 = vadd.f32 %v979, %v1048
        %v1065 = vadd.f32 %v980, %v1049
        %v1066 = vadd.f32 %v981, %v1050
        %v1067 = vadd.f32 %v982, %v1051
        %v1068 = vadd.f32 %v983, %v1052
        %v1069 = vadd.f32 %v984, %v1053
        %v1070 = vadd.f32 %v985, %v1054
        %v1071 = vadd.f32 %v986, %v1055
        %v1072 = vadd.f32 %v987, %v1056
        %v1073 = vadd.f32 %v988, %v1057
        %v1074 = vadd.f32 %v989, %v1058
        %v1075 = vadd.f32 %v990, %v1059
        %v1076 = vadd.f32 %v991, %v1060
        %v1077 = vadd.f32 %v992, %v1061
        %v1078 = vadd.f32 %v993, %v1062
        %s1079 = sld [smem:[#allocation5 + $0x281]]
        %v1080 = vstv %s1079
        %v1081 = vmul.f32 %v1029, %v1080
        %v1082 = vmul.f32 %v1030, %v1080
        %v1083 = vmul.f32 %v1031, %v1080
        %v1084 = vmul.f32 %v1032, %v1080
        %v1085 = vmul.f32 %v1033, %v1080
        %v1086 = vmul.f32 %v1034, %v1080
        %v1087 = vmul.f32 %v1035, %v1080
        %v1088 = vmul.f32 %v1036, %v1080
        %v1089 = vmul.f32 %v1037, %v1080
        %v1090 = vmul.f32 %v1038, %v1080
        %v1091 = vmul.f32 %v1039, %v1080
        %v1092 = vmul.f32 %v1040, %v1080
        %v1093 = vmul.f32 %v1041, %v1080
        %v1094 = vmul.f32 %v1042, %v1080
        %v1095 = vmul.f32 %v1043, %v1080
        %v1096 = vmul.f32 %v1044, %v1080
        %v1097 = vadd.f32 %v1012, %v1081
        %v1098 = vadd.f32 %v1013, %v1082
        %v1099 = vadd.f32 %v1014, %v1083
        %v1100 = vadd.f32 %v1015, %v1084
        %v1101 = vadd.f32 %v1016, %v1085
        %v1102 = vadd.f32 %v1017, %v1086
        %v1103 = vadd.f32 %v1018, %v1087
        %v1104 = vadd.f32 %v1019, %v1088
        %v1105 = vadd.f32 %v1020, %v1089
        %v1106 = vadd.f32 %v1021, %v1090
        %v1107 = vadd.f32 %v1022, %v1091
        %v1108 = vadd.f32 %v1023, %v1092
        %v1109 = vadd.f32 %v1024, %v1093
        %v1110 = vadd.f32 %v1025, %v1094
        %v1111 = vadd.f32 %v1026, %v1095
        %v1112 = vadd.f32 %v1027, %v1096
        %s1113 = scalar_lea.vmem %s398, 768 [#allocation9]
        %v1114 = vld [vmem:[%s1113] sm:$0xff]
        %v1115 = vld [vmem:[%s1113 + $0x8] sm:$0xff]
        %v1116 = vld [vmem:[%s1113 + $0x10] sm:$0xff]
        %v1117 = vld [vmem:[%s1113 + $0x18] sm:$0xff]
        %v1118 = vld [vmem:[%s1113 + $0x20] sm:$0xff]
        %v1119 = vld [vmem:[%s1113 + $0x28] sm:$0xff]
        %v1120 = vld [vmem:[%s1113 + $0x30] sm:$0xff]
        %v1121 = vld [vmem:[%s1113 + $0x38] sm:$0xff]
        %v1122 = vld [vmem:[%s1113 + $0x40] sm:$0xff]
        %v1123 = vld [vmem:[%s1113 + $0x48] sm:$0xff]
        %v1124 = vld [vmem:[%s1113 + $0x50] sm:$0xff]
        %v1125 = vld [vmem:[%s1113 + $0x58] sm:$0xff]
        %v1126 = vld [vmem:[%s1113 + $0x60] sm:$0xff]
        %v1127 = vld [vmem:[%s1113 + $0x68] sm:$0xff]
        %v1128 = vld [vmem:[%s1113 + $0x70] sm:$0xff]
        %v1129 = vld [vmem:[%s1113 + $0x78] sm:$0xff]
        %s1130 = sld [smem:[#allocation5 + $0x300]]
        %v1131 = vstv %s1130
        %v1132 = vmul.f32 %v1114, %v1131
        %v1133 = vmul.f32 %v1115, %v1131
        %v1134 = vmul.f32 %v1116, %v1131
        %v1135 = vmul.f32 %v1117, %v1131
        %v1136 = vmul.f32 %v1118, %v1131
        %v1137 = vmul.f32 %v1119, %v1131
        %v1138 = vmul.f32 %v1120, %v1131
        %v1139 = vmul.f32 %v1121, %v1131
        %v1140 = vmul.f32 %v1122, %v1131
        %v1141 = vmul.f32 %v1123, %v1131
        %v1142 = vmul.f32 %v1124, %v1131
        %v1143 = vmul.f32 %v1125, %v1131
        %v1144 = vmul.f32 %v1126, %v1131
        %v1145 = vmul.f32 %v1127, %v1131
        %v1146 = vmul.f32 %v1128, %v1131
        %v1147 = vmul.f32 %v1129, %v1131
        %v1148 = vadd.f32 %v1063, %v1132
        %v1149 = vadd.f32 %v1064, %v1133
        %v1150 = vadd.f32 %v1065, %v1134
        %v1151 = vadd.f32 %v1066, %v1135
        %v1152 = vadd.f32 %v1067, %v1136
        %v1153 = vadd.f32 %v1068, %v1137
        %v1154 = vadd.f32 %v1069, %v1138
        %v1155 = vadd.f32 %v1070, %v1139
        %v1156 = vadd.f32 %v1071, %v1140
        %v1157 = vadd.f32 %v1072, %v1141
        %v1158 = vadd.f32 %v1073, %v1142
        %v1159 = vadd.f32 %v1074, %v1143
        %v1160 = vadd.f32 %v1075, %v1144
        %v1161 = vadd.f32 %v1076, %v1145
        %v1162 = vadd.f32 %v1077, %v1146
        %v1163 = vadd.f32 %v1078, %v1147
        %s1164 = sld [smem:[#allocation5 + $0x301]]
        %v1165 = vstv %s1164
        %v1166 = vmul.f32 %v1114, %v1165
        %v1167 = vmul.f32 %v1115, %v1165
        %v1168 = vmul.f32 %v1116, %v1165
        %v1169 = vmul.f32 %v1117, %v1165
        %v1170 = vmul.f32 %v1118, %v1165
        %v1171 = vmul.f32 %v1119, %v1165
        %v1172 = vmul.f32 %v1120, %v1165
        %v1173 = vmul.f32 %v1121, %v1165
        %v1174 = vmul.f32 %v1122, %v1165
        %v1175 = vmul.f32 %v1123, %v1165
        %v1176 = vmul.f32 %v1124, %v1165
        %v1177 = vmul.f32 %v1125, %v1165
        %v1178 = vmul.f32 %v1126, %v1165
        %v1179 = vmul.f32 %v1127, %v1165
        %v1180 = vmul.f32 %v1128, %v1165
        %v1181 = vmul.f32 %v1129, %v1165
        %v1182 = vadd.f32 %v1097, %v1166
        %v1183 = vadd.f32 %v1098, %v1167
        %v1184 = vadd.f32 %v1099, %v1168
        %v1185 = vadd.f32 %v1100, %v1169
        %v1186 = vadd.f32 %v1101, %v1170
        %v1187 = vadd.f32 %v1102, %v1171
        %v1188 = vadd.f32 %v1103, %v1172
        %v1189 = vadd.f32 %v1104, %v1173
        %v1190 = vadd.f32 %v1105, %v1174
        %v1191 = vadd.f32 %v1106, %v1175
        %v1192 = vadd.f32 %v1107, %v1176
        %v1193 = vadd.f32 %v1108, %v1177
        %v1194 = vadd.f32 %v1109, %v1178
        %v1195 = vadd.f32 %v1110, %v1179
        %v1196 = vadd.f32 %v1111, %v1180
        %v1197 = vadd.f32 %v1112, %v1181
        %s1198 = scalar_lea.vmem %s398, 896 [#allocation9]
        %v1199 = vld [vmem:[%s1198] sm:$0xff]
        %v1200 = vld [vmem:[%s1198 + $0x8] sm:$0xff]
        %v1201 = vld [vmem:[%s1198 + $0x10] sm:$0xff]
        %v1202 = vld [vmem:[%s1198 + $0x18] sm:$0xff]
        %v1203 = vld [vmem:[%s1198 + $0x20] sm:$0xff]
        %v1204 = vld [vmem:[%s1198 + $0x28] sm:$0xff]
        %v1205 = vld [vmem:[%s1198 + $0x30] sm:$0xff]
        %v1206 = vld [vmem:[%s1198 + $0x38] sm:$0xff]
        %v1207 = vld [vmem:[%s1198 + $0x40] sm:$0xff]
        %v1208 = vld [vmem:[%s1198 + $0x48] sm:$0xff]
        %v1209 = vld [vmem:[%s1198 + $0x50] sm:$0xff]
        %v1210 = vld [vmem:[%s1198 + $0x58] sm:$0xff]
        %v1211 = vld [vmem:[%s1198 + $0x60] sm:$0xff]
        %v1212 = vld [vmem:[%s1198 + $0x68] sm:$0xff]
        %v1213 = vld [vmem:[%s1198 + $0x70] sm:$0xff]
        %v1214 = vld [vmem:[%s1198 + $0x78] sm:$0xff]
        %s1215 = sld [smem:[#allocation5 + $0x380]]
        %v1216 = vstv %s1215
        %v1217 = vmul.f32 %v1199, %v1216
        %v1218 = vmul.f32 %v1200, %v1216
        %v1219 = vmul.f32 %v1201, %v1216
        %v1220 = vmul.f32 %v1202, %v1216
        %v1221 = vmul.f32 %v1203, %v1216
        %v1222 = vmul.f32 %v1204, %v1216
        %v1223 = vmul.f32 %v1205, %v1216
        %v1224 = vmul.f32 %v1206, %v1216
        %v1225 = vmul.f32 %v1207, %v1216
        %v1226 = vmul.f32 %v1208, %v1216
        %v1227 = vmul.f32 %v1209, %v1216
        %v1228 = vmul.f32 %v1210, %v1216
        %v1229 = vmul.f32 %v1211, %v1216
        %v1230 = vmul.f32 %v1212, %v1216
        %v1231 = vmul.f32 %v1213, %v1216
        %v1232 = vmul.f32 %v1214, %v1216
        %v1233 = vadd.f32 %v1148, %v1217
        %v1234 = vadd.f32 %v1149, %v1218
        %v1235 = vadd.f32 %v1150, %v1219
        %v1236 = vadd.f32 %v1151, %v1220
        %v1237 = vadd.f32 %v1152, %v1221
        %v1238 = vadd.f32 %v1153, %v1222
        %v1239 = vadd.f32 %v1154, %v1223
        %v1240 = vadd.f32 %v1155, %v1224
        %v1241 = vadd.f32 %v1156, %v1225
        %v1242 = vadd.f32 %v1157, %v1226
        %v1243 = vadd.f32 %v1158, %v1227
        %v1244 = vadd.f32 %v1159, %v1228
        %v1245 = vadd.f32 %v1160, %v1229
        %v1246 = vadd.f32 %v1161, %v1230
        %v1247 = vadd.f32 %v1162, %v1231
        %v1248 = vadd.f32 %v1163, %v1232
        %s1249 = sld [smem:[#allocation5 + $0x381]]
        %v1250 = vstv %s1249
        %v1251 = vmul.f32 %v1199, %v1250
        %v1252 = vmul.f32 %v1200, %v1250
        %v1253 = vmul.f32 %v1201, %v1250
        %v1254 = vmul.f32 %v1202, %v1250
        %v1255 = vmul.f32 %v1203, %v1250
        %v1256 = vmul.f32 %v1204, %v1250
        %v1257 = vmul.f32 %v1205, %v1250
        %v1258 = vmul.f32 %v1206, %v1250
        %v1259 = vmul.f32 %v1207, %v1250
        %v1260 = vmul.f32 %v1208, %v1250
        %v1261 = vmul.f32 %v1209, %v1250
        %v1262 = vmul.f32 %v1210, %v1250
        %v1263 = vmul.f32 %v1211, %v1250
        %v1264 = vmul.f32 %v1212, %v1250
        %v1265 = vmul.f32 %v1213, %v1250
        %v1266 = vmul.f32 %v1214, %v1250
        %v1267 = vadd.f32 %v1182, %v1251
        %v1268 = vadd.f32 %v1183, %v1252
        %v1269 = vadd.f32 %v1184, %v1253
        %v1270 = vadd.f32 %v1185, %v1254
        %v1271 = vadd.f32 %v1186, %v1255
        %v1272 = vadd.f32 %v1187, %v1256
        %v1273 = vadd.f32 %v1188, %v1257
        %v1274 = vadd.f32 %v1189, %v1258
        %v1275 = vadd.f32 %v1190, %v1259
        %v1276 = vadd.f32 %v1191, %v1260
        %v1277 = vadd.f32 %v1192, %v1261
        %v1278 = vadd.f32 %v1193, %v1262
        %v1279 = vadd.f32 %v1194, %v1263
        %v1280 = vadd.f32 %v1195, %v1264
        %v1281 = vadd.f32 %v1196, %v1265
        %v1282 = vadd.f32 %v1197, %v1266
        %1284 = vset.pattern.permute.xlu0 0
        %1285 = vperm.xlu0 %1284, %v603
        %v1286 = vpop.permute.xlu0 %1285
        %1289 = vset.pattern.permute.xlu0 0
        %1290 = vperm.xlu0 %1289, %v604
        %v1291 = vpop.permute.xlu0 %1290
        %1294 = vset.pattern.permute.xlu0 0
        %1295 = vperm.xlu0 %1294, %v605
        %v1296 = vpop.permute.xlu0 %1295
        %1299 = vset.pattern.permute.xlu0 0
        %1300 = vperm.xlu0 %1299, %v606
        %v1301 = vpop.permute.xlu0 %1300
        %1304 = vset.pattern.permute.xlu0 0
        %1305 = vperm.xlu0 %1304, %v607
        %v1306 = vpop.permute.xlu0 %1305
        %1309 = vset.pattern.permute.xlu0 0
        %1310 = vperm.xlu0 %1309, %v608
        %v1311 = vpop.permute.xlu0 %1310
        %1314 = vset.pattern.permute.xlu0 0
        %1315 = vperm.xlu0 %1314, %v609
        %v1316 = vpop.permute.xlu0 %1315
        %1319 = vset.pattern.permute.xlu0 0
        %1320 = vperm.xlu0 %1319, %v610
        %v1321 = vpop.permute.xlu0 %1320
        %1324 = vset.pattern.permute.xlu0 0
        %1325 = vperm.xlu0 %1324, %v611
        %v1326 = vpop.permute.xlu0 %1325
        %1329 = vset.pattern.permute.xlu0 0
        %1330 = vperm.xlu0 %1329, %v612
        %v1331 = vpop.permute.xlu0 %1330
        %1334 = vset.pattern.permute.xlu0 0
        %1335 = vperm.xlu0 %1334, %v613
        %v1336 = vpop.permute.xlu0 %1335
        %1339 = vset.pattern.permute.xlu0 0
        %1340 = vperm.xlu0 %1339, %v614
        %v1341 = vpop.permute.xlu0 %1340
        %1344 = vset.pattern.permute.xlu0 0
        %1345 = vperm.xlu0 %1344, %v615
        %v1346 = vpop.permute.xlu0 %1345
        %1349 = vset.pattern.permute.xlu0 0
        %1350 = vperm.xlu0 %1349, %v616
        %v1351 = vpop.permute.xlu0 %1350
        %1354 = vset.pattern.permute.xlu0 0
        %1355 = vperm.xlu0 %1354, %v617
        %v1356 = vpop.permute.xlu0 %1355
        %1359 = vset.pattern.permute.xlu0 0
        %1360 = vperm.xlu0 %1359, %v618
        %v1361 = vpop.permute.xlu0 %1360
        %v1363 = vlaneseq
        %v1364 = vshrl.u32 %v1363, 7
        %v1365 = vsub.s32 0, %v1364
        %v1366 = vrot.slane %v619, %v1365
        %v1367 = vadd.f32 %v1286, %v1366
        %v1368 = vadd.f32 %v1291, %v1366
        %v1369 = vadd.f32 %v1296, %v1366
        %v1370 = vadd.f32 %v1301, %v1366
        %v1371 = vadd.f32 %v1306, %v1366
        %v1372 = vadd.f32 %v1311, %v1366
        %v1373 = vadd.f32 %v1316, %v1366
        %v1374 = vadd.f32 %v1321, %v1366
        %v1375 = vadd.f32 %v1326, %v1366
        %v1376 = vadd.f32 %v1331, %v1366
        %v1377 = vadd.f32 %v1336, %v1366
        %v1378 = vadd.f32 %v1341, %v1366
        %v1379 = vadd.f32 %v1346, %v1366
        %v1380 = vadd.f32 %v1351, %v1366
        %v1381 = vadd.f32 %v1356, %v1366
        %v1382 = vadd.f32 %v1361, %v1366
        %v1383 = vadd.f32 %v1367, %v1233
        %v1384 = vadd.f32 %v1368, %v1234
        %v1385 = vadd.f32 %v1369, %v1235
        %v1386 = vadd.f32 %v1370, %v1236
        %v1387 = vadd.f32 %v1371, %v1237
        %v1388 = vadd.f32 %v1372, %v1238
        %v1389 = vadd.f32 %v1373, %v1239
        %v1390 = vadd.f32 %v1374, %v1240
        %v1391 = vadd.f32 %v1375, %v1241
        %v1392 = vadd.f32 %v1376, %v1242
        %v1393 = vadd.f32 %v1377, %v1243
        %v1394 = vadd.f32 %v1378, %v1244
        %v1395 = vadd.f32 %v1379, %v1245
        %v1396 = vadd.f32 %v1380, %v1246
        %v1397 = vadd.f32 %v1381, %v1247
        %v1398 = vadd.f32 %v1382, %v1248
        %v1399 = vmul.f32 %v1383, 0.2
        %v1400 = vmul.f32 %v1384, 0.2
        %v1401 = vmul.f32 %v1385, 0.2
        %v1402 = vmul.f32 %v1386, 0.2
        %v1403 = vmul.f32 %v1387, 0.2
        %v1404 = vmul.f32 %v1388, 0.2
        %v1405 = vmul.f32 %v1389, 0.2
        %v1406 = vmul.f32 %v1390, 0.2
        %v1407 = vmul.f32 %v1391, 0.2
        %v1408 = vmul.f32 %v1392, 0.2
        %v1409 = vmul.f32 %v1393, 0.2
        %v1410 = vmul.f32 %v1394, 0.2
        %v1411 = vmul.f32 %v1395, 0.2
        %v1412 = vmul.f32 %v1396, 0.2
        %v1413 = vmul.f32 %v1397, 0.2
        %v1414 = vmul.f32 %v1398, 0.2
        %v1415 = vmax.f32 %v1383, %v1399
        %v1416 = vmax.f32 %v1384, %v1400
        %v1417 = vmax.f32 %v1385, %v1401
        %v1418 = vmax.f32 %v1386, %v1402
        %v1419 = vmax.f32 %v1387, %v1403
        %v1420 = vmax.f32 %v1388, %v1404
        %v1421 = vmax.f32 %v1389, %v1405
        %v1422 = vmax.f32 %v1390, %v1406
        %v1423 = vmax.f32 %v1391, %v1407
        %v1424 = vmax.f32 %v1392, %v1408
        %v1425 = vmax.f32 %v1393, %v1409
        %v1426 = vmax.f32 %v1394, %v1410
        %v1427 = vmax.f32 %v1395, %v1411
        %v1428 = vmax.f32 %v1396, %v1412
        %v1429 = vmax.f32 %v1397, %v1413
        %v1430 = vmax.f32 %v1398, %v1414
        %v1431 = vsel %vm587, %v1415, -3e+38
        %v1432 = vsel %vm588, %v1416, -3e+38
        %v1433 = vsel %vm589, %v1417, -3e+38
        %v1434 = vsel %vm590, %v1418, -3e+38
        %v1435 = vsel %vm591, %v1419, -3e+38
        %v1436 = vsel %vm592, %v1420, -3e+38
        %v1437 = vsel %vm593, %v1421, -3e+38
        %v1438 = vsel %vm594, %v1422, -3e+38
        %v1439 = vsel %vm595, %v1423, -3e+38
        %v1440 = vsel %vm596, %v1424, -3e+38
        %v1441 = vsel %vm597, %v1425, -3e+38
        %v1442 = vsel %vm598, %v1426, -3e+38
        %v1443 = vsel %vm599, %v1427, -3e+38
        %v1444 = vsel %vm600, %v1428, -3e+38
        %v1445 = vsel %vm601, %v1429, -3e+38
        %v1446 = vsel %vm602, %v1430, -3e+38
        %v1447 = vld [vmem:[#allocation2] sm:$0xff]
        %v1448 = vld [vmem:[#allocation2 + $0x8] sm:$0xff]
        %v1449 = vld [vmem:[#allocation2 + $0x10] sm:$0xff]
        %v1450 = vld [vmem:[#allocation2 + $0x18] sm:$0xff]
        %v1451 = vld [vmem:[#allocation2 + $0x20] sm:$0xff]
        %v1452 = vld [vmem:[#allocation2 + $0x28] sm:$0xff]
        %v1453 = vld [vmem:[#allocation2 + $0x30] sm:$0xff]
        %v1454 = vld [vmem:[#allocation2 + $0x38] sm:$0xff]
        %v1455 = vld [vmem:[#allocation2 + $0x40] sm:$0xff]
        %v1456 = vld [vmem:[#allocation2 + $0x48] sm:$0xff]
        %v1457 = vld [vmem:[#allocation2 + $0x50] sm:$0xff]
        %v1458 = vld [vmem:[#allocation2 + $0x58] sm:$0xff]
        %v1459 = vld [vmem:[#allocation2 + $0x60] sm:$0xff]
        %v1460 = vld [vmem:[#allocation2 + $0x68] sm:$0xff]
        %v1461 = vld [vmem:[#allocation2 + $0x70] sm:$0xff]
        %v1462 = vld [vmem:[#allocation2 + $0x78] sm:$0xff]
        %1463 = vmax.xlane.f32.xlu0 %v1431
        %v1464 = vpop.xlane.xlu0 %1463
        %1465 = vmax.xlane.f32.xlu0 %v1432
        %v1466 = vpop.xlane.xlu0 %1465
        %1467 = vmax.xlane.f32.xlu0 %v1433
        %v1468 = vpop.xlane.xlu0 %1467
        %1469 = vmax.xlane.f32.xlu0 %v1434
        %v1470 = vpop.xlane.xlu0 %1469
        %1471 = vmax.xlane.f32.xlu0 %v1435
        %v1472 = vpop.xlane.xlu0 %1471
        %1473 = vmax.xlane.f32.xlu0 %v1436
        %v1474 = vpop.xlane.xlu0 %1473
        %1475 = vmax.xlane.f32.xlu0 %v1437
        %v1476 = vpop.xlane.xlu0 %1475
        %1477 = vmax.xlane.f32.xlu0 %v1438
        %v1478 = vpop.xlane.xlu0 %1477
        %1479 = vmax.xlane.f32.xlu0 %v1439
        %v1480 = vpop.xlane.xlu0 %1479
        %1481 = vmax.xlane.f32.xlu0 %v1440
        %v1482 = vpop.xlane.xlu0 %1481
        %1483 = vmax.xlane.f32.xlu0 %v1441
        %v1484 = vpop.xlane.xlu0 %1483
        %1485 = vmax.xlane.f32.xlu0 %v1442
        %v1486 = vpop.xlane.xlu0 %1485
        %1487 = vmax.xlane.f32.xlu0 %v1443
        %v1488 = vpop.xlane.xlu0 %1487
        %1489 = vmax.xlane.f32.xlu0 %v1444
        %v1490 = vpop.xlane.xlu0 %1489
        %1491 = vmax.xlane.f32.xlu0 %v1445
        %v1492 = vpop.xlane.xlu0 %1491
        %1493 = vmax.xlane.f32.xlu0 %v1446
        %v1494 = vpop.xlane.xlu0 %1493
        %v1495 = vmax.f32 %v1447, %v1464
        %v1496 = vmax.f32 %v1448, %v1466
        %v1497 = vmax.f32 %v1449, %v1468
        %v1498 = vmax.f32 %v1450, %v1470
        %v1499 = vmax.f32 %v1451, %v1472
        %v1500 = vmax.f32 %v1452, %v1474
        %v1501 = vmax.f32 %v1453, %v1476
        %v1502 = vmax.f32 %v1454, %v1478
        %v1503 = vmax.f32 %v1455, %v1480
        %v1504 = vmax.f32 %v1456, %v1482
        %v1505 = vmax.f32 %v1457, %v1484
        %v1506 = vmax.f32 %v1458, %v1486
        %v1507 = vmax.f32 %v1459, %v1488
        %v1508 = vmax.f32 %v1460, %v1490
        %v1509 = vmax.f32 %v1461, %v1492
        %v1510 = vmax.f32 %v1462, %v1494
        %v1511 = vsub.f32 %v1447, %v1495
        %v1512 = vsub.f32 %v1448, %v1496
        %v1513 = vsub.f32 %v1449, %v1497
        %v1514 = vsub.f32 %v1450, %v1498
        %v1515 = vsub.f32 %v1451, %v1499
        %v1516 = vsub.f32 %v1452, %v1500
        %v1517 = vsub.f32 %v1453, %v1501
        %v1518 = vsub.f32 %v1454, %v1502
        %v1519 = vsub.f32 %v1455, %v1503
        %v1520 = vsub.f32 %v1456, %v1504
        %v1521 = vsub.f32 %v1457, %v1505
        %v1522 = vsub.f32 %v1458, %v1506
        %v1523 = vsub.f32 %v1459, %v1507
        %v1524 = vsub.f32 %v1460, %v1508
        %v1525 = vsub.f32 %v1461, %v1509
        %v1526 = vsub.f32 %v1462, %v1510
        %v1527 = vmul.f32 %v1511, 1.442695
        %v1528 = vpow.pop %v1527
        %v1529 = vmul.f32 %v1512, 1.442695
        %v1530 = vpow.pop %v1529
        %v1531 = vmul.f32 %v1513, 1.442695
        %v1532 = vpow.pop %v1531
        %v1533 = vmul.f32 %v1514, 1.442695
        %v1534 = vpow.pop %v1533
        %v1535 = vmul.f32 %v1515, 1.442695
        %v1536 = vpow.pop %v1535
        %v1537 = vmul.f32 %v1516, 1.442695
        %v1538 = vpow.pop %v1537
        %v1539 = vmul.f32 %v1517, 1.442695
        %v1540 = vpow.pop %v1539
        %v1541 = vmul.f32 %v1518, 1.442695
        %v1542 = vpow.pop %v1541
        %v1543 = vmul.f32 %v1519, 1.442695
        %v1544 = vpow.pop %v1543
        %v1545 = vmul.f32 %v1520, 1.442695
        %v1546 = vpow.pop %v1545
        %v1547 = vmul.f32 %v1521, 1.442695
        %v1548 = vpow.pop %v1547
        %v1549 = vmul.f32 %v1522, 1.442695
        %v1550 = vpow.pop %v1549
        %v1551 = vmul.f32 %v1523, 1.442695
        %v1552 = vpow.pop %v1551
        %v1553 = vmul.f32 %v1524, 1.442695
        %v1554 = vpow.pop %v1553
        %v1555 = vmul.f32 %v1525, 1.442695
        %v1556 = vpow.pop %v1555
        %v1557 = vmul.f32 %v1526, 1.442695
        %v1558 = vpow.pop %v1557
        %1560 = vset.pattern.permute.xlu0 0
        %1561 = vperm.xlu0 %1560, %v1495
        %v1562 = vpop.permute.xlu0 %1561
        %1565 = vset.pattern.permute.xlu0 0
        %1566 = vperm.xlu0 %1565, %v1496
        %v1567 = vpop.permute.xlu0 %1566
        %1570 = vset.pattern.permute.xlu0 0
        %1571 = vperm.xlu0 %1570, %v1497
        %v1572 = vpop.permute.xlu0 %1571
        %1575 = vset.pattern.permute.xlu0 0
        %1576 = vperm.xlu0 %1575, %v1498
        %v1577 = vpop.permute.xlu0 %1576
        %1580 = vset.pattern.permute.xlu0 0
        %1581 = vperm.xlu0 %1580, %v1499
        %v1582 = vpop.permute.xlu0 %1581
        %1585 = vset.pattern.permute.xlu0 0
        %1586 = vperm.xlu0 %1585, %v1500
        %v1587 = vpop.permute.xlu0 %1586
        %1590 = vset.pattern.permute.xlu0 0
        %1591 = vperm.xlu0 %1590, %v1501
        %v1592 = vpop.permute.xlu0 %1591
        %1595 = vset.pattern.permute.xlu0 0
        %1596 = vperm.xlu0 %1595, %v1502
        %v1597 = vpop.permute.xlu0 %1596
        %1600 = vset.pattern.permute.xlu0 0
        %1601 = vperm.xlu0 %1600, %v1503
        %v1602 = vpop.permute.xlu0 %1601
        %1605 = vset.pattern.permute.xlu0 0
        %1606 = vperm.xlu0 %1605, %v1504
        %v1607 = vpop.permute.xlu0 %1606
        %1610 = vset.pattern.permute.xlu0 0
        %1611 = vperm.xlu0 %1610, %v1505
        %v1612 = vpop.permute.xlu0 %1611
        %1615 = vset.pattern.permute.xlu0 0
        %1616 = vperm.xlu0 %1615, %v1506
        %v1617 = vpop.permute.xlu0 %1616
        %1620 = vset.pattern.permute.xlu0 0
        %1621 = vperm.xlu0 %1620, %v1507
        %v1622 = vpop.permute.xlu0 %1621
        %1625 = vset.pattern.permute.xlu0 0
        %1626 = vperm.xlu0 %1625, %v1508
        %v1627 = vpop.permute.xlu0 %1626
        %1630 = vset.pattern.permute.xlu0 0
        %1631 = vperm.xlu0 %1630, %v1509
        %v1632 = vpop.permute.xlu0 %1631
        %1635 = vset.pattern.permute.xlu0 0
        %1636 = vperm.xlu0 %1635, %v1510
        %v1637 = vpop.permute.xlu0 %1636
        %v1639 = vsub.f32 %v1431, %v1562
        %v1640 = vsub.f32 %v1432, %v1567
        %v1641 = vsub.f32 %v1433, %v1572
        %v1642 = vsub.f32 %v1434, %v1577
        %v1643 = vsub.f32 %v1435, %v1582
        %v1644 = vsub.f32 %v1436, %v1587
        %v1645 = vsub.f32 %v1437, %v1592
        %v1646 = vsub.f32 %v1438, %v1597
        %v1647 = vsub.f32 %v1439, %v1602
        %v1648 = vsub.f32 %v1440, %v1607
        %v1649 = vsub.f32 %v1441, %v1612
        %v1650 = vsub.f32 %v1442, %v1617
        %v1651 = vsub.f32 %v1443, %v1622
        %v1652 = vsub.f32 %v1444, %v1627
        %v1653 = vsub.f32 %v1445, %v1632
        %v1654 = vsub.f32 %v1446, %v1637
        %v1655 = vmul.f32 %v1639, 1.442695
        %v1656 = vpow.pop %v1655
        %v1657 = vmul.f32 %v1640, 1.442695
        %v1658 = vpow.pop %v1657
        %v1659 = vmul.f32 %v1641, 1.442695
        %v1660 = vpow.pop %v1659
        %v1661 = vmul.f32 %v1642, 1.442695
        %v1662 = vpow.pop %v1661
        %v1663 = vmul.f32 %v1643, 1.442695
        %v1664 = vpow.pop %v1663
        %v1665 = vmul.f32 %v1644, 1.442695
        %v1666 = vpow.pop %v1665
        %v1667 = vmul.f32 %v1645, 1.442695
        %v1668 = vpow.pop %v1667
        %v1669 = vmul.f32 %v1646, 1.442695
        %v1670 = vpow.pop %v1669
        %v1671 = vmul.f32 %v1647, 1.442695
        %v1672 = vpow.pop %v1671
        %v1673 = vmul.f32 %v1648, 1.442695
        %v1674 = vpow.pop %v1673
        %v1675 = vmul.f32 %v1649, 1.442695
        %v1676 = vpow.pop %v1675
        %v1677 = vmul.f32 %v1650, 1.442695
        %v1678 = vpow.pop %v1677
        %v1679 = vmul.f32 %v1651, 1.442695
        %v1680 = vpow.pop %v1679
        %v1681 = vmul.f32 %v1652, 1.442695
        %v1682 = vpow.pop %v1681
        %v1683 = vmul.f32 %v1653, 1.442695
        %v1684 = vpow.pop %v1683
        %v1685 = vmul.f32 %v1654, 1.442695
        %v1686 = vpow.pop %v1685
        %v1687 = vld [vmem:[#allocation3] sm:$0xff]
        %v1688 = vld [vmem:[#allocation3 + $0x8] sm:$0xff]
        %v1689 = vld [vmem:[#allocation3 + $0x10] sm:$0xff]
        %v1690 = vld [vmem:[#allocation3 + $0x18] sm:$0xff]
        %v1691 = vld [vmem:[#allocation3 + $0x20] sm:$0xff]
        %v1692 = vld [vmem:[#allocation3 + $0x28] sm:$0xff]
        %v1693 = vld [vmem:[#allocation3 + $0x30] sm:$0xff]
        %v1694 = vld [vmem:[#allocation3 + $0x38] sm:$0xff]
        %v1695 = vld [vmem:[#allocation3 + $0x40] sm:$0xff]
        %v1696 = vld [vmem:[#allocation3 + $0x48] sm:$0xff]
        %v1697 = vld [vmem:[#allocation3 + $0x50] sm:$0xff]
        %v1698 = vld [vmem:[#allocation3 + $0x58] sm:$0xff]
        %v1699 = vld [vmem:[#allocation3 + $0x60] sm:$0xff]
        %v1700 = vld [vmem:[#allocation3 + $0x68] sm:$0xff]
        %v1701 = vld [vmem:[#allocation3 + $0x70] sm:$0xff]
        %v1702 = vld [vmem:[#allocation3 + $0x78] sm:$0xff]
        %v1703 = vmul.f32 %v1528, %v1687
        %v1704 = vmul.f32 %v1530, %v1688
        %v1705 = vmul.f32 %v1532, %v1689
        %v1706 = vmul.f32 %v1534, %v1690
        %v1707 = vmul.f32 %v1536, %v1691
        %v1708 = vmul.f32 %v1538, %v1692
        %v1709 = vmul.f32 %v1540, %v1693
        %v1710 = vmul.f32 %v1542, %v1694
        %v1711 = vmul.f32 %v1544, %v1695
        %v1712 = vmul.f32 %v1546, %v1696
        %v1713 = vmul.f32 %v1548, %v1697
        %v1714 = vmul.f32 %v1550, %v1698
        %v1715 = vmul.f32 %v1552, %v1699
        %v1716 = vmul.f32 %v1554, %v1700
        %v1717 = vmul.f32 %v1556, %v1701
        %v1718 = vmul.f32 %v1558, %v1702
        %1719 = vadd.xlane.f32.xlu0 %v1656
        %v1720 = vpop.xlane.xlu0 %1719
        %1721 = vadd.xlane.f32.xlu0 %v1658
        %v1722 = vpop.xlane.xlu0 %1721
        %1723 = vadd.xlane.f32.xlu0 %v1660
        %v1724 = vpop.xlane.xlu0 %1723
        %1725 = vadd.xlane.f32.xlu0 %v1662
        %v1726 = vpop.xlane.xlu0 %1725
        %1727 = vadd.xlane.f32.xlu0 %v1664
        %v1728 = vpop.xlane.xlu0 %1727
        %1729 = vadd.xlane.f32.xlu0 %v1666
        %v1730 = vpop.xlane.xlu0 %1729
        %1731 = vadd.xlane.f32.xlu0 %v1668
        %v1732 = vpop.xlane.xlu0 %1731
        %1733 = vadd.xlane.f32.xlu0 %v1670
        %v1734 = vpop.xlane.xlu0 %1733
        %1735 = vadd.xlane.f32.xlu0 %v1672
        %v1736 = vpop.xlane.xlu0 %1735
        %1737 = vadd.xlane.f32.xlu0 %v1674
        %v1738 = vpop.xlane.xlu0 %1737
        %1739 = vadd.xlane.f32.xlu0 %v1676
        %v1740 = vpop.xlane.xlu0 %1739
        %1741 = vadd.xlane.f32.xlu0 %v1678
        %v1742 = vpop.xlane.xlu0 %1741
        %1743 = vadd.xlane.f32.xlu0 %v1680
        %v1744 = vpop.xlane.xlu0 %1743
        %1745 = vadd.xlane.f32.xlu0 %v1682
        %v1746 = vpop.xlane.xlu0 %1745
        %1747 = vadd.xlane.f32.xlu0 %v1684
        %v1748 = vpop.xlane.xlu0 %1747
        %1749 = vadd.xlane.f32.xlu0 %v1686
        %v1750 = vpop.xlane.xlu0 %1749
        %v1751 = vadd.f32 %v1703, %v1720
        %v1752 = vadd.f32 %v1704, %v1722
        %v1753 = vadd.f32 %v1705, %v1724
        %v1754 = vadd.f32 %v1706, %v1726
        %v1755 = vadd.f32 %v1707, %v1728
        %v1756 = vadd.f32 %v1708, %v1730
        %v1757 = vadd.f32 %v1709, %v1732
        %v1758 = vadd.f32 %v1710, %v1734
        %v1759 = vadd.f32 %v1711, %v1736
        %v1760 = vadd.f32 %v1712, %v1738
        %v1761 = vadd.f32 %v1713, %v1740
        %v1762 = vadd.f32 %v1714, %v1742
        %v1763 = vadd.f32 %v1715, %v1744
        %v1764 = vadd.f32 %v1716, %v1746
        %v1765 = vadd.f32 %v1717, %v1748
        %v1766 = vadd.f32 %v1718, %v1750
        %vm1767 = vcmask 7168
        %1768 = vst.msk [vmem:[#allocation3] sm:$0xff] %vm1767, %v1751
        %1769 = vst.msk [vmem:[#allocation3 + $0x8] sm:$0xff] %vm1767, %v1752
        %1770 = vst.msk [vmem:[#allocation3 + $0x10] sm:$0xff] %vm1767, %v1753
        %1771 = vst.msk [vmem:[#allocation3 + $0x18] sm:$0xff] %vm1767, %v1754
        %1772 = vst.msk [vmem:[#allocation3 + $0x20] sm:$0xff] %vm1767, %v1755
        %1773 = vst.msk [vmem:[#allocation3 + $0x28] sm:$0xff] %vm1767, %v1756
        %1774 = vst.msk [vmem:[#allocation3 + $0x30] sm:$0xff] %vm1767, %v1757
        %1775 = vst.msk [vmem:[#allocation3 + $0x38] sm:$0xff] %vm1767, %v1758
        %1776 = vst.msk [vmem:[#allocation3 + $0x40] sm:$0xff] %vm1767, %v1759
        %1777 = vst.msk [vmem:[#allocation3 + $0x48] sm:$0xff] %vm1767, %v1760
        %1778 = vst.msk [vmem:[#allocation3 + $0x50] sm:$0xff] %vm1767, %v1761
        %1779 = vst.msk [vmem:[#allocation3 + $0x58] sm:$0xff] %vm1767, %v1762
        %1780 = vst.msk [vmem:[#allocation3 + $0x60] sm:$0xff] %vm1767, %v1763
        %1781 = vst.msk [vmem:[#allocation3 + $0x68] sm:$0xff] %vm1767, %v1764
        %1782 = vst.msk [vmem:[#allocation3 + $0x70] sm:$0xff] %vm1767, %v1765
        %1783 = vst.msk [vmem:[#allocation3 + $0x78] sm:$0xff] %vm1767, %v1766
        %1784 = vst.msk [vmem:[#allocation2] sm:$0xff] %vm1767, %v1495
        %1785 = vst.msk [vmem:[#allocation2 + $0x8] sm:$0xff] %vm1767, %v1496
        %1786 = vst.msk [vmem:[#allocation2 + $0x10] sm:$0xff] %vm1767, %v1497
        %1787 = vst.msk [vmem:[#allocation2 + $0x18] sm:$0xff] %vm1767, %v1498
        %1788 = vst.msk [vmem:[#allocation2 + $0x20] sm:$0xff] %vm1767, %v1499
        %1789 = vst.msk [vmem:[#allocation2 + $0x28] sm:$0xff] %vm1767, %v1500
        %1790 = vst.msk [vmem:[#allocation2 + $0x30] sm:$0xff] %vm1767, %v1501
        %1791 = vst.msk [vmem:[#allocation2 + $0x38] sm:$0xff] %vm1767, %v1502
        %1792 = vst.msk [vmem:[#allocation2 + $0x40] sm:$0xff] %vm1767, %v1503
        %1793 = vst.msk [vmem:[#allocation2 + $0x48] sm:$0xff] %vm1767, %v1504
        %1794 = vst.msk [vmem:[#allocation2 + $0x50] sm:$0xff] %vm1767, %v1505
        %1795 = vst.msk [vmem:[#allocation2 + $0x58] sm:$0xff] %vm1767, %v1506
        %1796 = vst.msk [vmem:[#allocation2 + $0x60] sm:$0xff] %vm1767, %v1507
        %1797 = vst.msk [vmem:[#allocation2 + $0x68] sm:$0xff] %vm1767, %v1508
        %1798 = vst.msk [vmem:[#allocation2 + $0x70] sm:$0xff] %vm1767, %v1509
        %1799 = vst.msk [vmem:[#allocation2 + $0x78] sm:$0xff] %vm1767, %v1510
        %v1800 = vpack.c.bf16 %v1658, %v1656
        %v1801 = vpack.c.bf16 %v1662, %v1660
        %v1802 = vpack.c.bf16 %v1666, %v1664
        %v1803 = vpack.c.bf16 %v1670, %v1668
        %v1804 = vpack.c.bf16 %v1674, %v1672
        %v1805 = vpack.c.bf16 %v1678, %v1676
        %v1806 = vpack.c.bf16 %v1682, %v1680
        %v1807 = vpack.c.bf16 %v1686, %v1684
        %v1824 = vunpack.c.l.b16 %v620
        %v1825 = vunpack.c.l.b16 %v621
        %v1826 = vunpack.c.l.b16 %v622
        %v1827 = vunpack.c.l.b16 %v623
        %v1828 = vunpack.c.l.b16 %v624
        %v1829 = vunpack.c.l.b16 %v625
        %v1830 = vunpack.c.l.b16 %v626
        %v1831 = vunpack.c.l.b16 %v627
        %v1832 = vunpack.c.l.b16 %v628
        %v1833 = vunpack.c.l.b16 %v629
        %v1834 = vunpack.c.l.b16 %v630
        %v1835 = vunpack.c.l.b16 %v631
        %v1836 = vunpack.c.l.b16 %v632
        %v1837 = vunpack.c.l.b16 %v633
        %v1838 = vunpack.c.l.b16 %v634
        %v1839 = vunpack.c.l.b16 %v635
        %v1840 = vpack.c.b16 %v1825, %v1824
        %v1841 = vpack.c.b16 %v1827, %v1826
        %v1842 = vpack.c.b16 %v1829, %v1828
        %v1843 = vpack.c.b16 %v1831, %v1830
        %v1844 = vpack.c.b16 %v1833, %v1832
        %v1845 = vpack.c.b16 %v1835, %v1834
        %v1846 = vpack.c.b16 %v1837, %v1836
        %v1847 = vpack.c.b16 %v1839, %v1838
        %1856 = vmatprep.subr.bf16.mxu0 0
        %1857 = vmatpush1.bf16.msra.mxu0 %v1840
        %1858 = vmatprep.subr.bf16.mxu0 0
        %1859 = vmatpush1.bf16.msra.mxu0 %v1841
        %1860 = vmatprep.subr.bf16.mxu0 0
        %1861 = vmatpush1.bf16.msra.mxu0 %v1842
        %1862 = vmatprep.subr.bf16.mxu0 0
        %1863 = vmatpush1.bf16.msra.mxu0 %v1843
        %1864 = vmatprep.subr.bf16.mxu0 0
        %1865 = vmatpush1.bf16.msra.mxu0 %v1844
        %1866 = vmatprep.subr.bf16.mxu0 0
        %1867 = vmatpush1.bf16.msra.mxu0 %v1845
        %1868 = vmatprep.subr.bf16.mxu0 0
        %1869 = vmatpush1.bf16.msra.mxu0 %v1846
        %1870 = vmatprep.subr.bf16.mxu0 0
        %1871 = vmatpush1.bf16.msra.mxu0 %v1847
        %1872 = vmatprep.subr.bf16.mxu0 0
        %1873 = vmatpush1.bf16.msra.mxu0 0
        %1874 = vmatprep.subr.bf16.mxu0 0
        %1875 = vmatpush1.bf16.msra.mxu0 0
        %1876 = vmatprep.subr.bf16.mxu0 0
        %1877 = vmatpush1.bf16.msra.mxu0 0
        %1878 = vmatprep.subr.bf16.mxu0 0
        %1879 = vmatpush1.bf16.msra.mxu0 0
        %1880 = vmatprep.subr.bf16.mxu0 0
        %1881 = vmatpush1.bf16.msra.mxu0 0
        %1882 = vmatprep.subr.bf16.mxu0 0
        %1883 = vmatpush1.bf16.msra.mxu0 0
        %1884 = vmatprep.subr.bf16.mxu0 0
        %1885 = vmatpush1.bf16.msra.mxu0 0
        %1886 = vmatprep.subr.bf16.mxu0 0
        %1887 = vmatpush1.bf16.msra.mxu0 0
        %1888 = vmatprep.mubr.bf16.mxu0 0
        %1889 = vmatmul.mubr.bf16.gmra.mrb[0].mxu0 %v1800
        %v1890 = vpop.f32.mrb[0].mxu0
        %v1891 = vadd.f32 0.0, %v1890
        %v1892 = vpop.f32.mrb[0].mxu0
        %v1893 = vpop.f32.mrb[0].mxu0
        %v1894 = vadd.f32 0.0, %v1893
        %v1895 = vpop.f32.mrb[0].mxu0
        %1896 = vmatprep.mubr.bf16.mxu0 0
        %1897 = vmatmul.mubr.bf16.gmra.mrb[0].mxu0 %v1801
        %v1898 = vpop.f32.mrb[0].mxu0
        %v1899 = vadd.f32 0.0, %v1898
        %v1900 = vpop.f32.mrb[0].mxu0
        %v1901 = vpop.f32.mrb[0].mxu0
        %v1902 = vadd.f32 0.0, %v1901
        %v1903 = vpop.f32.mrb[0].mxu0
        %1904 = vmatprep.mubr.bf16.mxu0 0
        %1905 = vmatmul.mubr.bf16.gmra.mrb[0].mxu0 %v1802
        %v1906 = vpop.f32.mrb[0].mxu0
        %v1907 = vadd.f32 0.0, %v1906
        %v1908 = vpop.f32.mrb[0].mxu0
        %v1909 = vpop.f32.mrb[0].mxu0
        %v1910 = vadd.f32 0.0, %v1909
        %v1911 = vpop.f32.mrb[0].mxu0
        %1912 = vmatprep.mubr.bf16.mxu0 0
        %1913 = vmatmul.mubr.bf16.gmra.mrb[0].mxu0 %v1803
        %v1914 = vpop.f32.mrb[0].mxu0
        %v1915 = vadd.f32 0.0, %v1914
        %v1916 = vpop.f32.mrb[0].mxu0
        %v1917 = vpop.f32.mrb[0].mxu0
        %v1918 = vadd.f32 0.0, %v1917
        %v1919 = vpop.f32.mrb[0].mxu0
        %1920 = vmatprep.mubr.bf16.mxu0 0
        %1921 = vmatmul.mubr.bf16.gmra.mrb[0].mxu0 %v1804
        %v1922 = vpop.f32.mrb[0].mxu0
        %v1923 = vadd.f32 0.0, %v1922
        %v1924 = vpop.f32.mrb[0].mxu0
        %v1925 = vpop.f32.mrb[0].mxu0
        %v1926 = vadd.f32 0.0, %v1925
        %v1927 = vpop.f32.mrb[0].mxu0
        %1928 = vmatprep.mubr.bf16.mxu0 0
        %1929 = vmatmul.mubr.bf16.gmra.mrb[0].mxu0 %v1805
        %v1930 = vpop.f32.mrb[0].mxu0
        %v1931 = vadd.f32 0.0, %v1930
        %v1932 = vpop.f32.mrb[0].mxu0
        %v1933 = vpop.f32.mrb[0].mxu0
        %v1934 = vadd.f32 0.0, %v1933
        %v1935 = vpop.f32.mrb[0].mxu0
        %1936 = vmatprep.mubr.bf16.mxu0 0
        %1937 = vmatmul.mubr.bf16.gmra.mrb[0].mxu0 %v1806
        %v1938 = vpop.f32.mrb[0].mxu0
        %v1939 = vadd.f32 0.0, %v1938
        %v1940 = vpop.f32.mrb[0].mxu0
        %v1941 = vpop.f32.mrb[0].mxu0
        %v1942 = vadd.f32 0.0, %v1941
        %v1943 = vpop.f32.mrb[0].mxu0
        %1944 = vmatprep.mubr.bf16.mxu0 0
        %1945 = vmatmul.mubr.bf16.gmra.mrb[0].mxu0 %v1807
        %v1946 = vpop.f32.mrb[0].mxu0
        %v1947 = vadd.f32 0.0, %v1946
        %v1948 = vpop.f32.mrb[0].mxu0
        %v1949 = vpop.f32.mrb[0].mxu0
        %v1950 = vadd.f32 0.0, %v1949
        %v1951 = vpop.f32.mrb[0].mxu0
        %1952 = vdwg.mxu0
        %v1953 = vld [vmem:[#allocation4] sm:$0xff]
        %v1954 = vld [vmem:[#allocation4 + $0x8] sm:$0xff]
        %v1955 = vld [vmem:[#allocation4 + $0x10] sm:$0xff]
        %v1956 = vld [vmem:[#allocation4 + $0x18] sm:$0xff]
        %v1957 = vld [vmem:[#allocation4 + $0x20] sm:$0xff]
        %v1958 = vld [vmem:[#allocation4 + $0x28] sm:$0xff]
        %v1959 = vld [vmem:[#allocation4 + $0x30] sm:$0xff]
        %v1960 = vld [vmem:[#allocation4 + $0x38] sm:$0xff]
        %v1961 = vld [vmem:[#allocation4 + $0x40] sm:$0xff]
        %v1962 = vld [vmem:[#allocation4 + $0x48] sm:$0xff]
        %v1963 = vld [vmem:[#allocation4 + $0x50] sm:$0xff]
        %v1964 = vld [vmem:[#allocation4 + $0x58] sm:$0xff]
        %v1965 = vld [vmem:[#allocation4 + $0x60] sm:$0xff]
        %v1966 = vld [vmem:[#allocation4 + $0x68] sm:$0xff]
        %v1967 = vld [vmem:[#allocation4 + $0x70] sm:$0xff]
        %v1968 = vld [vmem:[#allocation4 + $0x78] sm:$0xff]
        %1970 = vset.pattern.permute.xlu0 0
        %1971 = vperm.xlu0 %1970, %v1528
        %v1972 = vpop.permute.xlu0 %1971
        %1975 = vset.pattern.permute.xlu0 0
        %1976 = vperm.xlu0 %1975, %v1530
        %v1977 = vpop.permute.xlu0 %1976
        %1980 = vset.pattern.permute.xlu0 0
        %1981 = vperm.xlu0 %1980, %v1532
        %v1982 = vpop.permute.xlu0 %1981
        %1985 = vset.pattern.permute.xlu0 0
        %1986 = vperm.xlu0 %1985, %v1534
        %v1987 = vpop.permute.xlu0 %1986
        %1990 = vset.pattern.permute.xlu0 0
        %1991 = vperm.xlu0 %1990, %v1536
        %v1992 = vpop.permute.xlu0 %1991
        %1995 = vset.pattern.permute.xlu0 0
        %1996 = vperm.xlu0 %1995, %v1538
        %v1997 = vpop.permute.xlu0 %1996
        %2000 = vset.pattern.permute.xlu0 0
        %2001 = vperm.xlu0 %2000, %v1540
        %v2002 = vpop.permute.xlu0 %2001
        %2005 = vset.pattern.permute.xlu0 0
        %2006 = vperm.xlu0 %2005, %v1542
        %v2007 = vpop.permute.xlu0 %2006
        %2010 = vset.pattern.permute.xlu0 0
        %2011 = vperm.xlu0 %2010, %v1544
        %v2012 = vpop.permute.xlu0 %2011
        %2015 = vset.pattern.permute.xlu0 0
        %2016 = vperm.xlu0 %2015, %v1546
        %v2017 = vpop.permute.xlu0 %2016
        %2020 = vset.pattern.permute.xlu0 0
        %2021 = vperm.xlu0 %2020, %v1548
        %v2022 = vpop.permute.xlu0 %2021
        %2025 = vset.pattern.permute.xlu0 0
        %2026 = vperm.xlu0 %2025, %v1550
        %v2027 = vpop.permute.xlu0 %2026
        %2030 = vset.pattern.permute.xlu0 0
        %2031 = vperm.xlu0 %2030, %v1552
        %v2032 = vpop.permute.xlu0 %2031
        %2035 = vset.pattern.permute.xlu0 0
        %2036 = vperm.xlu0 %2035, %v1554
        %v2037 = vpop.permute.xlu0 %2036
        %2040 = vset.pattern.permute.xlu0 0
        %2041 = vperm.xlu0 %2040, %v1556
        %v2042 = vpop.permute.xlu0 %2041
        %2045 = vset.pattern.permute.xlu0 0
        %2046 = vperm.xlu0 %2045, %v1558
        %v2047 = vpop.permute.xlu0 %2046
        %v2049 = vmul.f32 %v1972, %v1953
        %v2050 = vmul.f32 %v1977, %v1954
        %v2051 = vmul.f32 %v1982, %v1955
        %v2052 = vmul.f32 %v1987, %v1956
        %v2053 = vmul.f32 %v1992, %v1957
        %v2054 = vmul.f32 %v1997, %v1958
        %v2055 = vmul.f32 %v2002, %v1959
        %v2056 = vmul.f32 %v2007, %v1960
        %v2057 = vmul.f32 %v2012, %v1961
        %v2058 = vmul.f32 %v2017, %v1962
        %v2059 = vmul.f32 %v2022, %v1963
        %v2060 = vmul.f32 %v2027, %v1964
        %v2061 = vmul.f32 %v2032, %v1965
        %v2062 = vmul.f32 %v2037, %v1966
        %v2063 = vmul.f32 %v2042, %v1967
        %v2064 = vmul.f32 %v2047, %v1968
        %v2065 = vadd.f32 %v2049, %v1891
        %v2066 = vadd.f32 %v2050, %v1894
        %v2067 = vadd.f32 %v2051, %v1899
        %v2068 = vadd.f32 %v2052, %v1902
        %v2069 = vadd.f32 %v2053, %v1907
        %v2070 = vadd.f32 %v2054, %v1910
        %v2071 = vadd.f32 %v2055, %v1915
        %v2072 = vadd.f32 %v2056, %v1918
        %v2073 = vadd.f32 %v2057, %v1923
        %v2074 = vadd.f32 %v2058, %v1926
        %v2075 = vadd.f32 %v2059, %v1931
        %v2076 = vadd.f32 %v2060, %v1934
        %v2077 = vadd.f32 %v2061, %v1939
        %v2078 = vadd.f32 %v2062, %v1942
        %v2079 = vadd.f32 %v2063, %v1947
        %v2080 = vadd.f32 %v2064, %v1950
        %vm2081 = vcmask 130048
        %2082 = vst.msk [vmem:[#allocation4] sm:$0xff] %vm2081, %v2065
        %2083 = vst.msk [vmem:[#allocation4 + $0x8] sm:$0xff] %vm2081, %v2066
        %2084 = vst.msk [vmem:[#allocation4 + $0x10] sm:$0xff] %vm2081, %v2067
        %2085 = vst.msk [vmem:[#allocation4 + $0x18] sm:$0xff] %vm2081, %v2068
        %2086 = vst.msk [vmem:[#allocation4 + $0x20] sm:$0xff] %vm2081, %v2069
        %2087 = vst.msk [vmem:[#allocation4 + $0x28] sm:$0xff] %vm2081, %v2070
        %2088 = vst.msk [vmem:[#allocation4 + $0x30] sm:$0xff] %vm2081, %v2071
        %2089 = vst.msk [vmem:[#allocation4 + $0x38] sm:$0xff] %vm2081, %v2072
        %2090 = vst.msk [vmem:[#allocation4 + $0x40] sm:$0xff] %vm2081, %v2073
        %2091 = vst.msk [vmem:[#allocation4 + $0x48] sm:$0xff] %vm2081, %v2074
        %2092 = vst.msk [vmem:[#allocation4 + $0x50] sm:$0xff] %vm2081, %v2075
        %2093 = vst.msk [vmem:[#allocation4 + $0x58] sm:$0xff] %vm2081, %v2076
        %2094 = vst.msk [vmem:[#allocation4 + $0x60] sm:$0xff] %vm2081, %v2077
        %2095 = vst.msk [vmem:[#allocation4 + $0x68] sm:$0xff] %vm2081, %v2078
        %2096 = vst.msk [vmem:[#allocation4 + $0x70] sm:$0xff] %vm2081, %v2079
        %2097 = vst.msk [vmem:[#allocation4 + $0x78] sm:$0xff] %vm2081, %v2080
        %2098 = vset.pattern.permute.xlu0 1
        %2099 = vperm.xlu0 %2098, %v603
        %v2100 = vpop.permute.xlu0 %2099
        %2102 = vset.pattern.permute.xlu0 1
        %2103 = vperm.xlu0 %2102, %v604
        %v2104 = vpop.permute.xlu0 %2103
        %2106 = vset.pattern.permute.xlu0 1
        %2107 = vperm.xlu0 %2106, %v605
        %v2108 = vpop.permute.xlu0 %2107
        %2110 = vset.pattern.permute.xlu0 1
        %2111 = vperm.xlu0 %2110, %v606
        %v2112 = vpop.permute.xlu0 %2111
        %2114 = vset.pattern.permute.xlu0 1
        %2115 = vperm.xlu0 %2114, %v607
        %v2116 = vpop.permute.xlu0 %2115
        %2118 = vset.pattern.permute.xlu0 1
        %2119 = vperm.xlu0 %2118, %v608
        %v2120 = vpop.permute.xlu0 %2119
        %2122 = vset.pattern.permute.xlu0 1
        %2123 = vperm.xlu0 %2122, %v609
        %v2124 = vpop.permute.xlu0 %2123
        %2126 = vset.pattern.permute.xlu0 1
        %2127 = vperm.xlu0 %2126, %v610
        %v2128 = vpop.permute.xlu0 %2127
        %2130 = vset.pattern.permute.xlu0 1
        %2131 = vperm.xlu0 %2130, %v611
        %v2132 = vpop.permute.xlu0 %2131
        %2134 = vset.pattern.permute.xlu0 1
        %2135 = vperm.xlu0 %2134, %v612
        %v2136 = vpop.permute.xlu0 %2135
        %2138 = vset.pattern.permute.xlu0 1
        %2139 = vperm.xlu0 %2138, %v613
        %v2140 = vpop.permute.xlu0 %2139
        %2142 = vset.pattern.permute.xlu0 1
        %2143 = vperm.xlu0 %2142, %v614
        %v2144 = vpop.permute.xlu0 %2143
        %2146 = vset.pattern.permute.xlu0 1
        %2147 = vperm.xlu0 %2146, %v615
        %v2148 = vpop.permute.xlu0 %2147
        %2150 = vset.pattern.permute.xlu0 1
        %2151 = vperm.xlu0 %2150, %v616
        %v2152 = vpop.permute.xlu0 %2151
        %2154 = vset.pattern.permute.xlu0 1
        %2155 = vperm.xlu0 %2154, %v617
        %v2156 = vpop.permute.xlu0 %2155
        %2158 = vset.pattern.permute.xlu0 1
        %2159 = vperm.xlu0 %2158, %v618
        %v2160 = vpop.permute.xlu0 %2159
        %v2162 = vlaneseq
        %v2163 = vshrl.u32 %v2162, 7
        %v2164 = vsub.s32 1, %v2163
        %v2165 = vrot.slane %v619, %v2164
        %v2166 = vadd.f32 %v2100, %v2165
        %v2167 = vadd.f32 %v2104, %v2165
        %v2168 = vadd.f32 %v2108, %v2165
        %v2169 = vadd.f32 %v2112, %v2165
        %v2170 = vadd.f32 %v2116, %v2165
        %v2171 = vadd.f32 %v2120, %v2165
        %v2172 = vadd.f32 %v2124, %v2165
        %v2173 = vadd.f32 %v2128, %v2165
        %v2174 = vadd.f32 %v2132, %v2165
        %v2175 = vadd.f32 %v2136, %v2165
        %v2176 = vadd.f32 %v2140, %v2165
        %v2177 = vadd.f32 %v2144, %v2165
        %v2178 = vadd.f32 %v2148, %v2165
        %v2179 = vadd.f32 %v2152, %v2165
        %v2180 = vadd.f32 %v2156, %v2165
        %v2181 = vadd.f32 %v2160, %v2165
        %v2182 = vadd.f32 %v2166, %v1267
        %v2183 = vadd.f32 %v2167, %v1268
        %v2184 = vadd.f32 %v2168, %v1269
        %v2185 = vadd.f32 %v2169, %v1270
        %v2186 = vadd.f32 %v2170, %v1271
        %v2187 = vadd.f32 %v2171, %v1272
        %v2188 = vadd.f32 %v2172, %v1273
        %v2189 = vadd.f32 %v2173, %v1274
        %v2190 = vadd.f32 %v2174, %v1275
        %v2191 = vadd.f32 %v2175, %v1276
        %v2192 = vadd.f32 %v2176, %v1277
        %v2193 = vadd.f32 %v2177, %v1278
        %v2194 = vadd.f32 %v2178, %v1279
        %v2195 = vadd.f32 %v2179, %v1280
        %v2196 = vadd.f32 %v2180, %v1281
        %v2197 = vadd.f32 %v2181, %v1282
        %v2198 = vmul.f32 %v2182, 0.2
        %v2199 = vmul.f32 %v2183, 0.2
        %v2200 = vmul.f32 %v2184, 0.2
        %v2201 = vmul.f32 %v2185, 0.2
        %v2202 = vmul.f32 %v2186, 0.2
        %v2203 = vmul.f32 %v2187, 0.2
        %v2204 = vmul.f32 %v2188, 0.2
        %v2205 = vmul.f32 %v2189, 0.2
        %v2206 = vmul.f32 %v2190, 0.2
        %v2207 = vmul.f32 %v2191, 0.2
        %v2208 = vmul.f32 %v2192, 0.2
        %v2209 = vmul.f32 %v2193, 0.2
        %v2210 = vmul.f32 %v2194, 0.2
        %v2211 = vmul.f32 %v2195, 0.2
        %v2212 = vmul.f32 %v2196, 0.2
        %v2213 = vmul.f32 %v2197, 0.2
        %v2214 = vmax.f32 %v2182, %v2198
        %v2215 = vmax.f32 %v2183, %v2199
        %v2216 = vmax.f32 %v2184, %v2200
        %v2217 = vmax.f32 %v2185, %v2201
        %v2218 = vmax.f32 %v2186, %v2202
        %v2219 = vmax.f32 %v2187, %v2203
        %v2220 = vmax.f32 %v2188, %v2204
        %v2221 = vmax.f32 %v2189, %v2205
        %v2222 = vmax.f32 %v2190, %v2206
        %v2223 = vmax.f32 %v2191, %v2207
        %v2224 = vmax.f32 %v2192, %v2208
        %v2225 = vmax.f32 %v2193, %v2209
        %v2226 = vmax.f32 %v2194, %v2210
        %v2227 = vmax.f32 %v2195, %v2211
        %v2228 = vmax.f32 %v2196, %v2212
        %v2229 = vmax.f32 %v2197, %v2213
        %v2230 = vsel %vm587, %v2214, -3e+38
        %v2231 = vsel %vm588, %v2215, -3e+38
        %v2232 = vsel %vm589, %v2216, -3e+38
        %v2233 = vsel %vm590, %v2217, -3e+38
        %v2234 = vsel %vm591, %v2218, -3e+38
        %v2235 = vsel %vm592, %v2219, -3e+38
        %v2236 = vsel %vm593, %v2220, -3e+38
        %v2237 = vsel %vm594, %v2221, -3e+38
        %v2238 = vsel %vm595, %v2222, -3e+38
        %v2239 = vsel %vm596, %v2223, -3e+38
        %v2240 = vsel %vm597, %v2224, -3e+38
        %v2241 = vsel %vm598, %v2225, -3e+38
        %v2242 = vsel %vm599, %v2226, -3e+38
        %v2243 = vsel %vm600, %v2227, -3e+38
        %v2244 = vsel %vm601, %v2228, -3e+38
        %v2245 = vsel %vm602, %v2229, -3e+38
        %s2246 = scalar_lea.vmem [#allocation2], 128
        %v2247 = vld [vmem:[%s2246] sm:$0xff]
        %v2248 = vld [vmem:[%s2246 + $0x8] sm:$0xff]
        %v2249 = vld [vmem:[%s2246 + $0x10] sm:$0xff]
        %v2250 = vld [vmem:[%s2246 + $0x18] sm:$0xff]
        %v2251 = vld [vmem:[%s2246 + $0x20] sm:$0xff]
        %v2252 = vld [vmem:[%s2246 + $0x28] sm:$0xff]
        %v2253 = vld [vmem:[%s2246 + $0x30] sm:$0xff]
        %v2254 = vld [vmem:[%s2246 + $0x38] sm:$0xff]
        %v2255 = vld [vmem:[%s2246 + $0x40] sm:$0xff]
        %v2256 = vld [vmem:[%s2246 + $0x48] sm:$0xff]
        %v2257 = vld [vmem:[%s2246 + $0x50] sm:$0xff]
        %v2258 = vld [vmem:[%s2246 + $0x58] sm:$0xff]
        %v2259 = vld [vmem:[%s2246 + $0x60] sm:$0xff]
        %v2260 = vld [vmem:[%s2246 + $0x68] sm:$0xff]
        %v2261 = vld [vmem:[%s2246 + $0x70] sm:$0xff]
        %v2262 = vld [vmem:[%s2246 + $0x78] sm:$0xff]
        %2263 = vmax.xlane.f32.xlu0 %v2230
        %v2264 = vpop.xlane.xlu0 %2263
        %2265 = vmax.xlane.f32.xlu0 %v2231
        %v2266 = vpop.xlane.xlu0 %2265
        %2267 = vmax.xlane.f32.xlu0 %v2232
        %v2268 = vpop.xlane.xlu0 %2267
        %2269 = vmax.xlane.f32.xlu0 %v2233
        %v2270 = vpop.xlane.xlu0 %2269
        %2271 = vmax.xlane.f32.xlu0 %v2234
        %v2272 = vpop.xlane.xlu0 %2271
        %2273 = vmax.xlane.f32.xlu0 %v2235
        %v2274 = vpop.xlane.xlu0 %2273
        %2275 = vmax.xlane.f32.xlu0 %v2236
        %v2276 = vpop.xlane.xlu0 %2275
        %2277 = vmax.xlane.f32.xlu0 %v2237
        %v2278 = vpop.xlane.xlu0 %2277
        %2279 = vmax.xlane.f32.xlu0 %v2238
        %v2280 = vpop.xlane.xlu0 %2279
        %2281 = vmax.xlane.f32.xlu0 %v2239
        %v2282 = vpop.xlane.xlu0 %2281
        %2283 = vmax.xlane.f32.xlu0 %v2240
        %v2284 = vpop.xlane.xlu0 %2283
        %2285 = vmax.xlane.f32.xlu0 %v2241
        %v2286 = vpop.xlane.xlu0 %2285
        %2287 = vmax.xlane.f32.xlu0 %v2242
        %v2288 = vpop.xlane.xlu0 %2287
        %2289 = vmax.xlane.f32.xlu0 %v2243
        %v2290 = vpop.xlane.xlu0 %2289
        %2291 = vmax.xlane.f32.xlu0 %v2244
        %v2292 = vpop.xlane.xlu0 %2291
        %2293 = vmax.xlane.f32.xlu0 %v2245
        %v2294 = vpop.xlane.xlu0 %2293
        %v2295 = vmax.f32 %v2247, %v2264
        %v2296 = vmax.f32 %v2248, %v2266
        %v2297 = vmax.f32 %v2249, %v2268
        %v2298 = vmax.f32 %v2250, %v2270
        %v2299 = vmax.f32 %v2251, %v2272
        %v2300 = vmax.f32 %v2252, %v2274
        %v2301 = vmax.f32 %v2253, %v2276
        %v2302 = vmax.f32 %v2254, %v2278
        %v2303 = vmax.f32 %v2255, %v2280
        %v2304 = vmax.f32 %v2256, %v2282
        %v2305 = vmax.f32 %v2257, %v2284
        %v2306 = vmax.f32 %v2258, %v2286
        %v2307 = vmax.f32 %v2259, %v2288
        %v2308 = vmax.f32 %v2260, %v2290
        %v2309 = vmax.f32 %v2261, %v2292
        %v2310 = vmax.f32 %v2262, %v2294
        %v2311 = vsub.f32 %v2247, %v2295
        %v2312 = vsub.f32 %v2248, %v2296
        %v2313 = vsub.f32 %v2249, %v2297
        %v2314 = vsub.f32 %v2250, %v2298
        %v2315 = vsub.f32 %v2251, %v2299
        %v2316 = vsub.f32 %v2252, %v2300
        %v2317 = vsub.f32 %v2253, %v2301
        %v2318 = vsub.f32 %v2254, %v2302
        %v2319 = vsub.f32 %v2255, %v2303
        %v2320 = vsub.f32 %v2256, %v2304
        %v2321 = vsub.f32 %v2257, %v2305
        %v2322 = vsub.f32 %v2258, %v2306
        %v2323 = vsub.f32 %v2259, %v2307
        %v2324 = vsub.f32 %v2260, %v2308
        %v2325 = vsub.f32 %v2261, %v2309
        %v2326 = vsub.f32 %v2262, %v2310
        %v2327 = vmul.f32 %v2311, 1.442695
        %v2328 = vpow.pop %v2327
        %v2329 = vmul.f32 %v2312, 1.442695
        %v2330 = vpow.pop %v2329
        %v2331 = vmul.f32 %v2313, 1.442695
        %v2332 = vpow.pop %v2331
        %v2333 = vmul.f32 %v2314, 1.442695
        %v2334 = vpow.pop %v2333
        %v2335 = vmul.f32 %v2315, 1.442695
        %v2336 = vpow.pop %v2335
        %v2337 = vmul.f32 %v2316, 1.442695
        %v2338 = vpow.pop %v2337
        %v2339 = vmul.f32 %v2317, 1.442695
        %v2340 = vpow.pop %v2339
        %v2341 = vmul.f32 %v2318, 1.442695
        %v2342 = vpow.pop %v2341
        %v2343 = vmul.f32 %v2319, 1.442695
        %v2344 = vpow.pop %v2343
        %v2345 = vmul.f32 %v2320, 1.442695
        %v2346 = vpow.pop %v2345
        %v2347 = vmul.f32 %v2321, 1.442695
        %v2348 = vpow.pop %v2347
        %v2349 = vmul.f32 %v2322, 1.442695
        %v2350 = vpow.pop %v2349
        %v2351 = vmul.f32 %v2323, 1.442695
        %v2352 = vpow.pop %v2351
        %v2353 = vmul.f32 %v2324, 1.442695
        %v2354 = vpow.pop %v2353
        %v2355 = vmul.f32 %v2325, 1.442695
        %v2356 = vpow.pop %v2355
        %v2357 = vmul.f32 %v2326, 1.442695
        %v2358 = vpow.pop %v2357
        %2360 = vset.pattern.permute.xlu0 0
        %2361 = vperm.xlu0 %2360, %v2295
        %v2362 = vpop.permute.xlu0 %2361
        %2365 = vset.pattern.permute.xlu0 0
        %2366 = vperm.xlu0 %2365, %v2296
        %v2367 = vpop.permute.xlu0 %2366
        %2370 = vset.pattern.permute.xlu0 0
        %2371 = vperm.xlu0 %2370, %v2297
        %v2372 = vpop.permute.xlu0 %2371
        %2375 = vset.pattern.permute.xlu0 0
        %2376 = vperm.xlu0 %2375, %v2298
        %v2377 = vpop.permute.xlu0 %2376
        %2380 = vset.pattern.permute.xlu0 0
        %2381 = vperm.xlu0 %2380, %v2299
        %v2382 = vpop.permute.xlu0 %2381
        %2385 = vset.pattern.permute.xlu0 0
        %2386 = vperm.xlu0 %2385, %v2300
        %v2387 = vpop.permute.xlu0 %2386
        %2390 = vset.pattern.permute.xlu0 0
        %2391 = vperm.xlu0 %2390, %v2301
        %v2392 = vpop.permute.xlu0 %2391
        %2395 = vset.pattern.permute.xlu0 0
        %2396 = vperm.xlu0 %2395, %v2302
        %v2397 = vpop.permute.xlu0 %2396
        %2400 = vset.pattern.permute.xlu0 0
        %2401 = vperm.xlu0 %2400, %v2303
        %v2402 = vpop.permute.xlu0 %2401
        %2405 = vset.pattern.permute.xlu0 0
        %2406 = vperm.xlu0 %2405, %v2304
        %v2407 = vpop.permute.xlu0 %2406
        %2410 = vset.pattern.permute.xlu0 0
        %2411 = vperm.xlu0 %2410, %v2305
        %v2412 = vpop.permute.xlu0 %2411
        %2415 = vset.pattern.permute.xlu0 0
        %2416 = vperm.xlu0 %2415, %v2306
        %v2417 = vpop.permute.xlu0 %2416
        %2420 = vset.pattern.permute.xlu0 0
        %2421 = vperm.xlu0 %2420, %v2307
        %v2422 = vpop.permute.xlu0 %2421
        %2425 = vset.pattern.permute.xlu0 0
        %2426 = vperm.xlu0 %2425, %v2308
        %v2427 = vpop.permute.xlu0 %2426
        %2430 = vset.pattern.permute.xlu0 0
        %2431 = vperm.xlu0 %2430, %v2309
        %v2432 = vpop.permute.xlu0 %2431
        %2435 = vset.pattern.permute.xlu0 0
        %2436 = vperm.xlu0 %2435, %v2310
        %v2437 = vpop.permute.xlu0 %2436
        %v2439 = vsub.f32 %v2230, %v2362
        %v2440 = vsub.f32 %v2231, %v2367
        %v2441 = vsub.f32 %v2232, %v2372
        %v2442 = vsub.f32 %v2233, %v2377
        %v2443 = vsub.f32 %v2234, %v2382
        %v2444 = vsub.f32 %v2235, %v2387
        %v2445 = vsub.f32 %v2236, %v2392
        %v2446 = vsub.f32 %v2237, %v2397
        %v2447 = vsub.f32 %v2238, %v2402
        %v2448 = vsub.f32 %v2239, %v2407
        %v2449 = vsub.f32 %v2240, %v2412
        %v2450 = vsub.f32 %v2241, %v2417
        %v2451 = vsub.f32 %v2242, %v2422
        %v2452 = vsub.f32 %v2243, %v2427
        %v2453 = vsub.f32 %v2244, %v2432
        %v2454 = vsub.f32 %v2245, %v2437
        %v2455 = vmul.f32 %v2439, 1.442695
        %v2456 = vpow.pop %v2455
        %v2457 = vmul.f32 %v2440, 1.442695
        %v2458 = vpow.pop %v2457
        %v2459 = vmul.f32 %v2441, 1.442695
        %v2460 = vpow.pop %v2459
        %v2461 = vmul.f32 %v2442, 1.442695
        %v2462 = vpow.pop %v2461
        %v2463 = vmul.f32 %v2443, 1.442695
        %v2464 = vpow.pop %v2463
        %v2465 = vmul.f32 %v2444, 1.442695
        %v2466 = vpow.pop %v2465
        %v2467 = vmul.f32 %v2445, 1.442695
        %v2468 = vpow.pop %v2467
        %v2469 = vmul.f32 %v2446, 1.442695
        %v2470 = vpow.pop %v2469
        %v2471 = vmul.f32 %v2447, 1.442695
        %v2472 = vpow.pop %v2471
        %v2473 = vmul.f32 %v2448, 1.442695
        %v2474 = vpow.pop %v2473
        %v2475 = vmul.f32 %v2449, 1.442695
        %v2476 = vpow.pop %v2475
        %v2477 = vmul.f32 %v2450, 1.442695
        %v2478 = vpow.pop %v2477
        %v2479 = vmul.f32 %v2451, 1.442695
        %v2480 = vpow.pop %v2479
        %v2481 = vmul.f32 %v2452, 1.442695
        %v2482 = vpow.pop %v2481
        %v2483 = vmul.f32 %v2453, 1.442695
        %v2484 = vpow.pop %v2483
        %v2485 = vmul.f32 %v2454, 1.442695
        %v2486 = vpow.pop %v2485
        %s2487 = scalar_lea.vmem [#allocation3], 128
        %v2488 = vld [vmem:[%s2487] sm:$0xff]
        %v2489 = vld [vmem:[%s2487 + $0x8] sm:$0xff]
        %v2490 = vld [vmem:[%s2487 + $0x10] sm:$0xff]
        %v2491 = vld [vmem:[%s2487 + $0x18] sm:$0xff]
        %v2492 = vld [vmem:[%s2487 + $0x20] sm:$0xff]
        %v2493 = vld [vmem:[%s2487 + $0x28] sm:$0xff]
        %v2494 = vld [vmem:[%s2487 + $0x30] sm:$0xff]
        %v2495 = vld [vmem:[%s2487 + $0x38] sm:$0xff]
        %v2496 = vld [vmem:[%s2487 + $0x40] sm:$0xff]
        %v2497 = vld [vmem:[%s2487 + $0x48] sm:$0xff]
        %v2498 = vld [vmem:[%s2487 + $0x50] sm:$0xff]
        %v2499 = vld [vmem:[%s2487 + $0x58] sm:$0xff]
        %v2500 = vld [vmem:[%s2487 + $0x60] sm:$0xff]
        %v2501 = vld [vmem:[%s2487 + $0x68] sm:$0xff]
        %v2502 = vld [vmem:[%s2487 + $0x70] sm:$0xff]
        %v2503 = vld [vmem:[%s2487 + $0x78] sm:$0xff]
        %v2504 = vmul.f32 %v2328, %v2488
        %v2505 = vmul.f32 %v2330, %v2489
        %v2506 = vmul.f32 %v2332, %v2490
        %v2507 = vmul.f32 %v2334, %v2491
        %v2508 = vmul.f32 %v2336, %v2492
        %v2509 = vmul.f32 %v2338, %v2493
        %v2510 = vmul.f32 %v2340, %v2494
        %v2511 = vmul.f32 %v2342, %v2495
        %v2512 = vmul.f32 %v2344, %v2496
        %v2513 = vmul.f32 %v2346, %v2497
        %v2514 = vmul.f32 %v2348, %v2498
        %v2515 = vmul.f32 %v2350, %v2499
        %v2516 = vmul.f32 %v2352, %v2500
        %v2517 = vmul.f32 %v2354, %v2501
        %v2518 = vmul.f32 %v2356, %v2502
        %v2519 = vmul.f32 %v2358, %v2503
        %2520 = vadd.xlane.f32.xlu0 %v2456
        %v2521 = vpop.xlane.xlu0 %2520
        %2522 = vadd.xlane.f32.xlu0 %v2458
        %v2523 = vpop.xlane.xlu0 %2522
        %2524 = vadd.xlane.f32.xlu0 %v2460
        %v2525 = vpop.xlane.xlu0 %2524
        %2526 = vadd.xlane.f32.xlu0 %v2462
        %v2527 = vpop.xlane.xlu0 %2526
        %2528 = vadd.xlane.f32.xlu0 %v2464
        %v2529 = vpop.xlane.xlu0 %2528
        %2530 = vadd.xlane.f32.xlu0 %v2466
        %v2531 = vpop.xlane.xlu0 %2530
        %2532 = vadd.xlane.f32.xlu0 %v2468
        %v2533 = vpop.xlane.xlu0 %2532
        %2534 = vadd.xlane.f32.xlu0 %v2470
        %v2535 = vpop.xlane.xlu0 %2534
        %2536 = vadd.xlane.f32.xlu0 %v2472
        %v2537 = vpop.xlane.xlu0 %2536
        %2538 = vadd.xlane.f32.xlu0 %v2474
        %v2539 = vpop.xlane.xlu0 %2538
        %2540 = vadd.xlane.f32.xlu0 %v2476
        %v2541 = vpop.xlane.xlu0 %2540
        %2542 = vadd.xlane.f32.xlu0 %v2478
        %v2543 = vpop.xlane.xlu0 %2542
        %2544 = vadd.xlane.f32.xlu0 %v2480
        %v2545 = vpop.xlane.xlu0 %2544
        %2546 = vadd.xlane.f32.xlu0 %v2482
        %v2547 = vpop.xlane.xlu0 %2546
        %2548 = vadd.xlane.f32.xlu0 %v2484
        %v2549 = vpop.xlane.xlu0 %2548
        %2550 = vadd.xlane.f32.xlu0 %v2486
        %v2551 = vpop.xlane.xlu0 %2550
        %v2552 = vadd.f32 %v2504, %v2521
        %v2553 = vadd.f32 %v2505, %v2523
        %v2554 = vadd.f32 %v2506, %v2525
        %v2555 = vadd.f32 %v2507, %v2527
        %v2556 = vadd.f32 %v2508, %v2529
        %v2557 = vadd.f32 %v2509, %v2531
        %v2558 = vadd.f32 %v2510, %v2533
        %v2559 = vadd.f32 %v2511, %v2535
        %v2560 = vadd.f32 %v2512, %v2537
        %v2561 = vadd.f32 %v2513, %v2539
        %v2562 = vadd.f32 %v2514, %v2541
        %v2563 = vadd.f32 %v2515, %v2543
        %v2564 = vadd.f32 %v2516, %v2545
        %v2565 = vadd.f32 %v2517, %v2547
        %v2566 = vadd.f32 %v2518, %v2549
        %v2567 = vadd.f32 %v2519, %v2551
        %2568 = vst.msk [vmem:[%s2487] sm:$0xff] %vm1767, %v2552
        %2569 = vst.msk [vmem:[%s2487 + $0x8] sm:$0xff] %vm1767, %v2553
        %2570 = vst.msk [vmem:[%s2487 + $0x10] sm:$0xff] %vm1767, %v2554
        %2571 = vst.msk [vmem:[%s2487 + $0x18] sm:$0xff] %vm1767, %v2555
        %2572 = vst.msk [vmem:[%s2487 + $0x20] sm:$0xff] %vm1767, %v2556
        %2573 = vst.msk [vmem:[%s2487 + $0x28] sm:$0xff] %vm1767, %v2557
        %2574 = vst.msk [vmem:[%s2487 + $0x30] sm:$0xff] %vm1767, %v2558
        %2575 = vst.msk [vmem:[%s2487 + $0x38] sm:$0xff] %vm1767, %v2559
        %2576 = vst.msk [vmem:[%s2487 + $0x40] sm:$0xff] %vm1767, %v2560
        %2577 = vst.msk [vmem:[%s2487 + $0x48] sm:$0xff] %vm1767, %v2561
        %2578 = vst.msk [vmem:[%s2487 + $0x50] sm:$0xff] %vm1767, %v2562
        %2579 = vst.msk [vmem:[%s2487 + $0x58] sm:$0xff] %vm1767, %v2563
        %2580 = vst.msk [vmem:[%s2487 + $0x60] sm:$0xff] %vm1767, %v2564
        %2581 = vst.msk [vmem:[%s2487 + $0x68] sm:$0xff] %vm1767, %v2565
        %2582 = vst.msk [vmem:[%s2487 + $0x70] sm:$0xff] %vm1767, %v2566
        %2583 = vst.msk [vmem:[%s2487 + $0x78] sm:$0xff] %vm1767, %v2567
        %2584 = vst.msk [vmem:[%s2246] sm:$0xff] %vm1767, %v2295
        %2585 = vst.msk [vmem:[%s2246 + $0x8] sm:$0xff] %vm1767, %v2296
        %2586 = vst.msk [vmem:[%s2246 + $0x10] sm:$0xff] %vm1767, %v2297
        %2587 = vst.msk [vmem:[%s2246 + $0x18] sm:$0xff] %vm1767, %v2298
        %2588 = vst.msk [vmem:[%s2246 + $0x20] sm:$0xff] %vm1767, %v2299
        %2589 = vst.msk [vmem:[%s2246 + $0x28] sm:$0xff] %vm1767, %v2300
        %2590 = vst.msk [vmem:[%s2246 + $0x30] sm:$0xff] %vm1767, %v2301
        %2591 = vst.msk [vmem:[%s2246 + $0x38] sm:$0xff] %vm1767, %v2302
        %2592 = vst.msk [vmem:[%s2246 + $0x40] sm:$0xff] %vm1767, %v2303
        %2593 = vst.msk [vmem:[%s2246 + $0x48] sm:$0xff] %vm1767, %v2304
        %2594 = vst.msk [vmem:[%s2246 + $0x50] sm:$0xff] %vm1767, %v2305
        %2595 = vst.msk [vmem:[%s2246 + $0x58] sm:$0xff] %vm1767, %v2306
        %2596 = vst.msk [vmem:[%s2246 + $0x60] sm:$0xff] %vm1767, %v2307
        %2597 = vst.msk [vmem:[%s2246 + $0x68] sm:$0xff] %vm1767, %v2308
        %2598 = vst.msk [vmem:[%s2246 + $0x70] sm:$0xff] %vm1767, %v2309
        %2599 = vst.msk [vmem:[%s2246 + $0x78] sm:$0xff] %vm1767, %v2310
        %v2600 = vpack.c.bf16 %v2458, %v2456
        %v2601 = vpack.c.bf16 %v2462, %v2460
        %v2602 = vpack.c.bf16 %v2466, %v2464
        %v2603 = vpack.c.bf16 %v2470, %v2468
        %v2604 = vpack.c.bf16 %v2474, %v2472
        %v2605 = vpack.c.bf16 %v2478, %v2476
        %v2606 = vpack.c.bf16 %v2482, %v2480
        %v2607 = vpack.c.bf16 %v2486, %v2484
        %2608 = vrot.lane.b32.xlu0 %v1840, 112
        %v2609 = vpop.permute.xlu0 %2608
        %2610 = vrot.lane.b32.xlu0 %v1841, 112
        %v2611 = vpop.permute.xlu0 %2610
        %2612 = vrot.lane.b32.xlu0 %v1842, 112
        %v2613 = vpop.permute.xlu0 %2612
        %2614 = vrot.lane.b32.xlu0 %v1843, 112
        %v2615 = vpop.permute.xlu0 %2614
        %2616 = vrot.lane.b32.xlu0 %v1844, 112
        %v2617 = vpop.permute.xlu0 %2616
        %2618 = vrot.lane.b32.xlu0 %v1845, 112
        %v2619 = vpop.permute.xlu0 %2618
        %2620 = vrot.lane.b32.xlu0 %v1846, 112
        %v2621 = vpop.permute.xlu0 %2620
        %2622 = vrot.lane.b32.xlu0 %v1847, 112
        %v2623 = vpop.permute.xlu0 %2622
        %2632 = vmatprep.subr.bf16.mxu0 0
        %2633 = vmatpush1.bf16.msra.mxu0 %v2609
        %2634 = vmatprep.subr.bf16.mxu0 0
        %2635 = vmatpush1.bf16.msra.mxu0 %v2611
        %2636 = vmatprep.subr.bf16.mxu0 0
        %2637 = vmatpush1.bf16.msra.mxu0 %v2613
        %2638 = vmatprep.subr.bf16.mxu0 0
        %2639 = vmatpush1.bf16.msra.mxu0 %v2615
        %2640 = vmatprep.subr.bf16.mxu0 0
        %2641 = vmatpush1.bf16.msra.mxu0 %v2617
        %2642 = vmatprep.subr.bf16.mxu0 0
        %2643 = vmatpush1.bf16.msra.mxu0 %v2619
        %2644 = vmatprep.subr.bf16.mxu0 0
        %2645 = vmatpush1.bf16.msra.mxu0 %v2621
        %2646 = vmatprep.subr.bf16.mxu0 0
        %2647 = vmatpush1.bf16.msra.mxu0 %v2623
        %2648 = vmatprep.subr.bf16.mxu0 0
        %2649 = vmatpush1.bf16.msra.mxu0 0
        %2650 = vmatprep.subr.bf16.mxu0 0
        %2651 = vmatpush1.bf16.msra.mxu0 0
        %2652 = vmatprep.subr.bf16.mxu0 0
        %2653 = vmatpush1.bf16.msra.mxu0 0
        %2654 = vmatprep.subr.bf16.mxu0 0
        %2655 = vmatpush1.bf16.msra.mxu0 0
        %2656 = vmatprep.subr.bf16.mxu0 0
        %2657 = vmatpush1.bf16.msra.mxu0 0
        %2658 = vmatprep.subr.bf16.mxu0 0
        %2659 = vmatpush1.bf16.msra.mxu0 0
        %2660 = vmatprep.subr.bf16.mxu0 0
        %2661 = vmatpush1.bf16.msra.mxu0 0
        %2662 = vmatprep.subr.bf16.mxu0 0
        %2663 = vmatpush1.bf16.msra.mxu0 0
        %2664 = vmatprep.mubr.bf16.mxu0 0
        %2665 = vmatmul.mubr.bf16.gmra.mrb[0].mxu0 %v2600
        %v2666 = vpop.f32.mrb[0].mxu0
        %v2667 = vadd.f32 0.0, %v2666
        %v2668 = vpop.f32.mrb[0].mxu0
        %v2669 = vpop.f32.mrb[0].mxu0
        %v2670 = vadd.f32 0.0, %v2669
        %v2671 = vpop.f32.mrb[0].mxu0
        %2672 = vmatprep.mubr.bf16.mxu0 0
        %2673 = vmatmul.mubr.bf16.gmra.mrb[0].mxu0 %v2601
        %v2674 = vpop.f32.mrb[0].mxu0
        %v2675 = vadd.f32 0.0, %v2674
        %v2676 = vpop.f32.mrb[0].mxu0
        %v2677 = vpop.f32.mrb[0].mxu0
        %v2678 = vadd.f32 0.0, %v2677
        %v2679 = vpop.f32.mrb[0].mxu0
        %2680 = vmatprep.mubr.bf16.mxu0 0
        %2681 = vmatmul.mubr.bf16.gmra.mrb[0].mxu0 %v2602
        %v2682 = vpop.f32.mrb[0].mxu0
        %v2683 = vadd.f32 0.0, %v2682
        %v2684 = vpop.f32.mrb[0].mxu0
        %v2685 = vpop.f32.mrb[0].mxu0
        %v2686 = vadd.f32 0.0, %v2685
        %v2687 = vpop.f32.mrb[0].mxu0
        %2688 = vmatprep.mubr.bf16.mxu0 0
        %2689 = vmatmul.mubr.bf16.gmra.mrb[0].mxu0 %v2603
        %v2690 = vpop.f32.mrb[0].mxu0
        %v2691 = vadd.f32 0.0, %v2690
        %v2692 = vpop.f32.mrb[0].mxu0
        %v2693 = vpop.f32.mrb[0].mxu0
        %v2694 = vadd.f32 0.0, %v2693
        %v2695 = vpop.f32.mrb[0].mxu0
        %2696 = vmatprep.mubr.bf16.mxu0 0
        %2697 = vmatmul.mubr.bf16.gmra.mrb[0].mxu0 %v2604
        %v2698 = vpop.f32.mrb[0].mxu0
        %v2699 = vadd.f32 0.0, %v2698
        %v2700 = vpop.f32.mrb[0].mxu0
        %v2701 = vpop.f32.mrb[0].mxu0
        %v2702 = vadd.f32 0.0, %v2701
        %v2703 = vpop.f32.mrb[0].mxu0
        %2704 = vmatprep.mubr.bf16.mxu0 0
        %2705 = vmatmul.mubr.bf16.gmra.mrb[0].mxu0 %v2605
        %v2706 = vpop.f32.mrb[0].mxu0
        %v2707 = vadd.f32 0.0, %v2706
        %v2708 = vpop.f32.mrb[0].mxu0
        %v2709 = vpop.f32.mrb[0].mxu0
        %v2710 = vadd.f32 0.0, %v2709
        %v2711 = vpop.f32.mrb[0].mxu0
        %2712 = vmatprep.mubr.bf16.mxu0 0
        %2713 = vmatmul.mubr.bf16.gmra.mrb[0].mxu0 %v2606
        %v2714 = vpop.f32.mrb[0].mxu0
        %v2715 = vadd.f32 0.0, %v2714
        %v2716 = vpop.f32.mrb[0].mxu0
        %v2717 = vpop.f32.mrb[0].mxu0
        %v2718 = vadd.f32 0.0, %v2717
        %v2719 = vpop.f32.mrb[0].mxu0
        %2720 = vmatprep.mubr.bf16.mxu0 0
        %2721 = vmatmul.mubr.bf16.gmra.mrb[0].mxu0 %v2607
        %v2722 = vpop.f32.mrb[0].mxu0
        %v2723 = vadd.f32 0.0, %v2722
        %v2724 = vpop.f32.mrb[0].mxu0
        %v2725 = vpop.f32.mrb[0].mxu0
        %v2726 = vadd.f32 0.0, %v2725
        %v2727 = vpop.f32.mrb[0].mxu0
        %2728 = vdwg.mxu0
        %v2729 = vld [vmem:[#allocation4] sm:$0xff]
        %v2730 = vld [vmem:[#allocation4 + $0x8] sm:$0xff]
        %v2731 = vld [vmem:[#allocation4 + $0x10] sm:$0xff]
        %v2732 = vld [vmem:[#allocation4 + $0x18] sm:$0xff]
        %v2733 = vld [vmem:[#allocation4 + $0x20] sm:$0xff]
        %v2734 = vld [vmem:[#allocation4 + $0x28] sm:$0xff]
        %v2735 = vld [vmem:[#allocation4 + $0x30] sm:$0xff]
        %v2736 = vld [vmem:[#allocation4 + $0x38] sm:$0xff]
        %v2737 = vld [vmem:[#allocation4 + $0x40] sm:$0xff]
        %v2738 = vld [vmem:[#allocation4 + $0x48] sm:$0xff]
        %v2739 = vld [vmem:[#allocation4 + $0x50] sm:$0xff]
        %v2740 = vld [vmem:[#allocation4 + $0x58] sm:$0xff]
        %v2741 = vld [vmem:[#allocation4 + $0x60] sm:$0xff]
        %v2742 = vld [vmem:[#allocation4 + $0x68] sm:$0xff]
        %v2743 = vld [vmem:[#allocation4 + $0x70] sm:$0xff]
        %v2744 = vld [vmem:[#allocation4 + $0x78] sm:$0xff]
        %2746 = vset.pattern.permute.xlu0 0
        %2747 = vperm.xlu0 %2746, %v2328
        %v2748 = vpop.permute.xlu0 %2747
        %2751 = vset.pattern.permute.xlu0 0
        %2752 = vperm.xlu0 %2751, %v2330
        %v2753 = vpop.permute.xlu0 %2752
        %2756 = vset.pattern.permute.xlu0 0
        %2757 = vperm.xlu0 %2756, %v2332
        %v2758 = vpop.permute.xlu0 %2757
        %2761 = vset.pattern.permute.xlu0 0
        %2762 = vperm.xlu0 %2761, %v2334
        %v2763 = vpop.permute.xlu0 %2762
        %2766 = vset.pattern.permute.xlu0 0
        %2767 = vperm.xlu0 %2766, %v2336
        %v2768 = vpop.permute.xlu0 %2767
        %2771 = vset.pattern.permute.xlu0 0
        %2772 = vperm.xlu0 %2771, %v2338
        %v2773 = vpop.permute.xlu0 %2772
        %2776 = vset.pattern.permute.xlu0 0
        %2777 = vperm.xlu0 %2776, %v2340
        %v2778 = vpop.permute.xlu0 %2777
        %2781 = vset.pattern.permute.xlu0 0
        %2782 = vperm.xlu0 %2781, %v2342
        %v2783 = vpop.permute.xlu0 %2782
        %2786 = vset.pattern.permute.xlu0 0
        %2787 = vperm.xlu0 %2786, %v2344
        %v2788 = vpop.permute.xlu0 %2787
        %2791 = vset.pattern.permute.xlu0 0
        %2792 = vperm.xlu0 %2791, %v2346
        %v2793 = vpop.permute.xlu0 %2792
        %2796 = vset.pattern.permute.xlu0 0
        %2797 = vperm.xlu0 %2796, %v2348
        %v2798 = vpop.permute.xlu0 %2797
        %2801 = vset.pattern.permute.xlu0 0
        %2802 = vperm.xlu0 %2801, %v2350
        %v2803 = vpop.permute.xlu0 %2802
        %2806 = vset.pattern.permute.xlu0 0
        %2807 = vperm.xlu0 %2806, %v2352
        %v2808 = vpop.permute.xlu0 %2807
        %2811 = vset.pattern.permute.xlu0 0
        %2812 = vperm.xlu0 %2811, %v2354
        %v2813 = vpop.permute.xlu0 %2812
        %2816 = vset.pattern.permute.xlu0 0
        %2817 = vperm.xlu0 %2816, %v2356
        %v2818 = vpop.permute.xlu0 %2817
        %2821 = vset.pattern.permute.xlu0 0
        %2822 = vperm.xlu0 %2821, %v2358
        %v2823 = vpop.permute.xlu0 %2822
        %v2825 = vmul.f32 %v2748, %v2729
        %v2826 = vmul.f32 %v2753, %v2730
        %v2827 = vmul.f32 %v2758, %v2731
        %v2828 = vmul.f32 %v2763, %v2732
        %v2829 = vmul.f32 %v2768, %v2733
        %v2830 = vmul.f32 %v2773, %v2734
        %v2831 = vmul.f32 %v2778, %v2735
        %v2832 = vmul.f32 %v2783, %v2736
        %v2833 = vmul.f32 %v2788, %v2737
        %v2834 = vmul.f32 %v2793, %v2738
        %v2835 = vmul.f32 %v2798, %v2739
        %v2836 = vmul.f32 %v2803, %v2740
        %v2837 = vmul.f32 %v2808, %v2741
        %v2838 = vmul.f32 %v2813, %v2742
        %v2839 = vmul.f32 %v2818, %v2743
        %v2840 = vmul.f32 %v2823, %v2744
        %2857 = vrot.lane.b32.xlu0 %v2667, 16
        %v2858 = vpop.permute.xlu0 %2857
        %2859 = vrot.lane.b32.xlu0 %v2670, 16
        %v2860 = vpop.permute.xlu0 %2859
        %2861 = vrot.lane.b32.xlu0 %v2675, 16
        %v2862 = vpop.permute.xlu0 %2861
        %2863 = vrot.lane.b32.xlu0 %v2678, 16
        %v2864 = vpop.permute.xlu0 %2863
        %2865 = vrot.lane.b32.xlu0 %v2683, 16
        %v2866 = vpop.permute.xlu0 %2865
        %2867 = vrot.lane.b32.xlu0 %v2686, 16
        %v2868 = vpop.permute.xlu0 %2867
        %2869 = vrot.lane.b32.xlu0 %v2691, 16
        %v2870 = vpop.permute.xlu0 %2869
        %2871 = vrot.lane.b32.xlu0 %v2694, 16
        %v2872 = vpop.permute.xlu0 %2871
        %2873 = vrot.lane.b32.xlu0 %v2699, 16
        %v2874 = vpop.permute.xlu0 %2873
        %2875 = vrot.lane.b32.xlu0 %v2702, 16
        %v2876 = vpop.permute.xlu0 %2875
        %2877 = vrot.lane.b32.xlu0 %v2707, 16
        %v2878 = vpop.permute.xlu0 %2877
        %2879 = vrot.lane.b32.xlu0 %v2710, 16
        %v2880 = vpop.permute.xlu0 %2879
        %2881 = vrot.lane.b32.xlu0 %v2715, 16
        %v2882 = vpop.permute.xlu0 %2881
        %2883 = vrot.lane.b32.xlu0 %v2718, 16
        %v2884 = vpop.permute.xlu0 %2883
        %2885 = vrot.lane.b32.xlu0 %v2723, 16
        %v2886 = vpop.permute.xlu0 %2885
        %2887 = vrot.lane.b32.xlu0 %v2726, 16
        %v2888 = vpop.permute.xlu0 %2887
        %v2905 = vadd.f32 %v2825, %v2858
        %v2906 = vadd.f32 %v2826, %v2860
        %v2907 = vadd.f32 %v2827, %v2862
        %v2908 = vadd.f32 %v2828, %v2864
        %v2909 = vadd.f32 %v2829, %v2866
        %v2910 = vadd.f32 %v2830, %v2868
        %v2911 = vadd.f32 %v2831, %v2870
        %v2912 = vadd.f32 %v2832, %v2872
        %v2913 = vadd.f32 %v2833, %v2874
        %v2914 = vadd.f32 %v2834, %v2876
        %v2915 = vadd.f32 %v2835, %v2878
        %v2916 = vadd.f32 %v2836, %v2880
        %v2917 = vadd.f32 %v2837, %v2882
        %v2918 = vadd.f32 %v2838, %v2884
        %v2919 = vadd.f32 %v2839, %v2886
        %v2920 = vadd.f32 %v2840, %v2888
        %vm2921 = vcmask 261248
        %2922 = vst.msk [vmem:[#allocation4] sm:$0xff] %vm2921, %v2905
        %2923 = vst.msk [vmem:[#allocation4 + $0x8] sm:$0xff] %vm2921, %v2906
        %2924 = vst.msk [vmem:[#allocation4 + $0x10] sm:$0xff] %vm2921, %v2907
        %2925 = vst.msk [vmem:[#allocation4 + $0x18] sm:$0xff] %vm2921, %v2908
        %2926 = vst.msk [vmem:[#allocation4 + $0x20] sm:$0xff] %vm2921, %v2909
        %2927 = vst.msk [vmem:[#allocation4 + $0x28] sm:$0xff] %vm2921, %v2910
        %2928 = vst.msk [vmem:[#allocation4 + $0x30] sm:$0xff] %vm2921, %v2911
        %2929 = vst.msk [vmem:[#allocation4 + $0x38] sm:$0xff] %vm2921, %v2912
        %2930 = vst.msk [vmem:[#allocation4 + $0x40] sm:$0xff] %vm2921, %v2913
        %2931 = vst.msk [vmem:[#allocation4 + $0x48] sm:$0xff] %vm2921, %v2914
        %2932 = vst.msk [vmem:[#allocation4 + $0x50] sm:$0xff] %vm2921, %v2915
        %2933 = vst.msk [vmem:[#allocation4 + $0x58] sm:$0xff] %vm2921, %v2916
        %2934 = vst.msk [vmem:[#allocation4 + $0x60] sm:$0xff] %vm2921, %v2917
        %2935 = vst.msk [vmem:[#allocation4 + $0x68] sm:$0xff] %vm2921, %v2918
        %2936 = vst.msk [vmem:[#allocation4 + $0x70] sm:$0xff] %vm2921, %v2919
        %2937 = vst.msk [vmem:[#allocation4 + $0x78] sm:$0xff] %vm2921, %v2920
        %p2938 = scmp.eq.s32.totalorder %s30, 1
        // Predicated region
        $region65: #{gat_conv.3} parent=47 // pred_check
          %p2939 = pneg %p2938
        $region66: #{gat_conv.3} parent=47 // pred_check_branch
          %2941 = sbr.rel (%p2939) target = $region68
        $region67: #{gat_conv.3} parent=47 // pred_region
          %v2942 = vld [vmem:[#allocation4] sm:$0xff]
          %v2943 = vld [vmem:[#allocation4 + $0x8] sm:$0xff]
          %v2944 = vld [vmem:[#allocation4 + $0x10] sm:$0xff]
          %v2945 = vld [vmem:[#allocation4 + $0x18] sm:$0xff]
          %v2946 = vld [vmem:[#allocation4 + $0x20] sm:$0xff]
          %v2947 = vld [vmem:[#allocation4 + $0x28] sm:$0xff]
          %v2948 = vld [vmem:[#allocation4 + $0x30] sm:$0xff]
          %v2949 = vld [vmem:[#allocation4 + $0x38] sm:$0xff]
          %v2950 = vld [vmem:[#allocation4 + $0x40] sm:$0xff]
          %v2951 = vld [vmem:[#allocation4 + $0x48] sm:$0xff]
          %v2952 = vld [vmem:[#allocation4 + $0x50] sm:$0xff]
          %v2953 = vld [vmem:[#allocation4 + $0x58] sm:$0xff]
          %v2954 = vld [vmem:[#allocation4 + $0x60] sm:$0xff]
          %v2955 = vld [vmem:[#allocation4 + $0x68] sm:$0xff]
          %v2956 = vld [vmem:[#allocation4 + $0x70] sm:$0xff]
          %v2957 = vld [vmem:[#allocation4 + $0x78] sm:$0xff]
          %v2958 = vld [vmem:[#allocation3] sm:$0xff]
          %v2959 = vld [vmem:[#allocation3 + $0x8] sm:$0xff]
          %v2960 = vld [vmem:[#allocation3 + $0x10] sm:$0xff]
          %v2961 = vld [vmem:[#allocation3 + $0x18] sm:$0xff]
          %v2962 = vld [vmem:[#allocation3 + $0x20] sm:$0xff]
          %v2963 = vld [vmem:[#allocation3 + $0x28] sm:$0xff]
          %v2964 = vld [vmem:[#allocation3 + $0x30] sm:$0xff]
          %v2965 = vld [vmem:[#allocation3 + $0x38] sm:$0xff]
          %v2966 = vld [vmem:[#allocation3 + $0x40] sm:$0xff]
          %v2967 = vld [vmem:[#allocation3 + $0x48] sm:$0xff]
          %v2968 = vld [vmem:[#allocation3 + $0x50] sm:$0xff]
          %v2969 = vld [vmem:[#allocation3 + $0x58] sm:$0xff]
          %v2970 = vld [vmem:[#allocation3 + $0x60] sm:$0xff]
          %v2971 = vld [vmem:[#allocation3 + $0x68] sm:$0xff]
          %v2972 = vld [vmem:[#allocation3 + $0x70] sm:$0xff]
          %v2973 = vld [vmem:[#allocation3 + $0x78] sm:$0xff]
          %vm2974 = vcmp.eq.f32.partialorder %v2958, 0.0
          %vm2975 = vcmp.eq.f32.partialorder %v2959, 0.0
          %vm2976 = vcmp.eq.f32.partialorder %v2960, 0.0
          %vm2977 = vcmp.eq.f32.partialorder %v2961, 0.0
          %vm2978 = vcmp.eq.f32.partialorder %v2962, 0.0
          %vm2979 = vcmp.eq.f32.partialorder %v2963, 0.0
          %vm2980 = vcmp.eq.f32.partialorder %v2964, 0.0
          %vm2981 = vcmp.eq.f32.partialorder %v2965, 0.0
          %vm2982 = vcmp.eq.f32.partialorder %v2966, 0.0
          %vm2983 = vcmp.eq.f32.partialorder %v2967, 0.0
          %vm2984 = vcmp.eq.f32.partialorder %v2968, 0.0
          %vm2985 = vcmp.eq.f32.partialorder %v2969, 0.0
          %vm2986 = vcmp.eq.f32.partialorder %v2970, 0.0
          %vm2987 = vcmp.eq.f32.partialorder %v2971, 0.0
          %vm2988 = vcmp.eq.f32.partialorder %v2972, 0.0
          %vm2989 = vcmp.eq.f32.partialorder %v2973, 0.0
          %v2990 = vsel %vm2974, 1.0, %v2958
          %v2991 = vsel %vm2975, 1.0, %v2959
          %v2992 = vsel %vm2976, 1.0, %v2960
          %v2993 = vsel %vm2977, 1.0, %v2961
          %v2994 = vsel %vm2978, 1.0, %v2962
          %v2995 = vsel %vm2979, 1.0, %v2963
          %v2996 = vsel %vm2980, 1.0, %v2964
          %v2997 = vsel %vm2981, 1.0, %v2965
          %v2998 = vsel %vm2982, 1.0, %v2966
          %v2999 = vsel %vm2983, 1.0, %v2967
          %v3000 = vsel %vm2984, 1.0, %v2968
          %v3001 = vsel %vm2985, 1.0, %v2969
          %v3002 = vsel %vm2986, 1.0, %v2970
          %v3003 = vsel %vm2987, 1.0, %v2971
          %v3004 = vsel %vm2988, 1.0, %v2972
          %v3005 = vsel %vm2989, 1.0, %v2973
          %v3006 = vrcp.pop %v2990
          %v3007 = vrcp.pop %v2991
          %v3008 = vrcp.pop %v2992
          %v3009 = vrcp.pop %v2993
          %v3010 = vrcp.pop %v2994
          %v3011 = vrcp.pop %v2995
          %v3012 = vrcp.pop %v2996
          %v3013 = vrcp.pop %v2997
          %v3014 = vrcp.pop %v2998
          %v3015 = vrcp.pop %v2999
          %v3016 = vrcp.pop %v3000
          %v3017 = vrcp.pop %v3001
          %v3018 = vrcp.pop %v3002
          %v3019 = vrcp.pop %v3003
          %v3020 = vrcp.pop %v3004
          %v3021 = vrcp.pop %v3005
          %3023 = vset.pattern.permute.xlu0 0
          %3024 = vperm.xlu0 %3023, %v3006
          %v3025 = vpop.permute.xlu0 %3024
          %3028 = vset.pattern.permute.xlu0 0
          %3029 = vperm.xlu0 %3028, %v3007
          %v3030 = vpop.permute.xlu0 %3029
          %3033 = vset.pattern.permute.xlu0 0
          %3034 = vperm.xlu0 %3033, %v3008
          %v3035 = vpop.permute.xlu0 %3034
          %3038 = vset.pattern.permute.xlu0 0
          %3039 = vperm.xlu0 %3038, %v3009
          %v3040 = vpop.permute.xlu0 %3039
          %3043 = vset.pattern.permute.xlu0 0
          %3044 = vperm.xlu0 %3043, %v3010
          %v3045 = vpop.permute.xlu0 %3044
          %3048 = vset.pattern.permute.xlu0 0
          %3049 = vperm.xlu0 %3048, %v3011
          %v3050 = vpop.permute.xlu0 %3049
          %3053 = vset.pattern.permute.xlu0 0
          %3054 = vperm.xlu0 %3053, %v3012
          %v3055 = vpop.permute.xlu0 %3054
          %3058 = vset.pattern.permute.xlu0 0
          %3059 = vperm.xlu0 %3058, %v3013
          %v3060 = vpop.permute.xlu0 %3059
          %3063 = vset.pattern.permute.xlu0 0
          %3064 = vperm.xlu0 %3063, %v3014
          %v3065 = vpop.permute.xlu0 %3064
          %3068 = vset.pattern.permute.xlu0 0
          %3069 = vperm.xlu0 %3068, %v3015
          %v3070 = vpop.permute.xlu0 %3069
          %3073 = vset.pattern.permute.xlu0 0
          %3074 = vperm.xlu0 %3073, %v3016
          %v3075 = vpop.permute.xlu0 %3074
          %3078 = vset.pattern.permute.xlu0 0
          %3079 = vperm.xlu0 %3078, %v3017
          %v3080 = vpop.permute.xlu0 %3079
          %3083 = vset.pattern.permute.xlu0 0
          %3084 = vperm.xlu0 %3083, %v3018
          %v3085 = vpop.permute.xlu0 %3084
          %3088 = vset.pattern.permute.xlu0 0
          %3089 = vperm.xlu0 %3088, %v3019
          %v3090 = vpop.permute.xlu0 %3089
          %3093 = vset.pattern.permute.xlu0 0
          %3094 = vperm.xlu0 %3093, %v3020
          %v3095 = vpop.permute.xlu0 %3094
          %3098 = vset.pattern.permute.xlu0 0
          %3099 = vperm.xlu0 %3098, %v3021
          %v3100 = vpop.permute.xlu0 %3099
          %v3102 = vmul.f32 %v2942, %v3025
          %v3103 = vmul.f32 %v2943, %v3030
          %v3104 = vmul.f32 %v2944, %v3035
          %v3105 = vmul.f32 %v2945, %v3040
          %v3106 = vmul.f32 %v2946, %v3045
          %v3107 = vmul.f32 %v2947, %v3050
          %v3108 = vmul.f32 %v2948, %v3055
          %v3109 = vmul.f32 %v2949, %v3060
          %v3110 = vmul.f32 %v2950, %v3065
          %v3111 = vmul.f32 %v2951, %v3070
          %v3112 = vmul.f32 %v2952, %v3075
          %v3113 = vmul.f32 %v2953, %v3080
          %v3114 = vmul.f32 %v2954, %v3085
          %v3115 = vmul.f32 %v2955, %v3090
          %v3116 = vmul.f32 %v2956, %v3095
          %v3117 = vmul.f32 %v2957, %v3100
          %v3118 = vld [vmem:[%s2487] sm:$0xff]
          %v3119 = vld [vmem:[%s2487 + $0x8] sm:$0xff]
          %v3120 = vld [vmem:[%s2487 + $0x10] sm:$0xff]
          %v3121 = vld [vmem:[%s2487 + $0x18] sm:$0xff]
          %v3122 = vld [vmem:[%s2487 + $0x20] sm:$0xff]
          %v3123 = vld [vmem:[%s2487 + $0x28] sm:$0xff]
          %v3124 = vld [vmem:[%s2487 + $0x30] sm:$0xff]
          %v3125 = vld [vmem:[%s2487 + $0x38] sm:$0xff]
          %v3126 = vld [vmem:[%s2487 + $0x40] sm:$0xff]
          %v3127 = vld [vmem:[%s2487 + $0x48] sm:$0xff]
          %v3128 = vld [vmem:[%s2487 + $0x50] sm:$0xff]
          %v3129 = vld [vmem:[%s2487 + $0x58] sm:$0xff]
          %v3130 = vld [vmem:[%s2487 + $0x60] sm:$0xff]
          %v3131 = vld [vmem:[%s2487 + $0x68] sm:$0xff]
          %v3132 = vld [vmem:[%s2487 + $0x70] sm:$0xff]
          %v3133 = vld [vmem:[%s2487 + $0x78] sm:$0xff]
          %vm3134 = vcmp.eq.f32.partialorder %v3118, 0.0
          %vm3135 = vcmp.eq.f32.partialorder %v3119, 0.0
          %vm3136 = vcmp.eq.f32.partialorder %v3120, 0.0
          %vm3137 = vcmp.eq.f32.partialorder %v3121, 0.0
          %vm3138 = vcmp.eq.f32.partialorder %v3122, 0.0
          %vm3139 = vcmp.eq.f32.partialorder %v3123, 0.0
          %vm3140 = vcmp.eq.f32.partialorder %v3124, 0.0
          %vm3141 = vcmp.eq.f32.partialorder %v3125, 0.0
          %vm3142 = vcmp.eq.f32.partialorder %v3126, 0.0
          %vm3143 = vcmp.eq.f32.partialorder %v3127, 0.0
          %vm3144 = vcmp.eq.f32.partialorder %v3128, 0.0
          %vm3145 = vcmp.eq.f32.partialorder %v3129, 0.0
          %vm3146 = vcmp.eq.f32.partialorder %v3130, 0.0
          %vm3147 = vcmp.eq.f32.partialorder %v3131, 0.0
          %vm3148 = vcmp.eq.f32.partialorder %v3132, 0.0
          %vm3149 = vcmp.eq.f32.partialorder %v3133, 0.0
          %v3150 = vsel %vm3134, 1.0, %v3118
          %v3151 = vsel %vm3135, 1.0, %v3119
          %v3152 = vsel %vm3136, 1.0, %v3120
          %v3153 = vsel %vm3137, 1.0, %v3121
          %v3154 = vsel %vm3138, 1.0, %v3122
          %v3155 = vsel %vm3139, 1.0, %v3123
          %v3156 = vsel %vm3140, 1.0, %v3124
          %v3157 = vsel %vm3141, 1.0, %v3125
          %v3158 = vsel %vm3142, 1.0, %v3126
          %v3159 = vsel %vm3143, 1.0, %v3127
          %v3160 = vsel %vm3144, 1.0, %v3128
          %v3161 = vsel %vm3145, 1.0, %v3129
          %v3162 = vsel %vm3146, 1.0, %v3130
          %v3163 = vsel %vm3147, 1.0, %v3131
          %v3164 = vsel %vm3148, 1.0, %v3132
          %v3165 = vsel %vm3149, 1.0, %v3133
          %v3166 = vrcp.pop %v3150
          %v3167 = vrcp.pop %v3151
          %v3168 = vrcp.pop %v3152
          %v3169 = vrcp.pop %v3153
          %v3170 = vrcp.pop %v3154
          %v3171 = vrcp.pop %v3155
          %v3172 = vrcp.pop %v3156
          %v3173 = vrcp.pop %v3157
          %v3174 = vrcp.pop %v3158
          %v3175 = vrcp.pop %v3159
          %v3176 = vrcp.pop %v3160
          %v3177 = vrcp.pop %v3161
          %v3178 = vrcp.pop %v3162
          %v3179 = vrcp.pop %v3163
          %v3180 = vrcp.pop %v3164
          %v3181 = vrcp.pop %v3165
          %3183 = vset.pattern.permute.xlu0 0
          %3184 = vperm.xlu0 %3183, %v3166
          %v3185 = vpop.permute.xlu0 %3184
          %3188 = vset.pattern.permute.xlu0 0
          %3189 = vperm.xlu0 %3188, %v3167
          %v3190 = vpop.permute.xlu0 %3189
          %3193 = vset.pattern.permute.xlu0 0
          %3194 = vperm.xlu0 %3193, %v3168
          %v3195 = vpop.permute.xlu0 %3194
          %3198 = vset.pattern.permute.xlu0 0
          %3199 = vperm.xlu0 %3198, %v3169
          %v3200 = vpop.permute.xlu0 %3199
          %3203 = vset.pattern.permute.xlu0 0
          %3204 = vperm.xlu0 %3203, %v3170
          %v3205 = vpop.permute.xlu0 %3204
          %3208 = vset.pattern.permute.xlu0 0
          %3209 = vperm.xlu0 %3208, %v3171
          %v3210 = vpop.permute.xlu0 %3209
          %3213 = vset.pattern.permute.xlu0 0
          %3214 = vperm.xlu0 %3213, %v3172
          %v3215 = vpop.permute.xlu0 %3214
          %3218 = vset.pattern.permute.xlu0 0
          %3219 = vperm.xlu0 %3218, %v3173
          %v3220 = vpop.permute.xlu0 %3219
          %3223 = vset.pattern.permute.xlu0 0
          %3224 = vperm.xlu0 %3223, %v3174
          %v3225 = vpop.permute.xlu0 %3224
          %3228 = vset.pattern.permute.xlu0 0
          %3229 = vperm.xlu0 %3228, %v3175
          %v3230 = vpop.permute.xlu0 %3229
          %3233 = vset.pattern.permute.xlu0 0
          %3234 = vperm.xlu0 %3233, %v3176
          %v3235 = vpop.permute.xlu0 %3234
          %3238 = vset.pattern.permute.xlu0 0
          %3239 = vperm.xlu0 %3238, %v3177
          %v3240 = vpop.permute.xlu0 %3239
          %3243 = vset.pattern.permute.xlu0 0
          %3244 = vperm.xlu0 %3243, %v3178
          %v3245 = vpop.permute.xlu0 %3244
          %3248 = vset.pattern.permute.xlu0 0
          %3249 = vperm.xlu0 %3248, %v3179
          %v3250 = vpop.permute.xlu0 %3249
          %3253 = vset.pattern.permute.xlu0 0
          %3254 = vperm.xlu0 %3253, %v3180
          %v3255 = vpop.permute.xlu0 %3254
          %3258 = vset.pattern.permute.xlu0 0
          %3259 = vperm.xlu0 %3258, %v3181
          %v3260 = vpop.permute.xlu0 %3259
          %v3262 = vmul.f32 %v2942, %v3185
          %v3263 = vmul.f32 %v2943, %v3190
          %v3264 = vmul.f32 %v2944, %v3195
          %v3265 = vmul.f32 %v2945, %v3200
          %v3266 = vmul.f32 %v2946, %v3205
          %v3267 = vmul.f32 %v2947, %v3210
          %v3268 = vmul.f32 %v2948, %v3215
          %v3269 = vmul.f32 %v2949, %v3220
          %v3270 = vmul.f32 %v2950, %v3225
          %v3271 = vmul.f32 %v2951, %v3230
          %v3272 = vmul.f32 %v2952, %v3235
          %v3273 = vmul.f32 %v2953, %v3240
          %v3274 = vmul.f32 %v2954, %v3245
          %v3275 = vmul.f32 %v2955, %v3250
          %v3276 = vmul.f32 %v2956, %v3255
          %v3277 = vmul.f32 %v2957, %v3260
          %v3278 = vsel %vm2081, %v3102, %v3262
          %v3279 = vsel %vm2081, %v3103, %v3263
          %v3280 = vsel %vm2081, %v3104, %v3264
          %v3281 = vsel %vm2081, %v3105, %v3265
          %v3282 = vsel %vm2081, %v3106, %v3266
          %v3283 = vsel %vm2081, %v3107, %v3267
          %v3284 = vsel %vm2081, %v3108, %v3268
          %v3285 = vsel %vm2081, %v3109, %v3269
          %v3286 = vsel %vm2081, %v3110, %v3270
          %v3287 = vsel %vm2081, %v3111, %v3271
          %v3288 = vsel %vm2081, %v3112, %v3272
          %v3289 = vsel %vm2081, %v3113, %v3273
          %v3290 = vsel %vm2081, %v3114, %v3274
          %v3291 = vsel %vm2081, %v3115, %v3275
          %v3292 = vsel %vm2081, %v3116, %v3276
          %v3293 = vsel %vm2081, %v3117, %v3277
          %v3294 = vld [vmem:[%s476] sm:$0xff]
          %v3295 = vld [vmem:[%s476 + $0x8] sm:$0xff]
          %v3296 = vld [vmem:[%s476 + $0x10] sm:$0xff]
          %v3297 = vld [vmem:[%s476 + $0x18] sm:$0xff]
          %v3298 = vld [vmem:[%s476 + $0x20] sm:$0xff]
          %v3299 = vld [vmem:[%s476 + $0x28] sm:$0xff]
          %v3300 = vld [vmem:[%s476 + $0x30] sm:$0xff]
          %v3301 = vld [vmem:[%s476 + $0x38] sm:$0xff]
          %v3302 = vld [vmem:[%s476 + $0x40] sm:$0xff]
          %v3303 = vld [vmem:[%s476 + $0x48] sm:$0xff]
          %v3304 = vld [vmem:[%s476 + $0x50] sm:$0xff]
          %v3305 = vld [vmem:[%s476 + $0x58] sm:$0xff]
          %v3306 = vld [vmem:[%s476 + $0x60] sm:$0xff]
          %v3307 = vld [vmem:[%s476 + $0x68] sm:$0xff]
          %v3308 = vld [vmem:[%s476 + $0x70] sm:$0xff]
          %v3309 = vld [vmem:[%s476 + $0x78] sm:$0xff]
          %v3310 = vadd.f32 %v3278, %v3294
          %v3311 = vadd.f32 %v3279, %v3295
          %v3312 = vadd.f32 %v3280, %v3296
          %v3313 = vadd.f32 %v3281, %v3297
          %v3314 = vadd.f32 %v3282, %v3298
          %v3315 = vadd.f32 %v3283, %v3299
          %v3316 = vadd.f32 %v3284, %v3300
          %v3317 = vadd.f32 %v3285, %v3301
          %v3318 = vadd.f32 %v3286, %v3302
          %v3319 = vadd.f32 %v3287, %v3303
          %v3320 = vadd.f32 %v3288, %v3304
          %v3321 = vadd.f32 %v3289, %v3305
          %v3322 = vadd.f32 %v3290, %v3306
          %v3323 = vadd.f32 %v3291, %v3307
          %v3324 = vadd.f32 %v3292, %v3308
          %v3325 = vadd.f32 %v3293, %v3309
          %vm3326 = vcmask 261120
          %3327 = vst.msk [vmem:[%s482] sm:$0xff] %vm3326, %v3310
          %3328 = vst.msk [vmem:[%s482 + $0x8] sm:$0xff] %vm3326, %v3311
          %3329 = vst.msk [vmem:[%s482 + $0x10] sm:$0xff] %vm3326, %v3312
          %3330 = vst.msk [vmem:[%s482 + $0x18] sm:$0xff] %vm3326, %v3313
          %3331 = vst.msk [vmem:[%s482 + $0x20] sm:$0xff] %vm3326, %v3314
          %3332 = vst.msk [vmem:[%s482 + $0x28] sm:$0xff] %vm3326, %v3315
          %3333 = vst.msk [vmem:[%s482 + $0x30] sm:$0xff] %vm3326, %v3316
          %3334 = vst.msk [vmem:[%s482 + $0x38] sm:$0xff] %vm3326, %v3317
          %3335 = vst.msk [vmem:[%s482 + $0x40] sm:$0xff] %vm3326, %v3318
          %3336 = vst.msk [vmem:[%s482 + $0x48] sm:$0xff] %vm3326, %v3319
          %3337 = vst.msk [vmem:[%s482 + $0x50] sm:$0xff] %vm3326, %v3320
          %3338 = vst.msk [vmem:[%s482 + $0x58] sm:$0xff] %vm3326, %v3321
          %3339 = vst.msk [vmem:[%s482 + $0x60] sm:$0xff] %vm3326, %v3322
          %3340 = vst.msk [vmem:[%s482 + $0x68] sm:$0xff] %vm3326, %v3323
          %3341 = vst.msk [vmem:[%s482 + $0x70] sm:$0xff] %vm3326, %v3324
          %3342 = vst.msk [vmem:[%s482 + $0x78] sm:$0xff] %vm3326, %v3325
        $region68: #{gat_conv.3} parent=47 // pred_fallthru
          _
        %s3343 = smul.u32 16, %s29
        %p3344 = scmp.lt.s32.totalorder %s3343, 31
        %s3345 = scalar_select %p3344, %s3343, 31
        %s3346 = smul.addr %s3345, 8
        %s3347 = scalar_lea.vmem %s7, %s3346
        // Predicated region
        $region69: #{gat_conv.3} parent=47 // pred_check
          %p3348 = pneg %p236
        $region70: #{gat_conv.3} parent=47 // pred_check_branch
          %3350 = sbr.rel (%p3348) target = $region72
        $region71: #{gat_conv.3} parent=47 // pred_region
          %s3351 = smul.u32 16, %s29
        $region72: #{gat_conv.3} parent=47 // pred_fallthru
          _
      $region48: #{gat_conv.3} parent=5 // pred_fallthru
        _
      %p3352 = scmp.le.s32.totalorder 2, %s20
      // Predicated region
      $region73: #{gat_conv.3} parent=5 // pred_check
        %p3353 = pneg %p3352
      $region74: #{gat_conv.3} parent=5 // pred_check_branch
        %3355 = sbr.rel (%p3353) target = $region76
      $region75: #{gat_conv.3} parent=5 // pred_region
        %s3356 = ssub.s32 %s20, 2
        // Predicated region
        $region77: #{gat_conv.3} parent=75 // pred_check
          %p3357 = pneg %p242
        $region78: #{gat_conv.3} parent=75 // pred_check_branch
          %3359 = sbr.rel (%p3357) target = $region80
        $region79: #{gat_conv.3} parent=75 // pred_region
          %s3360 = smul.u32 16, %s31
          %p3361 = scmp.lt.s32.totalorder %s3360, 31
          %s3362 = scalar_select %p3361, %s3360, 31
          %s3363 = smul.addr %s3362, 8
          %s3364 = scalar_lea.vmem %s7, %s3363
        $region80: #{gat_conv.3} parent=75 // pred_fallthru
          _
      $region76: #{gat_conv.3} parent=5 // pred_fallthru
        _
    $region6: #{gat_conv.3} parent=1 // loop_footer
      %s24 = sadd.s32 1, %s20
    $region7: #{gat_conv.3} parent=1 // loop_footer_branch
      %19 = sbr.rel target = $region3
    $region8: #{gat_conv.3} parent=1 // loop_exit
      _
    %3365 = vsyncpa [#allocation6], 1
    %s3366 = scalar_lea.sflag [#allocation6], 1
    %3367 = vsyncpa %s3366, 1
    %3368 = vsyncpa [#allocation10], 1
    %s3369 = scalar_lea.sflag [#allocation10], 1
    %3370 = vsyncpa %s3369, 1
    %3371 = vsyncpa [#allocation7], 1
    %s3372 = scalar_lea.sflag [#allocation7], 1
    %3373 = vsyncpa %s3372, 1

</llo_original>
